<compile_context>
chip_gen: v7x
topology: tpu7x:2x2x1
jax: 0.10.0
libtpu: 0.0.40
codegen_flags: <defaults>
</compile_context>

<pallas_src>
import jax
import jax.numpy as jnp
from jax.experimental import pallas as pl
from jax.experimental.pallas import tpu as pltpu

LEAK = 0.2
BN_EPS = 0.8  # nn.BatchNorm1d(out_feat, 0.8) -> eps = 0.8


def _leaky(h):
    return jnp.where(h > 0, h, LEAK * h)


def _bn_train(h, gamma, beta):
    # Training-mode BatchNorm1d (eps=0.8, biased batch variance), folded into a
    # single scale/shift: one pass for sum / sum-of-squares, then h*scale + shift.
    n = h.shape[0]
    inv_n = 1.0 / n
    s1 = jnp.sum(h, axis=0, keepdims=True)
    s2 = jnp.sum(h * h, axis=0, keepdims=True)
    mean = s1 * inv_n
    # One-pass variance can cancel slightly negative in f32; clamp at 0.
    var = jnp.maximum(s2 * inv_n - mean * mean, 0.0)
    scale = gamma * jax.lax.rsqrt(var + BN_EPS)
    shift = beta - mean * scale
    return h * scale + shift


def _dot_bf16(h, w_bf16):
    # bf16 MXU operands, f32 accumulation.
    return jnp.dot(h.astype(jnp.bfloat16), w_bf16, preferred_element_type=jnp.float32)


def expert_kernel(
    x_ref, w1_ref, b1_ref,
    w2_hbm, g2_ref, be2_ref,
    w3_hbm, g3_ref, be3_ref,
    w4_hbm, g4_ref, be4_ref,
    w5_hbm, b5_ref,
    o_ref,
    w2_vmem, w3_vmem, w4_vmem, w5_vmem, sem,
):
    HC = 512  # layer-4 output-column chunk width (1024 / 2)

    # Manual weight DMAs, issued in need-order so no layer waits behind a later
    # layer's weights.  w5 chunks are started only after the matching w4 chunk
    # has landed (no bandwidth theft from the critical w4 transfer).
    cp_w2 = pltpu.make_async_copy(w2_hbm, w2_vmem, sem.at[0])
    cp_w3 = pltpu.make_async_copy(w3_hbm, w3_vmem, sem.at[1])
    cp_w4 = [
        pltpu.make_async_copy(w4_hbm.at[:, pl.ds(c * HC, HC)], w4_vmem.at[c], sem.at[2 + c])
        for c in range(2)
    ]
    cp_w5 = [
        pltpu.make_async_copy(w5_hbm.at[pl.ds(c * HC, HC), :], w5_vmem.at[c], sem.at[4 + c])
        for c in range(2)
    ]
    cp_w2.start()
    cp_w3.start()
    cp_w4[0].start()
    cp_w4[1].start()

    x = x_ref[...]

    # block 1: Linear(F,128) -> LeakyReLU   (no BN)
    h = _leaky(_dot_bf16(x, w1_ref[...]) + b1_ref[...])

    # block 2: Linear(128,256) -> BN -> LeakyReLU   (linear bias cancels in BN)
    cp_w2.wait()
    h = _leaky(_bn_train(_dot_bf16(h, w2_vmem[...]), g2_ref[...], be2_ref[...]))

    # block 3: Linear(256,512) -> BN -> LeakyReLU
    cp_w3.wait()
    h = _leaky(_bn_train(_dot_bf16(h, w3_vmem[...]), g3_ref[...], be3_ref[...]))
    h3 = h.astype(jnp.bfloat16)

    # block 4: Linear(512,1024) -> BN -> LeakyReLU, computed per 512-wide output
    # column block as each w4 chunk lands (BN is per-feature over batch, so the
    # column blocks are independent).  Head contribution of column block c uses
    # w5 rows [c*512, (c+1)*512), accumulated in f32.
    g4 = g4_ref[...]
    be4 = be4_ref[...]
    h4c = []
    for c in range(2):
        cp_w4[c].wait()
        cp_w5[c].start()  # hides under layer-4 chunk compute
        g4c = g4[:, c * HC:(c + 1) * HC]
        be4c = be4[:, c * HC:(c + 1) * HC]
        s = jnp.dot(h3, w4_vmem[c], preferred_element_type=jnp.float32)
        h4c.append(_leaky(_bn_train(s, g4c, be4c)).astype(jnp.bfloat16))

    # head: Linear(1024,F) -> Tanh   (K split matches the layer-4 column chunks)
    acc = jnp.zeros(o_ref.shape, jnp.float32)
    for c in range(2):
        cp_w5[c].wait()
        acc = acc + jnp.dot(h4c[c], w5_vmem[c], preferred_element_type=jnp.float32)

    o_ref[...] = jnp.tanh(acc + b5_ref[...])


@jax.jit
def expert_forward(x, params):
    (w1, b1, w2, g2, be2, w3, g3, be3, w4, g4, be4, w5, b5) = params
    B, F = x.shape
    Fp = ((F + 127) // 128) * 128  # lane-dense input/output feature dim

    if Fp != F:
        x_p = jnp.pad(x, ((0, 0), (0, Fp - F)))
        w1_p = jnp.pad(w1, ((0, Fp - F), (0, 0)))
        w5_p = jnp.pad(w5, ((0, 0), (0, Fp - F)))
        b5_p = jnp.pad(b5, ((0, 0), (0, Fp - F)))
    else:
        x_p, w1_p, w5_p, b5_p = x, w1, w5, b5

    vmem = pl.BlockSpec(memory_space=pltpu.MemorySpace.VMEM)
    hbm = pl.BlockSpec(memory_space=pl.ANY)  # stays in HBM; kernel DMAs it manually

    out = pl.pallas_call(
        expert_kernel,
        out_shape=jax.ShapeDtypeStruct((B, Fp), jnp.float32),
        in_specs=[
            vmem, vmem, vmem,        # x, w1, b1        (small, auto-DMA prologue)
            hbm,  vmem, vmem,        # w2 (HBM, manual), g2, be2
            hbm,  vmem, vmem,        # w3 (HBM, manual), g3, be3
            hbm,  vmem, vmem,        # w4 (HBM, manual, 2 column chunks), g4, be4
            hbm,  vmem,              # w5 (HBM, manual, 2 row chunks), b5
        ],
        out_specs=vmem,
        scratch_shapes=[
            pltpu.VMEM((128, 256), jnp.bfloat16),        # w2 landing buffer (64 KiB)
            pltpu.VMEM((256, 512), jnp.bfloat16),        # w3 landing buffer (256 KiB)
            pltpu.VMEM((2, 512, 512), jnp.bfloat16),     # w4 landing buffer, 2 column chunks (1 MiB)
            pltpu.VMEM((2, 512, Fp), jnp.bfloat16),      # w5 landing buffer, 2 row chunks
            pltpu.SemaphoreType.DMA((6,)),
        ],
        compiler_params=pltpu.CompilerParams(vmem_limit_bytes=16 * 1024 * 1024),
    )(x_p, w1_p, b1, w2, g2, be2, w3, g3, be3, w4, g4, be4, w5_p, b5_p)

    return out[:, :F]


def init_params(key, input_size):
    """PyTorch-default-style init (Linear: U(-1/sqrt(in), 1/sqrt(in)); BN: gamma=1,
    beta=0). Weights pre-transposed to [in, out] and stored bf16. Biases of the
    BN-wrapped linears are omitted: they cancel exactly under training-mode BN."""
    dims = [(input_size, 128), (128, 256), (256, 512), (512, 1024), (1024, input_size)]
    keys = jax.random.split(key, 2 * len(dims))
    ws, bs = [], []
    for i, (fan_in, fan_out) in enumerate(dims):
        bound = 1.0 / (fan_in ** 0.5)
        w = jax.random.uniform(keys[2 * i], (fan_in, fan_out), jnp.float32, -bound, bound)
        b = jax.random.uniform(keys[2 * i + 1], (1, fan_out), jnp.float32, -bound, bound)
        ws.append(w.astype(jnp.bfloat16))
        bs.append(b)

    g2, be2 = jnp.ones((1, 256), jnp.float32), jnp.zeros((1, 256), jnp.float32)
    g3, be3 = jnp.ones((1, 512), jnp.float32), jnp.zeros((1, 512), jnp.float32)
    g4, be4 = jnp.ones((1, 1024), jnp.float32), jnp.zeros((1, 1024), jnp.float32)

    return (
        ws[0], bs[0],
        ws[1], g2, be2,
        ws[2], g3, be3,
        ws[3], g4, be4,
        ws[4], bs[4],
    )


def expert_reference(x, params):
    """Pure-JAX reference with matching numerics (bf16 MXU operands, f32 BN/tanh)."""
    (w1, b1, w2, g2, be2, w3, g3, be3, w4, g4, be4, w5, b5) = params
    h = _leaky(_dot_bf16(x, w1) + b1)
    h = _leaky(_bn_train(_dot_bf16(h, w2), g2, be2))
    h = _leaky(_bn_train(_dot_bf16(h, w3), g3, be3))
    h = _leaky(_bn_train(_dot_bf16(h, w4), g4, be4))
    return jnp.tanh(_dot_bf16(h, w5) + b5)


if __name__ == "__main__":
    BATCH = 8          # >= 2 required by training-mode BatchNorm
    INPUT_SIZE = 64    # args.input_size (small, synthetic); padded to 128 internally

    key = jax.random.PRNGKey(0)
    kx, kp = jax.random.split(key)
    x = jax.random.normal(kx, (BATCH, INPUT_SIZE), jnp.float32)
    params = init_params(kp, INPUT_SIZE)

    out = expert_forward(x, params)
    out = jax.block_until_ready(out)

    ref = expert_reference(x, params)
    assert out.shape == (BATCH, INPUT_SIZE), out.shape
    assert jnp.allclose(out, ref, atol=1e-2, rtol=1e-2), float(jnp.max(jnp.abs(out - ref)))

    print("KERNEL_OK")
</pallas_src>

<mosaic_0001>
module attributes {stable_mosaic.version = 11 : i64} {
  func.func @expert_kernel(%arg0: memref<8x128xf32, #tpu.memory_space<vmem>>, %arg1: memref<128x128xbf16, #tpu.memory_space<vmem>>, %arg2: memref<1x128xf32, #tpu.memory_space<vmem>>, %arg3: memref<128x256xbf16, #tpu.memory_space<any>>, %arg4: memref<1x256xf32, #tpu.memory_space<vmem>>, %arg5: memref<1x256xf32, #tpu.memory_space<vmem>>, %arg6: memref<256x512xbf16, #tpu.memory_space<any>>, %arg7: memref<1x512xf32, #tpu.memory_space<vmem>>, %arg8: memref<1x512xf32, #tpu.memory_space<vmem>>, %arg9: memref<512x1024xbf16, #tpu.memory_space<any>>, %arg10: memref<1x1024xf32, #tpu.memory_space<vmem>>, %arg11: memref<1x1024xf32, #tpu.memory_space<vmem>>, %arg12: memref<1024x128xbf16, #tpu.memory_space<any>>, %arg13: memref<1x128xf32, #tpu.memory_space<vmem>>, %arg14: memref<8x128xf32, #tpu.memory_space<vmem>>, %arg15: memref<128x256xbf16, #tpu.memory_space<vmem>>, %arg16: memref<256x512xbf16, #tpu.memory_space<vmem>>, %arg17: memref<2x512x512xbf16, #tpu.memory_space<vmem>>, %arg18: memref<2x512x128xbf16, #tpu.memory_space<vmem>>, %arg19: memref<6x!tpu.dma_semaphore, #tpu.memory_space<semaphore_mem>>) attributes {dimension_semantics = [], scalar_prefetch = 0 : i64, scratch_operands = 5 : i64, tpu.core_type = #tpu.core_type<tc>} {
    %c0_i32 = arith.constant 0 : i32
    %0 = tpu.memref_slice %arg19[%c0_i32] : memref<6x!tpu.dma_semaphore, #tpu.memory_space<semaphore_mem>> -> memref<1x!tpu.dma_semaphore, #tpu.memory_space<semaphore_mem>>
    %1 = tpu.memref_squeeze %0 : memref<1x!tpu.dma_semaphore, #tpu.memory_space<semaphore_mem>> -> memref<!tpu.dma_semaphore, #tpu.memory_space<semaphore_mem>>
    tpu.enqueue_dma source(%arg3 : memref<128x256xbf16, #tpu.memory_space<any>>) target(%arg15 : memref<128x256xbf16, #tpu.memory_space<vmem>>) target_semaphore(%1 : memref<!tpu.dma_semaphore, #tpu.memory_space<semaphore_mem>>)
    %c1_i32 = arith.constant 1 : i32
    %2 = tpu.memref_slice %arg19[%c1_i32] : memref<6x!tpu.dma_semaphore, #tpu.memory_space<semaphore_mem>> -> memref<1x!tpu.dma_semaphore, #tpu.memory_space<semaphore_mem>>
    %3 = tpu.memref_squeeze %2 : memref<1x!tpu.dma_semaphore, #tpu.memory_space<semaphore_mem>> -> memref<!tpu.dma_semaphore, #tpu.memory_space<semaphore_mem>>
    tpu.enqueue_dma source(%arg6 : memref<256x512xbf16, #tpu.memory_space<any>>) target(%arg16 : memref<256x512xbf16, #tpu.memory_space<vmem>>) target_semaphore(%3 : memref<!tpu.dma_semaphore, #tpu.memory_space<semaphore_mem>>)
    %c0_i32_0 = arith.constant 0 : i32
    %c2_i32 = arith.constant 2 : i32
    %c0_i32_1 = arith.constant 0 : i32
    %c0_i32_2 = arith.constant 0 : i32
    %4 = tpu.memref_slice %arg9[%c0_i32_1, %c0_i32_2] : memref<512x1024xbf16, #tpu.memory_space<any>> -> memref<512x512xbf16, #tpu.memory_space<any>>
    %c0_i32_3 = arith.constant 0 : i32
    %c0_i32_4 = arith.constant 0 : i32
    %5 = tpu.memref_slice %arg17[%c0_i32_0, %c0_i32_3, %c0_i32_4] : memref<2x512x512xbf16, #tpu.memory_space<vmem>> -> memref<1x512x512xbf16, #tpu.memory_space<vmem>>
    %6 = tpu.memref_squeeze %5 : memref<1x512x512xbf16, #tpu.memory_space<vmem>> -> memref<512x512xbf16, #tpu.memory_space<vmem>>
    %7 = tpu.memref_slice %arg19[%c2_i32] : memref<6x!tpu.dma_semaphore, #tpu.memory_space<semaphore_mem>> -> memref<1x!tpu.dma_semaphore, #tpu.memory_space<semaphore_mem>>
    %8 = tpu.memref_squeeze %7 : memref<1x!tpu.dma_semaphore, #tpu.memory_space<semaphore_mem>> -> memref<!tpu.dma_semaphore, #tpu.memory_space<semaphore_mem>>
    tpu.enqueue_dma source(%4 : memref<512x512xbf16, #tpu.memory_space<any>>) target(%6 : memref<512x512xbf16, #tpu.memory_space<vmem>>) target_semaphore(%8 : memref<!tpu.dma_semaphore, #tpu.memory_space<semaphore_mem>>)
    %c1_i32_5 = arith.constant 1 : i32
    %c3_i32 = arith.constant 3 : i32
    %c0_i32_6 = arith.constant 0 : i32
    %c512_i32 = arith.constant 512 : i32
    %9 = tpu.memref_slice %arg9[%c0_i32_6, %c512_i32] : memref<512x1024xbf16, #tpu.memory_space<any>> -> memref<512x512xbf16, #tpu.memory_space<any>>
    %c0_i32_7 = arith.constant 0 : i32
    %c0_i32_8 = arith.constant 0 : i32
    %10 = tpu.memref_slice %arg17[%c1_i32_5, %c0_i32_7, %c0_i32_8] : memref<2x512x512xbf16, #tpu.memory_space<vmem>> -> memref<1x512x512xbf16, #tpu.memory_space<vmem>>
    %11 = tpu.memref_squeeze %10 : memref<1x512x512xbf16, #tpu.memory_space<vmem>> -> memref<512x512xbf16, #tpu.memory_space<vmem>>
    %12 = tpu.memref_slice %arg19[%c3_i32] : memref<6x!tpu.dma_semaphore, #tpu.memory_space<semaphore_mem>> -> memref<1x!tpu.dma_semaphore, #tpu.memory_space<semaphore_mem>>
    %13 = tpu.memref_squeeze %12 : memref<1x!tpu.dma_semaphore, #tpu.memory_space<semaphore_mem>> -> memref<!tpu.dma_semaphore, #tpu.memory_space<semaphore_mem>>
    tpu.enqueue_dma source(%9 : memref<512x512xbf16, #tpu.memory_space<any>>) target(%11 : memref<512x512xbf16, #tpu.memory_space<vmem>>) target_semaphore(%13 : memref<!tpu.dma_semaphore, #tpu.memory_space<semaphore_mem>>)
    %c0 = arith.constant 0 : index
    %c0_9 = arith.constant 0 : index
    %14 = vector.load %arg0[%c0, %c0_9] : memref<8x128xf32, #tpu.memory_space<vmem>>, vector<8x128xf32>
    %c0_10 = arith.constant 0 : index
    %c0_11 = arith.constant 0 : index
    %15 = vector.load %arg1[%c0_10, %c0_11] : memref<128x128xbf16, #tpu.memory_space<vmem>>, vector<128x128xbf16>
    %16 = arith.truncf %14 : vector<8x128xf32> to vector<8x128xbf16>
    %cst = arith.constant dense<0.000000e+00> : vector<8x128xf32>
    %17 = tpu.matmul %16, %15, %cst {dimension_numbers = #tpu.dot_dimension_numbers<[1], [0], [0], [1], [0, 0, 1, 1], [], []>} : vector<8x128xbf16>, vector<128x128xbf16>, vector<8x128xf32> -> vector<8x128xf32>
    %c0_12 = arith.constant 0 : index
    %c0_13 = arith.constant 0 : index
    %18 = vector.load %arg2[%c0_12, %c0_13] : memref<1x128xf32, #tpu.memory_space<vmem>>, vector<1x128xf32>
    %19 = vector.broadcast %18 : vector<1x128xf32> to vector<8x128xf32>
    %20 = arith.addf %17, %19 : vector<8x128xf32>
    %cst_14 = arith.constant 0.000000e+00 : f32
    %21 = vector.broadcast %cst_14 : f32 to vector<8x128xf32>
    %22 = arith.cmpf ogt, %20, %21 : vector<8x128xf32>
    %cst_15 = arith.constant 2.000000e-01 : f32
    %23 = vector.broadcast %cst_15 : f32 to vector<8x128xf32>
    %24 = arith.mulf %23, %20 : vector<8x128xf32>
    %25 = arith.select %22, %20, %24 : vector<8x128xi1>, vector<8x128xf32>
    %c0_i32_16 = arith.constant 0 : i32
    %26 = tpu.memref_slice %arg19[%c0_i32_16] : memref<6x!tpu.dma_semaphore, #tpu.memory_space<semaphore_mem>> -> memref<1x!tpu.dma_semaphore, #tpu.memory_space<semaphore_mem>>
    %27 = tpu.memref_squeeze %26 : memref<1x!tpu.dma_semaphore, #tpu.memory_space<semaphore_mem>> -> memref<!tpu.dma_semaphore, #tpu.memory_space<semaphore_mem>>
    tpu.wait_dma2 semaphore(%27 : memref<!tpu.dma_semaphore, #tpu.memory_space<semaphore_mem>>) src(%arg3 : memref<128x256xbf16, #tpu.memory_space<any>>) dst(%arg15 : memref<128x256xbf16, #tpu.memory_space<vmem>>)
    %c0_17 = arith.constant 0 : index
    %c0_18 = arith.constant 0 : index
    %28 = vector.load %arg15[%c0_17, %c0_18] : memref<128x256xbf16, #tpu.memory_space<vmem>>, vector<128x256xbf16>
    %29 = arith.truncf %25 : vector<8x128xf32> to vector<8x128xbf16>
    %cst_19 = arith.constant dense<0.000000e+00> : vector<8x256xf32>
    %30 = tpu.matmul %29, %28, %cst_19 {dimension_numbers = #tpu.dot_dimension_numbers<[1], [0], [0], [1], [0, 0, 1, 1], [], []>} : vector<8x128xbf16>, vector<128x256xbf16>, vector<8x256xf32> -> vector<8x256xf32>
    %c0_20 = arith.constant 0 : index
    %c0_21 = arith.constant 0 : index
    %31 = vector.load %arg4[%c0_20, %c0_21] : memref<1x256xf32, #tpu.memory_space<vmem>>, vector<1x256xf32>
    %c0_22 = arith.constant 0 : index
    %c0_23 = arith.constant 0 : index
    %32 = vector.load %arg5[%c0_22, %c0_23] : memref<1x256xf32, #tpu.memory_space<vmem>>, vector<1x256xf32>
    %cst_24 = arith.constant dense<0.000000e+00> : vector<256xf32>
    %33 = vector.multi_reduction <add>, %30, %cst_24 [0] : vector<8x256xf32> to vector<256xf32>
    %34 = vector.shape_cast %33 : vector<256xf32> to vector<1x256xf32>
    %35 = arith.mulf %30, %30 : vector<8x256xf32>
    %cst_25 = arith.constant dense<0.000000e+00> : vector<256xf32>
    %36 = vector.multi_reduction <add>, %35, %cst_25 [0] : vector<8x256xf32> to vector<256xf32>
    %37 = vector.shape_cast %36 : vector<256xf32> to vector<1x256xf32>
    %cst_26 = arith.constant 1.250000e-01 : f32
    %38 = vector.broadcast %cst_26 : f32 to vector<1x256xf32>
    %39 = arith.mulf %34, %38 : vector<1x256xf32>
    %cst_27 = arith.constant 1.250000e-01 : f32
    %40 = vector.broadcast %cst_27 : f32 to vector<1x256xf32>
    %41 = arith.mulf %37, %40 : vector<1x256xf32>
    %42 = arith.mulf %39, %39 : vector<1x256xf32>
    %43 = arith.subf %41, %42 : vector<1x256xf32>
    %cst_28 = arith.constant 0.000000e+00 : f32
    %44 = vector.broadcast %cst_28 : f32 to vector<1x256xf32>
    %45 = arith.maximumf %43, %44 : vector<1x256xf32>
    %cst_29 = arith.constant 8.000000e-01 : f32
    %46 = vector.broadcast %cst_29 : f32 to vector<1x256xf32>
    %47 = arith.addf %45, %46 : vector<1x256xf32>
    %48 = math.rsqrt %47 : vector<1x256xf32>
    %49 = arith.mulf %31, %48 : vector<1x256xf32>
    %50 = arith.mulf %39, %49 : vector<1x256xf32>
    %51 = arith.subf %32, %50 : vector<1x256xf32>
    %52 = vector.broadcast %49 : vector<1x256xf32> to vector<8x256xf32>
    %53 = arith.mulf %30, %52 : vector<8x256xf32>
    %54 = vector.broadcast %51 : vector<1x256xf32> to vector<8x256xf32>
    %55 = arith.addf %53, %54 : vector<8x256xf32>
    %cst_30 = arith.constant 0.000000e+00 : f32
    %56 = vector.broadcast %cst_30 : f32 to vector<8x256xf32>
    %57 = arith.cmpf ogt, %55, %56 : vector<8x256xf32>
    %cst_31 = arith.constant 2.000000e-01 : f32
    %58 = vector.broadcast %cst_31 : f32 to vector<8x256xf32>
    %59 = arith.mulf %58, %55 : vector<8x256xf32>
    %60 = arith.select %57, %55, %59 : vector<8x256xi1>, vector<8x256xf32>
    %c1_i32_32 = arith.constant 1 : i32
    %61 = tpu.memref_slice %arg19[%c1_i32_32] : memref<6x!tpu.dma_semaphore, #tpu.memory_space<semaphore_mem>> -> memref<1x!tpu.dma_semaphore, #tpu.memory_space<semaphore_mem>>
    %62 = tpu.memref_squeeze %61 : memref<1x!tpu.dma_semaphore, #tpu.memory_space<semaphore_mem>> -> memref<!tpu.dma_semaphore, #tpu.memory_space<semaphore_mem>>
    tpu.wait_dma2 semaphore(%62 : memref<!tpu.dma_semaphore, #tpu.memory_space<semaphore_mem>>) src(%arg6 : memref<256x512xbf16, #tpu.memory_space<any>>) dst(%arg16 : memref<256x512xbf16, #tpu.memory_space<vmem>>)
    %c0_33 = arith.constant 0 : index
    %c0_34 = arith.constant 0 : index
    %63 = vector.load %arg16[%c0_33, %c0_34] : memref<256x512xbf16, #tpu.memory_space<vmem>>, vector<256x512xbf16>
    %64 = arith.truncf %60 : vector<8x256xf32> to vector<8x256xbf16>
    %cst_35 = arith.constant dense<0.000000e+00> : vector<8x512xf32>
    %65 = tpu.matmul %64, %63, %cst_35 {dimension_numbers = #tpu.dot_dimension_numbers<[1], [0], [0], [1], [0, 0, 1, 1], [], []>} : vector<8x256xbf16>, vector<256x512xbf16>, vector<8x512xf32> -> vector<8x512xf32>
    %c0_36 = arith.constant 0 : index
    %c0_37 = arith.constant 0 : index
    %66 = vector.load %arg7[%c0_36, %c0_37] : memref<1x512xf32, #tpu.memory_space<vmem>>, vector<1x512xf32>
    %c0_38 = arith.constant 0 : index
    %c0_39 = arith.constant 0 : index
    %67 = vector.load %arg8[%c0_38, %c0_39] : memref<1x512xf32, #tpu.memory_space<vmem>>, vector<1x512xf32>
    %cst_40 = arith.constant dense<0.000000e+00> : vector<512xf32>
    %68 = vector.multi_reduction <add>, %65, %cst_40 [0] : vector<8x512xf32> to vector<512xf32>
    %69 = vector.shape_cast %68 : vector<512xf32> to vector<1x512xf32>
    %70 = arith.mulf %65, %65 : vector<8x512xf32>
    %cst_41 = arith.constant dense<0.000000e+00> : vector<512xf32>
    %71 = vector.multi_reduction <add>, %70, %cst_41 [0] : vector<8x512xf32> to vector<512xf32>
    %72 = vector.shape_cast %71 : vector<512xf32> to vector<1x512xf32>
    %cst_42 = arith.constant 1.250000e-01 : f32
    %73 = vector.broadcast %cst_42 : f32 to vector<1x512xf32>
    %74 = arith.mulf %69, %73 : vector<1x512xf32>
    %cst_43 = arith.constant 1.250000e-01 : f32
    %75 = vector.broadcast %cst_43 : f32 to vector<1x512xf32>
    %76 = arith.mulf %72, %75 : vector<1x512xf32>
    %77 = arith.mulf %74, %74 : vector<1x512xf32>
    %78 = arith.subf %76, %77 : vector<1x512xf32>
    %cst_44 = arith.constant 0.000000e+00 : f32
    %79 = vector.broadcast %cst_44 : f32 to vector<1x512xf32>
    %80 = arith.maximumf %78, %79 : vector<1x512xf32>
    %cst_45 = arith.constant 8.000000e-01 : f32
    %81 = vector.broadcast %cst_45 : f32 to vector<1x512xf32>
    %82 = arith.addf %80, %81 : vector<1x512xf32>
    %83 = math.rsqrt %82 : vector<1x512xf32>
    %84 = arith.mulf %66, %83 : vector<1x512xf32>
    %85 = arith.mulf %74, %84 : vector<1x512xf32>
    %86 = arith.subf %67, %85 : vector<1x512xf32>
    %87 = vector.broadcast %84 : vector<1x512xf32> to vector<8x512xf32>
    %88 = arith.mulf %65, %87 : vector<8x512xf32>
    %89 = vector.broadcast %86 : vector<1x512xf32> to vector<8x512xf32>
    %90 = arith.addf %88, %89 : vector<8x512xf32>
    %cst_46 = arith.constant 0.000000e+00 : f32
    %91 = vector.broadcast %cst_46 : f32 to vector<8x512xf32>
    %92 = arith.cmpf ogt, %90, %91 : vector<8x512xf32>
    %cst_47 = arith.constant 2.000000e-01 : f32
    %93 = vector.broadcast %cst_47 : f32 to vector<8x512xf32>
    %94 = arith.mulf %93, %90 : vector<8x512xf32>
    %95 = arith.select %92, %90, %94 : vector<8x512xi1>, vector<8x512xf32>
    %96 = arith.truncf %95 : vector<8x512xf32> to vector<8x512xbf16>
    %c0_48 = arith.constant 0 : index
    %c0_49 = arith.constant 0 : index
    %97 = vector.load %arg10[%c0_48, %c0_49] : memref<1x1024xf32, #tpu.memory_space<vmem>>, vector<1x1024xf32>
    %c0_50 = arith.constant 0 : index
    %c0_51 = arith.constant 0 : index
    %98 = vector.load %arg11[%c0_50, %c0_51] : memref<1x1024xf32, #tpu.memory_space<vmem>>, vector<1x1024xf32>
    %c0_i32_52 = arith.constant 0 : i32
    %c2_i32_53 = arith.constant 2 : i32
    %c0_i32_54 = arith.constant 0 : i32
    %c0_i32_55 = arith.constant 0 : i32
    %99 = tpu.memref_slice %arg9[%c0_i32_54, %c0_i32_55] : memref<512x1024xbf16, #tpu.memory_space<any>> -> memref<512x512xbf16, #tpu.memory_space<any>>
    %c0_i32_56 = arith.constant 0 : i32
    %c0_i32_57 = arith.constant 0 : i32
    %100 = tpu.memref_slice %arg17[%c0_i32_52, %c0_i32_56, %c0_i32_57] : memref<2x512x512xbf16, #tpu.memory_space<vmem>> -> memref<1x512x512xbf16, #tpu.memory_space<vmem>>
    %101 = tpu.memref_squeeze %100 : memref<1x512x512xbf16, #tpu.memory_space<vmem>> -> memref<512x512xbf16, #tpu.memory_space<vmem>>
    %102 = tpu.memref_slice %arg19[%c2_i32_53] : memref<6x!tpu.dma_semaphore, #tpu.memory_space<semaphore_mem>> -> memref<1x!tpu.dma_semaphore, #tpu.memory_space<semaphore_mem>>
    %103 = tpu.memref_squeeze %102 : memref<1x!tpu.dma_semaphore, #tpu.memory_space<semaphore_mem>> -> memref<!tpu.dma_semaphore, #tpu.memory_space<semaphore_mem>>
    tpu.wait_dma2 semaphore(%103 : memref<!tpu.dma_semaphore, #tpu.memory_space<semaphore_mem>>) src(%99 : memref<512x512xbf16, #tpu.memory_space<any>>) dst(%101 : memref<512x512xbf16, #tpu.memory_space<vmem>>)
    %c0_i32_58 = arith.constant 0 : i32
    %c4_i32 = arith.constant 4 : i32
    %c0_i32_59 = arith.constant 0 : i32
    %c0_i32_60 = arith.constant 0 : i32
    %104 = tpu.memref_slice %arg12[%c0_i32_59, %c0_i32_60] : memref<1024x128xbf16, #tpu.memory_space<any>> -> memref<512x128xbf16, #tpu.memory_space<any>>
    %c0_i32_61 = arith.constant 0 : i32
    %c0_i32_62 = arith.constant 0 : i32
    %105 = tpu.memref_slice %arg18[%c0_i32_58, %c0_i32_61, %c0_i32_62] : memref<2x512x128xbf16, #tpu.memory_space<vmem>> -> memref<1x512x128xbf16, #tpu.memory_space<vmem>>
    %106 = tpu.memref_squeeze %105 : memref<1x512x128xbf16, #tpu.memory_space<vmem>> -> memref<512x128xbf16, #tpu.memory_space<vmem>>
    %107 = tpu.memref_slice %arg19[%c4_i32] : memref<6x!tpu.dma_semaphore, #tpu.memory_space<semaphore_mem>> -> memref<1x!tpu.dma_semaphore, #tpu.memory_space<semaphore_mem>>
    %108 = tpu.memref_squeeze %107 : memref<1x!tpu.dma_semaphore, #tpu.memory_space<semaphore_mem>> -> memref<!tpu.dma_semaphore, #tpu.memory_space<semaphore_mem>>
    tpu.enqueue_dma source(%104 : memref<512x128xbf16, #tpu.memory_space<any>>) target(%106 : memref<512x128xbf16, #tpu.memory_space<vmem>>) target_semaphore(%108 : memref<!tpu.dma_semaphore, #tpu.memory_space<semaphore_mem>>)
    %109 = vector.extract_strided_slice %97 {offsets = [0, 0], sizes = [1, 512], strides = [1, 1]} : vector<1x1024xf32> to vector<1x512xf32>
    %110 = vector.extract_strided_slice %98 {offsets = [0, 0], sizes = [1, 512], strides = [1, 1]} : vector<1x1024xf32> to vector<1x512xf32>
    %c0_63 = arith.constant 0 : index
    %c0_64 = arith.constant 0 : index
    %c0_65 = arith.constant 0 : index
    %111 = vector.load %arg17[%c0_63, %c0_64, %c0_65] : memref<2x512x512xbf16, #tpu.memory_space<vmem>>, vector<1x512x512xbf16>
    %112 = vector.shape_cast %111 : vector<1x512x512xbf16> to vector<512x512xbf16>
    %cst_66 = arith.constant dense<0.000000e+00> : vector<8x512xf32>
    %113 = tpu.matmul %96, %112, %cst_66 {dimension_numbers = #tpu.dot_dimension_numbers<[1], [0], [0], [1], [0, 0, 1, 1], [], []>} : vector<8x512xbf16>, vector<512x512xbf16>, vector<8x512xf32> -> vector<8x512xf32>
    %cst_67 = arith.constant dense<0.000000e+00> : vector<512xf32>
    %114 = vector.multi_reduction <add>, %113, %cst_67 [0] : vector<8x512xf32> to vector<512xf32>
    %115 = vector.shape_cast %114 : vector<512xf32> to vector<1x512xf32>
    %116 = arith.mulf %113, %113 : vector<8x512xf32>
    %cst_68 = arith.constant dense<0.000000e+00> : vector<512xf32>
    %117 = vector.multi_reduction <add>, %116, %cst_68 [0] : vector<8x512xf32> to vector<512xf32>
    %118 = vector.shape_cast %117 : vector<512xf32> to vector<1x512xf32>
    %cst_69 = arith.constant 1.250000e-01 : f32
    %119 = vector.broadcast %cst_69 : f32 to vector<1x512xf32>
    %120 = arith.mulf %115, %119 : vector<1x512xf32>
    %cst_70 = arith.constant 1.250000e-01 : f32
    %121 = vector.broadcast %cst_70 : f32 to vector<1x512xf32>
    %122 = arith.mulf %118, %121 : vector<1x512xf32>
    %123 = arith.mulf %120, %120 : vector<1x512xf32>
    %124 = arith.subf %122, %123 : vector<1x512xf32>
    %cst_71 = arith.constant 0.000000e+00 : f32
    %125 = vector.broadcast %cst_71 : f32 to vector<1x512xf32>
    %126 = arith.maximumf %124, %125 : vector<1x512xf32>
    %cst_72 = arith.constant 8.000000e-01 : f32
    %127 = vector.broadcast %cst_72 : f32 to vector<1x512xf32>
    %128 = arith.addf %126, %127 : vector<1x512xf32>
    %129 = math.rsqrt %128 : vector<1x512xf32>
    %130 = arith.mulf %109, %129 : vector<1x512xf32>
    %131 = arith.mulf %120, %130 : vector<1x512xf32>
    %132 = arith.subf %110, %131 : vector<1x512xf32>
    %133 = vector.broadcast %130 : vector<1x512xf32> to vector<8x512xf32>
    %134 = arith.mulf %113, %133 : vector<8x512xf32>
    %135 = vector.broadcast %132 : vector<1x512xf32> to vector<8x512xf32>
    %136 = arith.addf %134, %135 : vector<8x512xf32>
    %cst_73 = arith.constant 0.000000e+00 : f32
    %137 = vector.broadcast %cst_73 : f32 to vector<8x512xf32>
    %138 = arith.cmpf ogt, %136, %137 : vector<8x512xf32>
    %cst_74 = arith.constant 2.000000e-01 : f32
    %139 = vector.broadcast %cst_74 : f32 to vector<8x512xf32>
    %140 = arith.mulf %139, %136 : vector<8x512xf32>
    %141 = arith.select %138, %136, %140 : vector<8x512xi1>, vector<8x512xf32>
    %142 = arith.truncf %141 : vector<8x512xf32> to vector<8x512xbf16>
    %c1_i32_75 = arith.constant 1 : i32
    %c3_i32_76 = arith.constant 3 : i32
    %c0_i32_77 = arith.constant 0 : i32
    %c512_i32_78 = arith.constant 512 : i32
    %143 = tpu.memref_slice %arg9[%c0_i32_77, %c512_i32_78] : memref<512x1024xbf16, #tpu.memory_space<any>> -> memref<512x512xbf16, #tpu.memory_space<any>>
    %c0_i32_79 = arith.constant 0 : i32
    %c0_i32_80 = arith.constant 0 : i32
    %144 = tpu.memref_slice %arg17[%c1_i32_75, %c0_i32_79, %c0_i32_80] : memref<2x512x512xbf16, #tpu.memory_space<vmem>> -> memref<1x512x512xbf16, #tpu.memory_space<vmem>>
    %145 = tpu.memref_squeeze %144 : memref<1x512x512xbf16, #tpu.memory_space<vmem>> -> memref<512x512xbf16, #tpu.memory_space<vmem>>
    %146 = tpu.memref_slice %arg19[%c3_i32_76] : memref<6x!tpu.dma_semaphore, #tpu.memory_space<semaphore_mem>> -> memref<1x!tpu.dma_semaphore, #tpu.memory_space<semaphore_mem>>
    %147 = tpu.memref_squeeze %146 : memref<1x!tpu.dma_semaphore, #tpu.memory_space<semaphore_mem>> -> memref<!tpu.dma_semaphore, #tpu.memory_space<semaphore_mem>>
    tpu.wait_dma2 semaphore(%147 : memref<!tpu.dma_semaphore, #tpu.memory_space<semaphore_mem>>) src(%143 : memref<512x512xbf16, #tpu.memory_space<any>>) dst(%145 : memref<512x512xbf16, #tpu.memory_space<vmem>>)
    %c1_i32_81 = arith.constant 1 : i32
    %c5_i32 = arith.constant 5 : i32
    %c512_i32_82 = arith.constant 512 : i32
    %c0_i32_83 = arith.constant 0 : i32
    %148 = tpu.memref_slice %arg12[%c512_i32_82, %c0_i32_83] : memref<1024x128xbf16, #tpu.memory_space<any>> -> memref<512x128xbf16, #tpu.memory_space<any>>
    %c0_i32_84 = arith.constant 0 : i32
    %c0_i32_85 = arith.constant 0 : i32
    %149 = tpu.memref_slice %arg18[%c1_i32_81, %c0_i32_84, %c0_i32_85] : memref<2x512x128xbf16, #tpu.memory_space<vmem>> -> memref<1x512x128xbf16, #tpu.memory_space<vmem>>
    %150 = tpu.memref_squeeze %149 : memref<1x512x128xbf16, #tpu.memory_space<vmem>> -> memref<512x128xbf16, #tpu.memory_space<vmem>>
    %151 = tpu.memref_slice %arg19[%c5_i32] : memref<6x!tpu.dma_semaphore, #tpu.memory_space<semaphore_mem>> -> memref<1x!tpu.dma_semaphore, #tpu.memory_space<semaphore_mem>>
    %152 = tpu.memref_squeeze %151 : memref<1x!tpu.dma_semaphore, #tpu.memory_space<semaphore_mem>> -> memref<!tpu.dma_semaphore, #tpu.memory_space<semaphore_mem>>
    tpu.enqueue_dma source(%148 : memref<512x128xbf16, #tpu.memory_space<any>>) target(%150 : memref<512x128xbf16, #tpu.memory_space<vmem>>) target_semaphore(%152 : memref<!tpu.dma_semaphore, #tpu.memory_space<semaphore_mem>>)
    %153 = vector.extract_strided_slice %97 {offsets = [0, 512], sizes = [1, 512], strides = [1, 1]} : vector<1x1024xf32> to vector<1x512xf32>
    %154 = vector.extract_strided_slice %98 {offsets = [0, 512], sizes = [1, 512], strides = [1, 1]} : vector<1x1024xf32> to vector<1x512xf32>
    %c1 = arith.constant 1 : index
    %c0_86 = arith.constant 0 : index
    %c0_87 = arith.constant 0 : index
    %155 = vector.load %arg17[%c1, %c0_86, %c0_87] : memref<2x512x512xbf16, #tpu.memory_space<vmem>>, vector<1x512x512xbf16>
    %156 = vector.shape_cast %155 : vector<1x512x512xbf16> to vector<512x512xbf16>
    %cst_88 = arith.constant dense<0.000000e+00> : vector<8x512xf32>
    %157 = tpu.matmul %96, %156, %cst_88 {dimension_numbers = #tpu.dot_dimension_numbers<[1], [0], [0], [1], [0, 0, 1, 1], [], []>} : vector<8x512xbf16>, vector<512x512xbf16>, vector<8x512xf32> -> vector<8x512xf32>
    %cst_89 = arith.constant dense<0.000000e+00> : vector<512xf32>
    %158 = vector.multi_reduction <add>, %157, %cst_89 [0] : vector<8x512xf32> to vector<512xf32>
    %159 = vector.shape_cast %158 : vector<512xf32> to vector<1x512xf32>
    %160 = arith.mulf %157, %157 : vector<8x512xf32>
    %cst_90 = arith.constant dense<0.000000e+00> : vector<512xf32>
    %161 = vector.multi_reduction <add>, %160, %cst_90 [0] : vector<8x512xf32> to vector<512xf32>
    %162 = vector.shape_cast %161 : vector<512xf32> to vector<1x512xf32>
    %cst_91 = arith.constant 1.250000e-01 : f32
    %163 = vector.broadcast %cst_91 : f32 to vector<1x512xf32>
    %164 = arith.mulf %159, %163 : vector<1x512xf32>
    %cst_92 = arith.constant 1.250000e-01 : f32
    %165 = vector.broadcast %cst_92 : f32 to vector<1x512xf32>
    %166 = arith.mulf %162, %165 : vector<1x512xf32>
    %167 = arith.mulf %164, %164 : vector<1x512xf32>
    %168 = arith.subf %166, %167 : vector<1x512xf32>
    %cst_93 = arith.constant 0.000000e+00 : f32
    %169 = vector.broadcast %cst_93 : f32 to vector<1x512xf32>
    %170 = arith.maximumf %168, %169 : vector<1x512xf32>
    %cst_94 = arith.constant 8.000000e-01 : f32
    %171 = vector.broadcast %cst_94 : f32 to vector<1x512xf32>
    %172 = arith.addf %170, %171 : vector<1x512xf32>
    %173 = math.rsqrt %172 : vector<1x512xf32>
    %174 = arith.mulf %153, %173 : vector<1x512xf32>
    %175 = arith.mulf %164, %174 : vector<1x512xf32>
    %176 = arith.subf %154, %175 : vector<1x512xf32>
    %177 = vector.broadcast %174 : vector<1x512xf32> to vector<8x512xf32>
    %178 = arith.mulf %157, %177 : vector<8x512xf32>
    %179 = vector.broadcast %176 : vector<1x512xf32> to vector<8x512xf32>
    %180 = arith.addf %178, %179 : vector<8x512xf32>
    %cst_95 = arith.constant 0.000000e+00 : f32
    %181 = vector.broadcast %cst_95 : f32 to vector<8x512xf32>
    %182 = arith.cmpf ogt, %180, %181 : vector<8x512xf32>
    %cst_96 = arith.constant 2.000000e-01 : f32
    %183 = vector.broadcast %cst_96 : f32 to vector<8x512xf32>
    %184 = arith.mulf %183, %180 : vector<8x512xf32>
    %185 = arith.select %182, %180, %184 : vector<8x512xi1>, vector<8x512xf32>
    %186 = arith.truncf %185 : vector<8x512xf32> to vector<8x512xbf16>
    %cst_97 = arith.constant 0.000000e+00 : f32
    %187 = vector.broadcast %cst_97 : f32 to vector<8x128xf32>
    %c0_i32_98 = arith.constant 0 : i32
    %c4_i32_99 = arith.constant 4 : i32
    %c0_i32_100 = arith.constant 0 : i32
    %c0_i32_101 = arith.constant 0 : i32
    %188 = tpu.memref_slice %arg12[%c0_i32_100, %c0_i32_101] : memref<1024x128xbf16, #tpu.memory_space<any>> -> memref<512x128xbf16, #tpu.memory_space<any>>
    %c0_i32_102 = arith.constant 0 : i32
    %c0_i32_103 = arith.constant 0 : i32
    %189 = tpu.memref_slice %arg18[%c0_i32_98, %c0_i32_102, %c0_i32_103] : memref<2x512x128xbf16, #tpu.memory_space<vmem>> -> memref<1x512x128xbf16, #tpu.memory_space<vmem>>
    %190 = tpu.memref_squeeze %189 : memref<1x512x128xbf16, #tpu.memory_space<vmem>> -> memref<512x128xbf16, #tpu.memory_space<vmem>>
    %191 = tpu.memref_slice %arg19[%c4_i32_99] : memref<6x!tpu.dma_semaphore, #tpu.memory_space<semaphore_mem>> -> memref<1x!tpu.dma_semaphore, #tpu.memory_space<semaphore_mem>>
    %192 = tpu.memref_squeeze %191 : memref<1x!tpu.dma_semaphore, #tpu.memory_space<semaphore_mem>> -> memref<!tpu.dma_semaphore, #tpu.memory_space<semaphore_mem>>
    tpu.wait_dma2 semaphore(%192 : memref<!tpu.dma_semaphore, #tpu.memory_space<semaphore_mem>>) src(%188 : memref<512x128xbf16, #tpu.memory_space<any>>) dst(%190 : memref<512x128xbf16, #tpu.memory_space<vmem>>)
    %c0_104 = arith.constant 0 : index
    %c0_105 = arith.constant 0 : index
    %c0_106 = arith.constant 0 : index
    %193 = vector.load %arg18[%c0_104, %c0_105, %c0_106] : memref<2x512x128xbf16, #tpu.memory_space<vmem>>, vector<1x512x128xbf16>
    %194 = vector.shape_cast %193 : vector<1x512x128xbf16> to vector<512x128xbf16>
    %cst_107 = arith.constant dense<0.000000e+00> : vector<8x128xf32>
    %195 = tpu.matmul %142, %194, %cst_107 {dimension_numbers = #tpu.dot_dimension_numbers<[1], [0], [0], [1], [0, 0, 1, 1], [], []>} : vector<8x512xbf16>, vector<512x128xbf16>, vector<8x128xf32> -> vector<8x128xf32>
    %196 = arith.addf %187, %195 : vector<8x128xf32>
    %c1_i32_108 = arith.constant 1 : i32
    %c5_i32_109 = arith.constant 5 : i32
    %c512_i32_110 = arith.constant 512 : i32
    %c0_i32_111 = arith.constant 0 : i32
    %197 = tpu.memref_slice %arg12[%c512_i32_110, %c0_i32_111] : memref<1024x128xbf16, #tpu.memory_space<any>> -> memref<512x128xbf16, #tpu.memory_space<any>>
    %c0_i32_112 = arith.constant 0 : i32
    %c0_i32_113 = arith.constant 0 : i32
    %198 = tpu.memref_slice %arg18[%c1_i32_108, %c0_i32_112, %c0_i32_113] : memref<2x512x128xbf16, #tpu.memory_space<vmem>> -> memref<1x512x128xbf16, #tpu.memory_space<vmem>>
    %199 = tpu.memref_squeeze %198 : memref<1x512x128xbf16, #tpu.memory_space<vmem>> -> memref<512x128xbf16, #tpu.memory_space<vmem>>
    %200 = tpu.memref_slice %arg19[%c5_i32_109] : memref<6x!tpu.dma_semaphore, #tpu.memory_space<semaphore_mem>> -> memref<1x!tpu.dma_semaphore, #tpu.memory_space<semaphore_mem>>
    %201 = tpu.memref_squeeze %200 : memref<1x!tpu.dma_semaphore, #tpu.memory_space<semaphore_mem>> -> memref<!tpu.dma_semaphore, #tpu.memory_space<semaphore_mem>>
    tpu.wait_dma2 semaphore(%201 : memref<!tpu.dma_semaphore, #tpu.memory_space<semaphore_mem>>) src(%197 : memref<512x128xbf16, #tpu.memory_space<any>>) dst(%199 : memref<512x128xbf16, #tpu.memory_space<vmem>>)
    %c1_114 = arith.constant 1 : index
    %c0_115 = arith.constant 0 : index
    %c0_116 = arith.constant 0 : index
    %202 = vector.load %arg18[%c1_114, %c0_115, %c0_116] : memref<2x512x128xbf16, #tpu.memory_space<vmem>>, vector<1x512x128xbf16>
    %203 = vector.shape_cast %202 : vector<1x512x128xbf16> to vector<512x128xbf16>
    %cst_117 = arith.constant dense<0.000000e+00> : vector<8x128xf32>
    %204 = tpu.matmul %186, %203, %cst_117 {dimension_numbers = #tpu.dot_dimension_numbers<[1], [0], [0], [1], [0, 0, 1, 1], [], []>} : vector<8x512xbf16>, vector<512x128xbf16>, vector<8x128xf32> -> vector<8x128xf32>
    %205 = arith.addf %196, %204 : vector<8x128xf32>
    %c0_118 = arith.constant 0 : index
    %c0_119 = arith.constant 0 : index
    %206 = vector.load %arg13[%c0_118, %c0_119] : memref<1x128xf32, #tpu.memory_space<vmem>>, vector<1x128xf32>
    %207 = vector.broadcast %206 : vector<1x128xf32> to vector<8x128xf32>
    %208 = arith.addf %205, %207 : vector<8x128xf32>
    %209 = math.tanh %208 : vector<8x128xf32>
    %c0_120 = arith.constant 0 : index
    %c0_121 = arith.constant 0 : index
    %210 = vector.load %arg14[%c0_120, %c0_121] : memref<8x128xf32, #tpu.memory_space<vmem>>, vector<8x128xf32>
    tpu.vector_store %arg14[%c0_120, %c0_121], %209 {strides = array<i32>} : memref<8x128xf32, #tpu.memory_space<vmem>>, vector<8x128xf32>,
    return
  }
}

</mosaic_0001>

<llo_original>
// kernel: expert_forward.1
$region0: #{expert_forward.1}
  #allocation0 [shape = 'u32[]', space=smem, size = 0x4, offset = 0x4, fixed_abs, tag = 'smem constant byte address 0x4 - core index']
  #allocation1 [shape = 'u32[144,128]{1,0:T(1,128)}', space=vmem, size = 0x12000, scoped, tag = 'internal scratch']
  #allocation2 [shape = 'bf16[128,256]{1,0:T(16,128)(2,1)}', space=vmem, size = 0x10000, scoped, tag = 'scratch operand']
  #allocation3 [shape = 'bf16[256,512]{1,0:T(16,128)(2,1)}', space=vmem, size = 0x40000, scoped, tag = 'scratch operand']
  #allocation4 [shape = 'bf16[2,512,512]{2,1,0:T(16,128)(2,1)}', space=vmem, size = 0x100000, scoped, tag = 'scratch operand']
  #allocation5 [shape = 'bf16[2,512,128]{2,1,0:T(16,128)(2,1)}', space=vmem, size = 0x40000, scoped, tag = 'scratch operand']
  #allocation6 [shape = 's32[6]{0}', space=sflag, size = 0x18, scoped, tag = 'scratch operand']
  #allocation9 [shape = 's32[]', space=sflag, size = 0x4, offset = 0, fixed_abs, tag = 'sflag constant byte address 0x0 - dummy sync flag']
  #allocation10 [shape = 's32[]', space=sflag, size = 0x4, offset = 0, fixed_abs, tag = 'sflag constant byte address 0x0 - dummy sync flag']
  #allocation11 [shape = 's32[]', space=sflag, size = 0x4, offset = 0, fixed_abs, tag = 'sflag constant byte address 0x0 - dummy sync flag']
  #allocation13 [shape = 's32[]', space=sflag, size = 0x4, offset = 0, fixed_abs, tag = 'sflag constant byte address 0x0 - dummy sync flag']
  #allocation15 [shape = 's32[]', space=sflag, size = 0x4, offset = 0, fixed_abs, tag = 'sflag constant byte address 0x0 - dummy sync flag']
  #allocation16 [shape = 's32[]', space=sflag, size = 0x4, offset = 0, fixed_abs, tag = 'sflag constant byte address 0x0 - dummy sync flag']
  %s0 = inlined_call_operand.vmem [shape: f32[8,128], index: 0, kind: input, shape index: {}]
  %s1 = inlined_call_operand.vmem [shape: bf16[128,128], index: 1, kind: input, shape index: {}]
  %s2 = inlined_call_operand.vmem [shape: f32[1,128], index: 2, kind: input, shape index: {}]
  %s3 = inlined_call_operand.vmem [shape: bf16[128,256], index: 3, kind: input, shape index: {}]
  %s4 = inlined_call_operand.vmem [shape: f32[1,256], index: 4, kind: input, shape index: {}]
  %s5 = inlined_call_operand.vmem [shape: f32[1,256], index: 5, kind: input, shape index: {}]
  %s6 = inlined_call_operand.vmem [shape: bf16[256,512], index: 6, kind: input, shape index: {}]
  %s7 = inlined_call_operand.vmem [shape: f32[1,512], index: 7, kind: input, shape index: {}]
  %s8 = inlined_call_operand.vmem [shape: f32[1,512], index: 8, kind: input, shape index: {}]
  %s9 = inlined_call_operand.hbm [shape: bf16[512,1024], index: 9, kind: input, shape index: {}]
  %s10 = inlined_call_operand.vmem [shape: f32[1,1024], index: 10, kind: input, shape index: {}]
  %s11 = inlined_call_operand.vmem [shape: f32[1,1024], index: 11, kind: input, shape index: {}]
  %s12 = inlined_call_operand.vmem [shape: bf16[1024,128], index: 12, kind: input, shape index: {}]
  %s13 = inlined_call_operand.vmem [shape: f32[1,128], index: 13, kind: input, shape index: {}]
  %s14 = inlined_call_operand.hbm [shape: f32[8,128], index: 14, kind: output, shape index: {}]
  %s15 = sld [smem:[#allocation0]]
  $region192: #{expert_forward.1} parent=0
    _
  %s17 = ssub.s32 1, %s15
  %s18 = scalar_select 0, %s17, %s15
  $region1: #{expert_forward.1} parent=0
    #allocation7 [shape = 'u8[4096]{0}', space=vmem, size = 0x1000, scoped, tag = 'output window, operand 0, single buffered']
    #allocation8 [shape = 's32[1]{0}', space=sflag, size = 0x4, scoped, tag = 'scoped memory for expert_forward.1']
    #allocation12 [shape = 'u32[9]{0}', space=smem, size = 0x24, scoped, tag = 'DMA stride descriptor']
    #allocation14 [shape = 'u32[9]{0}', space=smem, size = 0x24, scoped, tag = 'DMA stride descriptor']
    %19 = vsyncpa [#allocation8], 0
    // Predicated region
    $region2: #{expert_forward.1} parent=1 // pred_check
      _
    $region3: #{expert_forward.1} parent=1 // pred_check_branch
      %21 = sbr.rel (0) target = $region5
    $region4: #{expert_forward.1} parent=1 // pred_region
      _
    $region5: #{expert_forward.1} parent=1 // pred_fallthru
      _
    // Predicated region
    $region6: #{expert_forward.1} parent=1 // pred_check
      _
    $region7: #{expert_forward.1} parent=1 // pred_check_branch
      %23 = sbr.rel (0) target = $region9
    $region8: #{expert_forward.1} parent=1 // pred_region
      _
    $region9: #{expert_forward.1} parent=1 // pred_fallthru
      _
    // Predicated region
    $region10: #{expert_forward.1} parent=1 // pred_check
      _
    $region11: #{expert_forward.1} parent=1 // pred_check_branch
      %25 = sbr.rel (0) target = $region13
    $region12: #{expert_forward.1} parent=1 // pred_region
      _
    $region13: #{expert_forward.1} parent=1 // pred_fallthru
      _
    // Predicated region
    $region14: #{expert_forward.1} parent=1 // pred_check
      _
    $region15: #{expert_forward.1} parent=1 // pred_check_branch
      %27 = sbr.rel (0) target = $region17
    $region16: #{expert_forward.1} parent=1 // pred_region
      _
    $region17: #{expert_forward.1} parent=1 // pred_fallthru
      _
    // Predicated region
    $region18: #{expert_forward.1} parent=1 // pred_check
      _
    $region19: #{expert_forward.1} parent=1 // pred_check_branch
      %29 = sbr.rel (0) target = $region21
    $region20: #{expert_forward.1} parent=1 // pred_region
      _
    $region21: #{expert_forward.1} parent=1 // pred_fallthru
      _
    // Predicated region
    $region22: #{expert_forward.1} parent=1 // pred_check
      _
    $region23: #{expert_forward.1} parent=1 // pred_check_branch
      %31 = sbr.rel (0) target = $region25
    $region24: #{expert_forward.1} parent=1 // pred_region
      _
    $region25: #{expert_forward.1} parent=1 // pred_fallthru
      _
    // Predicated region
    $region26: #{expert_forward.1} parent=1 // pred_check
      _
    $region27: #{expert_forward.1} parent=1 // pred_check_branch
      %33 = sbr.rel (0) target = $region29
    $region28: #{expert_forward.1} parent=1 // pred_region
      _
    $region29: #{expert_forward.1} parent=1 // pred_fallthru
      _
    // Predicated region
    $region30: #{expert_forward.1} parent=1 // pred_check
      _
    $region31: #{expert_forward.1} parent=1 // pred_check_branch
      %35 = sbr.rel (0) target = $region33
    $region32: #{expert_forward.1} parent=1 // pred_region
      _
    $region33: #{expert_forward.1} parent=1 // pred_fallthru
      _
    // Predicated region
    $region34: #{expert_forward.1} parent=1 // pred_check
      _
    $region35: #{expert_forward.1} parent=1 // pred_check_branch
      %37 = sbr.rel (0) target = $region37
    $region36: #{expert_forward.1} parent=1 // pred_region
      _
    $region37: #{expert_forward.1} parent=1 // pred_fallthru
      _
    // Predicated region
    $region38: #{expert_forward.1} parent=1 // pred_check
      _
    $region39: #{expert_forward.1} parent=1 // pred_check_branch
      %39 = sbr.rel (0) target = $region41
    $region40: #{expert_forward.1} parent=1 // pred_region
      _
    $region41: #{expert_forward.1} parent=1 // pred_fallthru
      _
    %p42 = scmp.lt.u32.totalorder 4, 8
    %p43 = pneg %p42
    // Predicated region
    $region42: #{expert_forward.1} parent=1 // pred_check
      _
    $region43: #{expert_forward.1} parent=1 // pred_check_branch
      %45 = sbr.rel (%p42) target = $region45
    $region44: #{expert_forward.1} parent=1 // pred_region
      %s122 = sand.u32 4, 7
      %p123 = scmp.eq.s32.totalorder %s122, 0
      %p124 = pneg %p123
      // Predicated region
      $region57: #{expert_forward.1} parent=44 // pred_check
        _
      $region58: #{expert_forward.1} parent=44 // pred_check_branch
        %126 = sbr.rel (%p123) target = $region60
      $region59: #{expert_forward.1} parent=44 // pred_region
        %s127 = sand.u32 4, 7
        %s128 = ssub.s32 4, %s127
        %s129 = scalar_lea.vmem %s3, %s128
        %s130 = ssub.s32 4, %s127
        %s131 = scalar_lea.vmem [#allocation2], %s130
        loop: start=0, step=1, limit=1
        $region61: #{expert_forward.1} parent=59 // loop_pre_header
          _
        $region62: #{expert_forward.1} parent=59 // loop_header
          %s133 = sphi 0, %s137
          %p134 = scmp.ge.s32.totalorder %s133, 1
          %s138 = sphi %s3, %s3
          %s139 = sphi [#allocation2], [#allocation2]
        $region63: #{expert_forward.1} parent=59 // loop_header_branch
          %136 = sbr.rel (%p134) target = $region67
        $region64: #{expert_forward.1} parent=59 // loop_body
          _
        $region65: #{expert_forward.1} parent=59 // loop_footer
          %s137 = sadd.s32 1, %s133
        $region66: #{expert_forward.1} parent=59 // loop_footer_branch
          %132 = sbr.rel target = $region62
        $region67: #{expert_forward.1} parent=59 // loop_exit
          _
        %s140 = sshllo.u32 0, %s127
        loop: start=0, step=1, limit=1
        $region68: #{expert_forward.1} parent=59 // loop_pre_header
          _
        $region69: #{expert_forward.1} parent=59 // loop_header
          %s142 = sphi 0, %s146
          %p143 = scmp.ge.s32.totalorder %s142, 1
          %s147 = sphi %s129, %s129
          %s148 = sphi %s131, %s131
        $region70: #{expert_forward.1} parent=59 // loop_header_branch
          %145 = sbr.rel (%p143) target = $region74
        $region71: #{expert_forward.1} parent=59 // loop_body
          %v149 = vld [vmem:[%s147] sm:%s140]
          %150 = vst [vmem:[%s148] sm:%s140] %v149
          %v151 = vld [vmem:[%s147 + $0x8] sm:%s140]
          %152 = vst [vmem:[%s148 + $0x4] sm:%s140] %v151
          %v153 = vld [vmem:[%s147 + $0x4] sm:%s140]
          %154 = vst [vmem:[%s148 + $0x8] sm:%s140] %v153
          %v155 = vld [vmem:[%s147 + $0xc] sm:%s140]
          %156 = vst [vmem:[%s148 + $0xc] sm:%s140] %v155
          %v157 = vld [vmem:[%s147 + $0x10] sm:%s140]
          %158 = vst [vmem:[%s148 + $0x10] sm:%s140] %v157
          %v159 = vld [vmem:[%s147 + $0x18] sm:%s140]
          %160 = vst [vmem:[%s148 + $0x14] sm:%s140] %v159
          %v161 = vld [vmem:[%s147 + $0x14] sm:%s140]
          %162 = vst [vmem:[%s148 + $0x18] sm:%s140] %v161
          %v163 = vld [vmem:[%s147 + $0x1c] sm:%s140]
          %164 = vst [vmem:[%s148 + $0x1c] sm:%s140] %v163
          %v165 = vld [vmem:[%s147 + $0x20] sm:%s140]
          %166 = vst [vmem:[%s148 + $0x20] sm:%s140] %v165
          %v167 = vld [vmem:[%s147 + $0x28] sm:%s140]
          %168 = vst [vmem:[%s148 + $0x24] sm:%s140] %v167
          %v169 = vld [vmem:[%s147 + $0x24] sm:%s140]
          %170 = vst [vmem:[%s148 + $0x28] sm:%s140] %v169
          %v171 = vld [vmem:[%s147 + $0x2c] sm:%s140]
          %172 = vst [vmem:[%s148 + $0x2c] sm:%s140] %v171
          %v173 = vld [vmem:[%s147 + $0x30] sm:%s140]
          %174 = vst [vmem:[%s148 + $0x30] sm:%s140] %v173
          %v175 = vld [vmem:[%s147 + $0x38] sm:%s140]
          %176 = vst [vmem:[%s148 + $0x34] sm:%s140] %v175
          %v177 = vld [vmem:[%s147 + $0x34] sm:%s140]
          %178 = vst [vmem:[%s148 + $0x38] sm:%s140] %v177
          %v179 = vld [vmem:[%s147 + $0x3c] sm:%s140]
          %180 = vst [vmem:[%s148 + $0x3c] sm:%s140] %v179
          %v181 = vld [vmem:[%s147 + $0x40] sm:%s140]
          %182 = vst [vmem:[%s148 + $0x40] sm:%s140] %v181
          %v183 = vld [vmem:[%s147 + $0x48] sm:%s140]
          %184 = vst [vmem:[%s148 + $0x44] sm:%s140] %v183
          %v185 = vld [vmem:[%s147 + $0x44] sm:%s140]
          %186 = vst [vmem:[%s148 + $0x48] sm:%s140] %v185
          %v187 = vld [vmem:[%s147 + $0x4c] sm:%s140]
          %188 = vst [vmem:[%s148 + $0x4c] sm:%s140] %v187
          %v189 = vld [vmem:[%s147 + $0x50] sm:%s140]
          %190 = vst [vmem:[%s148 + $0x50] sm:%s140] %v189
          %v191 = vld [vmem:[%s147 + $0x58] sm:%s140]
          %192 = vst [vmem:[%s148 + $0x54] sm:%s140] %v191
          %v193 = vld [vmem:[%s147 + $0x54] sm:%s140]
          %194 = vst [vmem:[%s148 + $0x58] sm:%s140] %v193
          %v195 = vld [vmem:[%s147 + $0x5c] sm:%s140]
          %196 = vst [vmem:[%s148 + $0x5c] sm:%s140] %v195
          %v197 = vld [vmem:[%s147 + $0x60] sm:%s140]
          %198 = vst [vmem:[%s148 + $0x60] sm:%s140] %v197
          %v199 = vld [vmem:[%s147 + $0x68] sm:%s140]
          %200 = vst [vmem:[%s148 + $0x64] sm:%s140] %v199
          %v201 = vld [vmem:[%s147 + $0x64] sm:%s140]
          %202 = vst [vmem:[%s148 + $0x68] sm:%s140] %v201
          %v203 = vld [vmem:[%s147 + $0x6c] sm:%s140]
          %204 = vst [vmem:[%s148 + $0x6c] sm:%s140] %v203
          %v205 = vld [vmem:[%s147 + $0x70] sm:%s140]
          %206 = vst [vmem:[%s148 + $0x70] sm:%s140] %v205
          %v207 = vld [vmem:[%s147 + $0x78] sm:%s140]
          %208 = vst [vmem:[%s148 + $0x74] sm:%s140] %v207
          %v209 = vld [vmem:[%s147 + $0x74] sm:%s140]
          %210 = vst [vmem:[%s148 + $0x78] sm:%s140] %v209
          %v211 = vld [vmem:[%s147 + $0x7c] sm:%s140]
          %212 = vst [vmem:[%s148 + $0x7c] sm:%s140] %v211
        $region72: #{expert_forward.1} parent=59 // loop_footer
          %s146 = sadd.s32 1, %s142
        $region73: #{expert_forward.1} parent=59 // loop_footer_branch
          %141 = sbr.rel target = $region69
        $region74: #{expert_forward.1} parent=59 // loop_exit
          _
      $region60: #{expert_forward.1} parent=44 // pred_fallthru
        _
    $region45: #{expert_forward.1} parent=1 // pred_fallthru
      _
    // Predicated region
    $region46: #{expert_forward.1} parent=1 // pred_check
      %p46 = pneg %p42
    $region47: #{expert_forward.1} parent=1 // pred_check_branch
      %48 = sbr.rel (%p46) target = $region49
    $region48: #{expert_forward.1} parent=1 // pred_region
      %s49 = sshllo.u32 0, 4
      loop: start=0, step=1, limit=1
      $region50: #{expert_forward.1} parent=48 // loop_pre_header
        _
      $region51: #{expert_forward.1} parent=48 // loop_header
        %s51 = sphi 0, %s55
        %p52 = scmp.ge.s32.totalorder %s51, 1
        %s56 = sphi %s3, %s3
        %s57 = sphi [#allocation2], [#allocation2]
      $region52: #{expert_forward.1} parent=48 // loop_header_branch
        %54 = sbr.rel (%p52) target = $region56
      $region53: #{expert_forward.1} parent=48 // loop_body
        %v58 = vld [vmem:[%s56] sm:%s49]
        %59 = vst [vmem:[%s57] sm:%s49] %v58
        %v60 = vld [vmem:[%s56 + $0x8] sm:%s49]
        %61 = vst [vmem:[%s57 + $0x4] sm:%s49] %v60
        %v62 = vld [vmem:[%s56 + $0x4] sm:%s49]
        %63 = vst [vmem:[%s57 + $0x8] sm:%s49] %v62
        %v64 = vld [vmem:[%s56 + $0xc] sm:%s49]
        %65 = vst [vmem:[%s57 + $0xc] sm:%s49] %v64
        %v66 = vld [vmem:[%s56 + $0x10] sm:%s49]
        %67 = vst [vmem:[%s57 + $0x10] sm:%s49] %v66
        %v68 = vld [vmem:[%s56 + $0x18] sm:%s49]
        %69 = vst [vmem:[%s57 + $0x14] sm:%s49] %v68
        %v70 = vld [vmem:[%s56 + $0x14] sm:%s49]
        %71 = vst [vmem:[%s57 + $0x18] sm:%s49] %v70
        %v72 = vld [vmem:[%s56 + $0x1c] sm:%s49]
        %73 = vst [vmem:[%s57 + $0x1c] sm:%s49] %v72
        %v74 = vld [vmem:[%s56 + $0x20] sm:%s49]
        %75 = vst [vmem:[%s57 + $0x20] sm:%s49] %v74
        %v76 = vld [vmem:[%s56 + $0x28] sm:%s49]
        %77 = vst [vmem:[%s57 + $0x24] sm:%s49] %v76
        %v78 = vld [vmem:[%s56 + $0x24] sm:%s49]
        %79 = vst [vmem:[%s57 + $0x28] sm:%s49] %v78
        %v80 = vld [vmem:[%s56 + $0x2c] sm:%s49]
        %81 = vst [vmem:[%s57 + $0x2c] sm:%s49] %v80
        %v82 = vld [vmem:[%s56 + $0x30] sm:%s49]
        %83 = vst [vmem:[%s57 + $0x30] sm:%s49] %v82
        %v84 = vld [vmem:[%s56 + $0x38] sm:%s49]
        %85 = vst [vmem:[%s57 + $0x34] sm:%s49] %v84
        %v86 = vld [vmem:[%s56 + $0x34] sm:%s49]
        %87 = vst [vmem:[%s57 + $0x38] sm:%s49] %v86
        %v88 = vld [vmem:[%s56 + $0x3c] sm:%s49]
        %89 = vst [vmem:[%s57 + $0x3c] sm:%s49] %v88
        %v90 = vld [vmem:[%s56 + $0x40] sm:%s49]
        %91 = vst [vmem:[%s57 + $0x40] sm:%s49] %v90
        %v92 = vld [vmem:[%s56 + $0x48] sm:%s49]
        %93 = vst [vmem:[%s57 + $0x44] sm:%s49] %v92
        %v94 = vld [vmem:[%s56 + $0x44] sm:%s49]
        %95 = vst [vmem:[%s57 + $0x48] sm:%s49] %v94
        %v96 = vld [vmem:[%s56 + $0x4c] sm:%s49]
        %97 = vst [vmem:[%s57 + $0x4c] sm:%s49] %v96
        %v98 = vld [vmem:[%s56 + $0x50] sm:%s49]
        %99 = vst [vmem:[%s57 + $0x50] sm:%s49] %v98
        %v100 = vld [vmem:[%s56 + $0x58] sm:%s49]
        %101 = vst [vmem:[%s57 + $0x54] sm:%s49] %v100
        %v102 = vld [vmem:[%s56 + $0x54] sm:%s49]
        %103 = vst [vmem:[%s57 + $0x58] sm:%s49] %v102
        %v104 = vld [vmem:[%s56 + $0x5c] sm:%s49]
        %105 = vst [vmem:[%s57 + $0x5c] sm:%s49] %v104
        %v106 = vld [vmem:[%s56 + $0x60] sm:%s49]
        %107 = vst [vmem:[%s57 + $0x60] sm:%s49] %v106
        %v108 = vld [vmem:[%s56 + $0x68] sm:%s49]
        %109 = vst [vmem:[%s57 + $0x64] sm:%s49] %v108
        %v110 = vld [vmem:[%s56 + $0x64] sm:%s49]
        %111 = vst [vmem:[%s57 + $0x68] sm:%s49] %v110
        %v112 = vld [vmem:[%s56 + $0x6c] sm:%s49]
        %113 = vst [vmem:[%s57 + $0x6c] sm:%s49] %v112
        %v114 = vld [vmem:[%s56 + $0x70] sm:%s49]
        %115 = vst [vmem:[%s57 + $0x70] sm:%s49] %v114
        %v116 = vld [vmem:[%s56 + $0x78] sm:%s49]
        %117 = vst [vmem:[%s57 + $0x74] sm:%s49] %v116
        %v118 = vld [vmem:[%s56 + $0x74] sm:%s49]
        %119 = vst [vmem:[%s57 + $0x78] sm:%s49] %v118
        %v120 = vld [vmem:[%s56 + $0x7c] sm:%s49]
        %121 = vst [vmem:[%s57 + $0x7c] sm:%s49] %v120
      $region54: #{expert_forward.1} parent=48 // loop_footer
        %s55 = sadd.s32 1, %s51
      $region55: #{expert_forward.1} parent=48 // loop_footer_branch
        %50 = sbr.rel target = $region51
      $region56: #{expert_forward.1} parent=48 // loop_exit
        _
    $region49: #{expert_forward.1} parent=1 // pred_fallthru
      _
    // Predicated region
    $region75: #{expert_forward.1} parent=1 // pred_check
      _
    $region76: #{expert_forward.1} parent=1 // pred_check_branch
      %215 = sbr.rel (0) target = $region78
    $region77: #{expert_forward.1} parent=1 // pred_region
      %216 = vsyncadd [#allocation6], 2048
    $region78: #{expert_forward.1} parent=1 // pred_fallthru
      _
    %s217 = scalar_lea.sflag [#allocation6], 1
    %p219 = scmp.lt.u32.totalorder 4, 8
    %p220 = pneg %p219
    // Predicated region
    $region79: #{expert_forward.1} parent=1 // pred_check
      _
    $region80: #{expert_forward.1} parent=1 // pred_check_branch
      %222 = sbr.rel (%p219) target = $region82
    $region81: #{expert_forward.1} parent=1 // pred_region
      %s491 = sand.u32 4, 7
      %p492 = scmp.eq.s32.totalorder %s491, 0
      %p493 = pneg %p492
      // Predicated region
      $region94: #{expert_forward.1} parent=81 // pred_check
        _
      $region95: #{expert_forward.1} parent=81 // pred_check_branch
        %495 = sbr.rel (%p492) target = $region97
      $region96: #{expert_forward.1} parent=81 // pred_region
        %s496 = sand.u32 4, 7
        %s497 = ssub.s32 4, %s496
        %s498 = scalar_lea.vmem %s6, %s497
        %s499 = ssub.s32 4, %s496
        %s500 = scalar_lea.vmem [#allocation3], %s499
        loop: start=0, step=1, limit=1
        $region98: #{expert_forward.1} parent=96 // loop_pre_header
          _
        $region99: #{expert_forward.1} parent=96 // loop_header
          %s502 = sphi 0, %s506
          %p503 = scmp.ge.s32.totalorder %s502, 1
          %s507 = sphi %s6, %s6
          %s508 = sphi [#allocation3], [#allocation3]
        $region100: #{expert_forward.1} parent=96 // loop_header_branch
          %505 = sbr.rel (%p503) target = $region104
        $region101: #{expert_forward.1} parent=96 // loop_body
          _
        $region102: #{expert_forward.1} parent=96 // loop_footer
          %s506 = sadd.s32 1, %s502
        $region103: #{expert_forward.1} parent=96 // loop_footer_branch
          %501 = sbr.rel target = $region99
        $region104: #{expert_forward.1} parent=96 // loop_exit
          _
        %s509 = sshllo.u32 0, %s496
        loop: start=0, step=1, limit=1
        $region105: #{expert_forward.1} parent=96 // loop_pre_header
          _
        $region106: #{expert_forward.1} parent=96 // loop_header
          %s511 = sphi 0, %s515
          %p512 = scmp.ge.s32.totalorder %s511, 1
          %s516 = sphi %s498, %s498
          %s517 = sphi %s500, %s500
        $region107: #{expert_forward.1} parent=96 // loop_header_branch
          %514 = sbr.rel (%p512) target = $region111
        $region108: #{expert_forward.1} parent=96 // loop_body
          %v518 = vld [vmem:[%s516] sm:%s509]
          %519 = vst [vmem:[%s517] sm:%s509] %v518
          %v520 = vld [vmem:[%s516 + $0x10] sm:%s509]
          %521 = vst [vmem:[%s517 + $0x4] sm:%s509] %v520
          %v522 = vld [vmem:[%s516 + $0x4] sm:%s509]
          %523 = vst [vmem:[%s517 + $0x8] sm:%s509] %v522
          %v524 = vld [vmem:[%s516 + $0x14] sm:%s509]
          %525 = vst [vmem:[%s517 + $0xc] sm:%s509] %v524
          %v526 = vld [vmem:[%s516 + $0x8] sm:%s509]
          %527 = vst [vmem:[%s517 + $0x10] sm:%s509] %v526
          %v528 = vld [vmem:[%s516 + $0x18] sm:%s509]
          %529 = vst [vmem:[%s517 + $0x14] sm:%s509] %v528
          %v530 = vld [vmem:[%s516 + $0xc] sm:%s509]
          %531 = vst [vmem:[%s517 + $0x18] sm:%s509] %v530
          %v532 = vld [vmem:[%s516 + $0x1c] sm:%s509]
          %533 = vst [vmem:[%s517 + $0x1c] sm:%s509] %v532
          %v534 = vld [vmem:[%s516 + $0x20] sm:%s509]
          %535 = vst [vmem:[%s517 + $0x20] sm:%s509] %v534
          %v536 = vld [vmem:[%s516 + $0x30] sm:%s509]
          %537 = vst [vmem:[%s517 + $0x24] sm:%s509] %v536
          %v538 = vld [vmem:[%s516 + $0x24] sm:%s509]
          %539 = vst [vmem:[%s517 + $0x28] sm:%s509] %v538
          %v540 = vld [vmem:[%s516 + $0x34] sm:%s509]
          %541 = vst [vmem:[%s517 + $0x2c] sm:%s509] %v540
          %v542 = vld [vmem:[%s516 + $0x28] sm:%s509]
          %543 = vst [vmem:[%s517 + $0x30] sm:%s509] %v542
          %v544 = vld [vmem:[%s516 + $0x38] sm:%s509]
          %545 = vst [vmem:[%s517 + $0x34] sm:%s509] %v544
          %v546 = vld [vmem:[%s516 + $0x2c] sm:%s509]
          %547 = vst [vmem:[%s517 + $0x38] sm:%s509] %v546
          %v548 = vld [vmem:[%s516 + $0x3c] sm:%s509]
          %549 = vst [vmem:[%s517 + $0x3c] sm:%s509] %v548
          %v550 = vld [vmem:[%s516 + $0x40] sm:%s509]
          %551 = vst [vmem:[%s517 + $0x40] sm:%s509] %v550
          %v552 = vld [vmem:[%s516 + $0x50] sm:%s509]
          %553 = vst [vmem:[%s517 + $0x44] sm:%s509] %v552
          %v554 = vld [vmem:[%s516 + $0x44] sm:%s509]
          %555 = vst [vmem:[%s517 + $0x48] sm:%s509] %v554
          %v556 = vld [vmem:[%s516 + $0x54] sm:%s509]
          %557 = vst [vmem:[%s517 + $0x4c] sm:%s509] %v556
          %v558 = vld [vmem:[%s516 + $0x48] sm:%s509]
          %559 = vst [vmem:[%s517 + $0x50] sm:%s509] %v558
          %v560 = vld [vmem:[%s516 + $0x58] sm:%s509]
          %561 = vst [vmem:[%s517 + $0x54] sm:%s509] %v560
          %v562 = vld [vmem:[%s516 + $0x4c] sm:%s509]
          %563 = vst [vmem:[%s517 + $0x58] sm:%s509] %v562
          %v564 = vld [vmem:[%s516 + $0x5c] sm:%s509]
          %565 = vst [vmem:[%s517 + $0x5c] sm:%s509] %v564
          %v566 = vld [vmem:[%s516 + $0x60] sm:%s509]
          %567 = vst [vmem:[%s517 + $0x60] sm:%s509] %v566
          %v568 = vld [vmem:[%s516 + $0x70] sm:%s509]
          %569 = vst [vmem:[%s517 + $0x64] sm:%s509] %v568
          %v570 = vld [vmem:[%s516 + $0x64] sm:%s509]
          %571 = vst [vmem:[%s517 + $0x68] sm:%s509] %v570
          %v572 = vld [vmem:[%s516 + $0x74] sm:%s509]
          %573 = vst [vmem:[%s517 + $0x6c] sm:%s509] %v572
          %v574 = vld [vmem:[%s516 + $0x68] sm:%s509]
          %575 = vst [vmem:[%s517 + $0x70] sm:%s509] %v574
          %v576 = vld [vmem:[%s516 + $0x78] sm:%s509]
          %577 = vst [vmem:[%s517 + $0x74] sm:%s509] %v576
          %v578 = vld [vmem:[%s516 + $0x6c] sm:%s509]
          %579 = vst [vmem:[%s517 + $0x78] sm:%s509] %v578
          %v580 = vld [vmem:[%s516 + $0x7c] sm:%s509]
          %581 = vst [vmem:[%s517 + $0x7c] sm:%s509] %v580
          %v582 = vld [vmem:[%s516 + $0x80] sm:%s509]
          %583 = vst [vmem:[%s517 + $0x80] sm:%s509] %v582
          %v584 = vld [vmem:[%s516 + $0x90] sm:%s509]
          %585 = vst [vmem:[%s517 + $0x84] sm:%s509] %v584
          %v586 = vld [vmem:[%s516 + $0x84] sm:%s509]
          %587 = vst [vmem:[%s517 + $0x88] sm:%s509] %v586
          %v588 = vld [vmem:[%s516 + $0x94] sm:%s509]
          %589 = vst [vmem:[%s517 + $0x8c] sm:%s509] %v588
          %v590 = vld [vmem:[%s516 + $0x88] sm:%s509]
          %591 = vst [vmem:[%s517 + $0x90] sm:%s509] %v590
          %v592 = vld [vmem:[%s516 + $0x98] sm:%s509]
          %593 = vst [vmem:[%s517 + $0x94] sm:%s509] %v592
          %v594 = vld [vmem:[%s516 + $0x8c] sm:%s509]
          %595 = vst [vmem:[%s517 + $0x98] sm:%s509] %v594
          %v596 = vld [vmem:[%s516 + $0x9c] sm:%s509]
          %597 = vst [vmem:[%s517 + $0x9c] sm:%s509] %v596
          %v598 = vld [vmem:[%s516 + $0xa0] sm:%s509]
          %599 = vst [vmem:[%s517 + $0xa0] sm:%s509] %v598
          %v600 = vld [vmem:[%s516 + $0xb0] sm:%s509]
          %601 = vst [vmem:[%s517 + $0xa4] sm:%s509] %v600
          %v602 = vld [vmem:[%s516 + $0xa4] sm:%s509]
          %603 = vst [vmem:[%s517 + $0xa8] sm:%s509] %v602
          %v604 = vld [vmem:[%s516 + $0xb4] sm:%s509]
          %605 = vst [vmem:[%s517 + $0xac] sm:%s509] %v604
          %v606 = vld [vmem:[%s516 + $0xa8] sm:%s509]
          %607 = vst [vmem:[%s517 + $0xb0] sm:%s509] %v606
          %v608 = vld [vmem:[%s516 + $0xb8] sm:%s509]
          %609 = vst [vmem:[%s517 + $0xb4] sm:%s509] %v608
          %v610 = vld [vmem:[%s516 + $0xac] sm:%s509]
          %611 = vst [vmem:[%s517 + $0xb8] sm:%s509] %v610
          %v612 = vld [vmem:[%s516 + $0xbc] sm:%s509]
          %613 = vst [vmem:[%s517 + $0xbc] sm:%s509] %v612
          %v614 = vld [vmem:[%s516 + $0xc0] sm:%s509]
          %615 = vst [vmem:[%s517 + $0xc0] sm:%s509] %v614
          %v616 = vld [vmem:[%s516 + $0xd0] sm:%s509]
          %617 = vst [vmem:[%s517 + $0xc4] sm:%s509] %v616
          %v618 = vld [vmem:[%s516 + $0xc4] sm:%s509]
          %619 = vst [vmem:[%s517 + $0xc8] sm:%s509] %v618
          %v620 = vld [vmem:[%s516 + $0xd4] sm:%s509]
          %621 = vst [vmem:[%s517 + $0xcc] sm:%s509] %v620
          %v622 = vld [vmem:[%s516 + $0xc8] sm:%s509]
          %623 = vst [vmem:[%s517 + $0xd0] sm:%s509] %v622
          %v624 = vld [vmem:[%s516 + $0xd8] sm:%s509]
          %625 = vst [vmem:[%s517 + $0xd4] sm:%s509] %v624
          %v626 = vld [vmem:[%s516 + $0xcc] sm:%s509]
          %627 = vst [vmem:[%s517 + $0xd8] sm:%s509] %v626
          %v628 = vld [vmem:[%s516 + $0xdc] sm:%s509]
          %629 = vst [vmem:[%s517 + $0xdc] sm:%s509] %v628
          %v630 = vld [vmem:[%s516 + $0xe0] sm:%s509]
          %631 = vst [vmem:[%s517 + $0xe0] sm:%s509] %v630
          %v632 = vld [vmem:[%s516 + $0xf0] sm:%s509]
          %633 = vst [vmem:[%s517 + $0xe4] sm:%s509] %v632
          %v634 = vld [vmem:[%s516 + $0xe4] sm:%s509]
          %635 = vst [vmem:[%s517 + $0xe8] sm:%s509] %v634
          %v636 = vld [vmem:[%s516 + $0xf4] sm:%s509]
          %637 = vst [vmem:[%s517 + $0xec] sm:%s509] %v636
          %v638 = vld [vmem:[%s516 + $0xe8] sm:%s509]
          %639 = vst [vmem:[%s517 + $0xf0] sm:%s509] %v638
          %v640 = vld [vmem:[%s516 + $0xf8] sm:%s509]
          %641 = vst [vmem:[%s517 + $0xf4] sm:%s509] %v640
          %v642 = vld [vmem:[%s516 + $0xec] sm:%s509]
          %643 = vst [vmem:[%s517 + $0xf8] sm:%s509] %v642
          %v644 = vld [vmem:[%s516 + $0xfc] sm:%s509]
          %645 = vst [vmem:[%s517 + $0xfc] sm:%s509] %v644
          %v646 = vld [vmem:[%s516 + $0x100] sm:%s509]
          %647 = vst [vmem:[%s517 + $0x100] sm:%s509] %v646
          %v648 = vld [vmem:[%s516 + $0x110] sm:%s509]
          %649 = vst [vmem:[%s517 + $0x104] sm:%s509] %v648
          %v650 = vld [vmem:[%s516 + $0x104] sm:%s509]
          %651 = vst [vmem:[%s517 + $0x108] sm:%s509] %v650
          %v652 = vld [vmem:[%s516 + $0x114] sm:%s509]
          %653 = vst [vmem:[%s517 + $0x10c] sm:%s509] %v652
          %v654 = vld [vmem:[%s516 + $0x108] sm:%s509]
          %655 = vst [vmem:[%s517 + $0x110] sm:%s509] %v654
          %v656 = vld [vmem:[%s516 + $0x118] sm:%s509]
          %657 = vst [vmem:[%s517 + $0x114] sm:%s509] %v656
          %v658 = vld [vmem:[%s516 + $0x10c] sm:%s509]
          %659 = vst [vmem:[%s517 + $0x118] sm:%s509] %v658
          %v660 = vld [vmem:[%s516 + $0x11c] sm:%s509]
          %661 = vst [vmem:[%s517 + $0x11c] sm:%s509] %v660
          %v662 = vld [vmem:[%s516 + $0x120] sm:%s509]
          %663 = vst [vmem:[%s517 + $0x120] sm:%s509] %v662
          %v664 = vld [vmem:[%s516 + $0x130] sm:%s509]
          %665 = vst [vmem:[%s517 + $0x124] sm:%s509] %v664
          %v666 = vld [vmem:[%s516 + $0x124] sm:%s509]
          %667 = vst [vmem:[%s517 + $0x128] sm:%s509] %v666
          %v668 = vld [vmem:[%s516 + $0x134] sm:%s509]
          %669 = vst [vmem:[%s517 + $0x12c] sm:%s509] %v668
          %v670 = vld [vmem:[%s516 + $0x128] sm:%s509]
          %671 = vst [vmem:[%s517 + $0x130] sm:%s509] %v670
          %v672 = vld [vmem:[%s516 + $0x138] sm:%s509]
          %673 = vst [vmem:[%s517 + $0x134] sm:%s509] %v672
          %v674 = vld [vmem:[%s516 + $0x12c] sm:%s509]
          %675 = vst [vmem:[%s517 + $0x138] sm:%s509] %v674
          %v676 = vld [vmem:[%s516 + $0x13c] sm:%s509]
          %677 = vst [vmem:[%s517 + $0x13c] sm:%s509] %v676
          %v678 = vld [vmem:[%s516 + $0x140] sm:%s509]
          %679 = vst [vmem:[%s517 + $0x140] sm:%s509] %v678
          %v680 = vld [vmem:[%s516 + $0x150] sm:%s509]
          %681 = vst [vmem:[%s517 + $0x144] sm:%s509] %v680
          %v682 = vld [vmem:[%s516 + $0x144] sm:%s509]
          %683 = vst [vmem:[%s517 + $0x148] sm:%s509] %v682
          %v684 = vld [vmem:[%s516 + $0x154] sm:%s509]
          %685 = vst [vmem:[%s517 + $0x14c] sm:%s509] %v684
          %v686 = vld [vmem:[%s516 + $0x148] sm:%s509]
          %687 = vst [vmem:[%s517 + $0x150] sm:%s509] %v686
          %v688 = vld [vmem:[%s516 + $0x158] sm:%s509]
          %689 = vst [vmem:[%s517 + $0x154] sm:%s509] %v688
          %v690 = vld [vmem:[%s516 + $0x14c] sm:%s509]
          %691 = vst [vmem:[%s517 + $0x158] sm:%s509] %v690
          %v692 = vld [vmem:[%s516 + $0x15c] sm:%s509]
          %693 = vst [vmem:[%s517 + $0x15c] sm:%s509] %v692
          %v694 = vld [vmem:[%s516 + $0x160] sm:%s509]
          %695 = vst [vmem:[%s517 + $0x160] sm:%s509] %v694
          %v696 = vld [vmem:[%s516 + $0x170] sm:%s509]
          %697 = vst [vmem:[%s517 + $0x164] sm:%s509] %v696
          %v698 = vld [vmem:[%s516 + $0x164] sm:%s509]
          %699 = vst [vmem:[%s517 + $0x168] sm:%s509] %v698
          %v700 = vld [vmem:[%s516 + $0x174] sm:%s509]
          %701 = vst [vmem:[%s517 + $0x16c] sm:%s509] %v700
          %v702 = vld [vmem:[%s516 + $0x168] sm:%s509]
          %703 = vst [vmem:[%s517 + $0x170] sm:%s509] %v702
          %v704 = vld [vmem:[%s516 + $0x178] sm:%s509]
          %705 = vst [vmem:[%s517 + $0x174] sm:%s509] %v704
          %v706 = vld [vmem:[%s516 + $0x16c] sm:%s509]
          %707 = vst [vmem:[%s517 + $0x178] sm:%s509] %v706
          %v708 = vld [vmem:[%s516 + $0x17c] sm:%s509]
          %709 = vst [vmem:[%s517 + $0x17c] sm:%s509] %v708
          %v710 = vld [vmem:[%s516 + $0x180] sm:%s509]
          %711 = vst [vmem:[%s517 + $0x180] sm:%s509] %v710
          %v712 = vld [vmem:[%s516 + $0x190] sm:%s509]
          %713 = vst [vmem:[%s517 + $0x184] sm:%s509] %v712
          %v714 = vld [vmem:[%s516 + $0x184] sm:%s509]
          %715 = vst [vmem:[%s517 + $0x188] sm:%s509] %v714
          %v716 = vld [vmem:[%s516 + $0x194] sm:%s509]
          %717 = vst [vmem:[%s517 + $0x18c] sm:%s509] %v716
          %v718 = vld [vmem:[%s516 + $0x188] sm:%s509]
          %719 = vst [vmem:[%s517 + $0x190] sm:%s509] %v718
          %v720 = vld [vmem:[%s516 + $0x198] sm:%s509]
          %721 = vst [vmem:[%s517 + $0x194] sm:%s509] %v720
          %v722 = vld [vmem:[%s516 + $0x18c] sm:%s509]
          %723 = vst [vmem:[%s517 + $0x198] sm:%s509] %v722
          %v724 = vld [vmem:[%s516 + $0x19c] sm:%s509]
          %725 = vst [vmem:[%s517 + $0x19c] sm:%s509] %v724
          %v726 = vld [vmem:[%s516 + $0x1a0] sm:%s509]
          %727 = vst [vmem:[%s517 + $0x1a0] sm:%s509] %v726
          %v728 = vld [vmem:[%s516 + $0x1b0] sm:%s509]
          %729 = vst [vmem:[%s517 + $0x1a4] sm:%s509] %v728
          %v730 = vld [vmem:[%s516 + $0x1a4] sm:%s509]
          %731 = vst [vmem:[%s517 + $0x1a8] sm:%s509] %v730
          %v732 = vld [vmem:[%s516 + $0x1b4] sm:%s509]
          %733 = vst [vmem:[%s517 + $0x1ac] sm:%s509] %v732
          %v734 = vld [vmem:[%s516 + $0x1a8] sm:%s509]
          %735 = vst [vmem:[%s517 + $0x1b0] sm:%s509] %v734
          %v736 = vld [vmem:[%s516 + $0x1b8] sm:%s509]
          %737 = vst [vmem:[%s517 + $0x1b4] sm:%s509] %v736
          %v738 = vld [vmem:[%s516 + $0x1ac] sm:%s509]
          %739 = vst [vmem:[%s517 + $0x1b8] sm:%s509] %v738
          %v740 = vld [vmem:[%s516 + $0x1bc] sm:%s509]
          %741 = vst [vmem:[%s517 + $0x1bc] sm:%s509] %v740
          %v742 = vld [vmem:[%s516 + $0x1c0] sm:%s509]
          %743 = vst [vmem:[%s517 + $0x1c0] sm:%s509] %v742
          %v744 = vld [vmem:[%s516 + $0x1d0] sm:%s509]
          %745 = vst [vmem:[%s517 + $0x1c4] sm:%s509] %v744
          %v746 = vld [vmem:[%s516 + $0x1c4] sm:%s509]
          %747 = vst [vmem:[%s517 + $0x1c8] sm:%s509] %v746
          %v748 = vld [vmem:[%s516 + $0x1d4] sm:%s509]
          %749 = vst [vmem:[%s517 + $0x1cc] sm:%s509] %v748
          %v750 = vld [vmem:[%s516 + $0x1c8] sm:%s509]
          %751 = vst [vmem:[%s517 + $0x1d0] sm:%s509] %v750
          %v752 = vld [vmem:[%s516 + $0x1d8] sm:%s509]
          %753 = vst [vmem:[%s517 + $0x1d4] sm:%s509] %v752
          %v754 = vld [vmem:[%s516 + $0x1cc] sm:%s509]
          %755 = vst [vmem:[%s517 + $0x1d8] sm:%s509] %v754
          %v756 = vld [vmem:[%s516 + $0x1dc] sm:%s509]
          %757 = vst [vmem:[%s517 + $0x1dc] sm:%s509] %v756
          %v758 = vld [vmem:[%s516 + $0x1e0] sm:%s509]
          %759 = vst [vmem:[%s517 + $0x1e0] sm:%s509] %v758
          %v760 = vld [vmem:[%s516 + $0x1f0] sm:%s509]
          %761 = vst [vmem:[%s517 + $0x1e4] sm:%s509] %v760
          %v762 = vld [vmem:[%s516 + $0x1e4] sm:%s509]
          %763 = vst [vmem:[%s517 + $0x1e8] sm:%s509] %v762
          %v764 = vld [vmem:[%s516 + $0x1f4] sm:%s509]
          %765 = vst [vmem:[%s517 + $0x1ec] sm:%s509] %v764
          %v766 = vld [vmem:[%s516 + $0x1e8] sm:%s509]
          %767 = vst [vmem:[%s517 + $0x1f0] sm:%s509] %v766
          %v768 = vld [vmem:[%s516 + $0x1f8] sm:%s509]
          %769 = vst [vmem:[%s517 + $0x1f4] sm:%s509] %v768
          %v770 = vld [vmem:[%s516 + $0x1ec] sm:%s509]
          %771 = vst [vmem:[%s517 + $0x1f8] sm:%s509] %v770
          %v772 = vld [vmem:[%s516 + $0x1fc] sm:%s509]
          %773 = vst [vmem:[%s517 + $0x1fc] sm:%s509] %v772
        $region109: #{expert_forward.1} parent=96 // loop_footer
          %s515 = sadd.s32 1, %s511
        $region110: #{expert_forward.1} parent=96 // loop_footer_branch
          %510 = sbr.rel target = $region106
        $region111: #{expert_forward.1} parent=96 // loop_exit
          _
      $region97: #{expert_forward.1} parent=81 // pred_fallthru
        _
    $region82: #{expert_forward.1} parent=1 // pred_fallthru
      _
    // Predicated region
    $region83: #{expert_forward.1} parent=1 // pred_check
      %p223 = pneg %p219
    $region84: #{expert_forward.1} parent=1 // pred_check_branch
      %225 = sbr.rel (%p223) target = $region86
    $region85: #{expert_forward.1} parent=1 // pred_region
      %s226 = sshllo.u32 0, 4
      loop: start=0, step=1, limit=1
      $region87: #{expert_forward.1} parent=85 // loop_pre_header
        _
      $region88: #{expert_forward.1} parent=85 // loop_header
        %s228 = sphi 0, %s232
        %p229 = scmp.ge.s32.totalorder %s228, 1
        %s233 = sphi %s6, %s6
        %s234 = sphi [#allocation3], [#allocation3]
      $region89: #{expert_forward.1} parent=85 // loop_header_branch
        %231 = sbr.rel (%p229) target = $region93
      $region90: #{expert_forward.1} parent=85 // loop_body
        %v235 = vld [vmem:[%s233] sm:%s226]
        %236 = vst [vmem:[%s234] sm:%s226] %v235
        %v237 = vld [vmem:[%s233 + $0x10] sm:%s226]
        %238 = vst [vmem:[%s234 + $0x4] sm:%s226] %v237
        %v239 = vld [vmem:[%s233 + $0x4] sm:%s226]
        %240 = vst [vmem:[%s234 + $0x8] sm:%s226] %v239
        %v241 = vld [vmem:[%s233 + $0x14] sm:%s226]
        %242 = vst [vmem:[%s234 + $0xc] sm:%s226] %v241
        %v243 = vld [vmem:[%s233 + $0x8] sm:%s226]
        %244 = vst [vmem:[%s234 + $0x10] sm:%s226] %v243
        %v245 = vld [vmem:[%s233 + $0x18] sm:%s226]
        %246 = vst [vmem:[%s234 + $0x14] sm:%s226] %v245
        %v247 = vld [vmem:[%s233 + $0xc] sm:%s226]
        %248 = vst [vmem:[%s234 + $0x18] sm:%s226] %v247
        %v249 = vld [vmem:[%s233 + $0x1c] sm:%s226]
        %250 = vst [vmem:[%s234 + $0x1c] sm:%s226] %v249
        %v251 = vld [vmem:[%s233 + $0x20] sm:%s226]
        %252 = vst [vmem:[%s234 + $0x20] sm:%s226] %v251
        %v253 = vld [vmem:[%s233 + $0x30] sm:%s226]
        %254 = vst [vmem:[%s234 + $0x24] sm:%s226] %v253
        %v255 = vld [vmem:[%s233 + $0x24] sm:%s226]
        %256 = vst [vmem:[%s234 + $0x28] sm:%s226] %v255
        %v257 = vld [vmem:[%s233 + $0x34] sm:%s226]
        %258 = vst [vmem:[%s234 + $0x2c] sm:%s226] %v257
        %v259 = vld [vmem:[%s233 + $0x28] sm:%s226]
        %260 = vst [vmem:[%s234 + $0x30] sm:%s226] %v259
        %v261 = vld [vmem:[%s233 + $0x38] sm:%s226]
        %262 = vst [vmem:[%s234 + $0x34] sm:%s226] %v261
        %v263 = vld [vmem:[%s233 + $0x2c] sm:%s226]
        %264 = vst [vmem:[%s234 + $0x38] sm:%s226] %v263
        %v265 = vld [vmem:[%s233 + $0x3c] sm:%s226]
        %266 = vst [vmem:[%s234 + $0x3c] sm:%s226] %v265
        %v267 = vld [vmem:[%s233 + $0x40] sm:%s226]
        %268 = vst [vmem:[%s234 + $0x40] sm:%s226] %v267
        %v269 = vld [vmem:[%s233 + $0x50] sm:%s226]
        %270 = vst [vmem:[%s234 + $0x44] sm:%s226] %v269
        %v271 = vld [vmem:[%s233 + $0x44] sm:%s226]
        %272 = vst [vmem:[%s234 + $0x48] sm:%s226] %v271
        %v273 = vld [vmem:[%s233 + $0x54] sm:%s226]
        %274 = vst [vmem:[%s234 + $0x4c] sm:%s226] %v273
        %v275 = vld [vmem:[%s233 + $0x48] sm:%s226]
        %276 = vst [vmem:[%s234 + $0x50] sm:%s226] %v275
        %v277 = vld [vmem:[%s233 + $0x58] sm:%s226]
        %278 = vst [vmem:[%s234 + $0x54] sm:%s226] %v277
        %v279 = vld [vmem:[%s233 + $0x4c] sm:%s226]
        %280 = vst [vmem:[%s234 + $0x58] sm:%s226] %v279
        %v281 = vld [vmem:[%s233 + $0x5c] sm:%s226]
        %282 = vst [vmem:[%s234 + $0x5c] sm:%s226] %v281
        %v283 = vld [vmem:[%s233 + $0x60] sm:%s226]
        %284 = vst [vmem:[%s234 + $0x60] sm:%s226] %v283
        %v285 = vld [vmem:[%s233 + $0x70] sm:%s226]
        %286 = vst [vmem:[%s234 + $0x64] sm:%s226] %v285
        %v287 = vld [vmem:[%s233 + $0x64] sm:%s226]
        %288 = vst [vmem:[%s234 + $0x68] sm:%s226] %v287
        %v289 = vld [vmem:[%s233 + $0x74] sm:%s226]
        %290 = vst [vmem:[%s234 + $0x6c] sm:%s226] %v289
        %v291 = vld [vmem:[%s233 + $0x68] sm:%s226]
        %292 = vst [vmem:[%s234 + $0x70] sm:%s226] %v291
        %v293 = vld [vmem:[%s233 + $0x78] sm:%s226]
        %294 = vst [vmem:[%s234 + $0x74] sm:%s226] %v293
        %v295 = vld [vmem:[%s233 + $0x6c] sm:%s226]
        %296 = vst [vmem:[%s234 + $0x78] sm:%s226] %v295
        %v297 = vld [vmem:[%s233 + $0x7c] sm:%s226]
        %298 = vst [vmem:[%s234 + $0x7c] sm:%s226] %v297
        %v299 = vld [vmem:[%s233 + $0x80] sm:%s226]
        %300 = vst [vmem:[%s234 + $0x80] sm:%s226] %v299
        %v301 = vld [vmem:[%s233 + $0x90] sm:%s226]
        %302 = vst [vmem:[%s234 + $0x84] sm:%s226] %v301
        %v303 = vld [vmem:[%s233 + $0x84] sm:%s226]
        %304 = vst [vmem:[%s234 + $0x88] sm:%s226] %v303
        %v305 = vld [vmem:[%s233 + $0x94] sm:%s226]
        %306 = vst [vmem:[%s234 + $0x8c] sm:%s226] %v305
        %v307 = vld [vmem:[%s233 + $0x88] sm:%s226]
        %308 = vst [vmem:[%s234 + $0x90] sm:%s226] %v307
        %v309 = vld [vmem:[%s233 + $0x98] sm:%s226]
        %310 = vst [vmem:[%s234 + $0x94] sm:%s226] %v309
        %v311 = vld [vmem:[%s233 + $0x8c] sm:%s226]
        %312 = vst [vmem:[%s234 + $0x98] sm:%s226] %v311
        %v313 = vld [vmem:[%s233 + $0x9c] sm:%s226]
        %314 = vst [vmem:[%s234 + $0x9c] sm:%s226] %v313
        %v315 = vld [vmem:[%s233 + $0xa0] sm:%s226]
        %316 = vst [vmem:[%s234 + $0xa0] sm:%s226] %v315
        %v317 = vld [vmem:[%s233 + $0xb0] sm:%s226]
        %318 = vst [vmem:[%s234 + $0xa4] sm:%s226] %v317
        %v319 = vld [vmem:[%s233 + $0xa4] sm:%s226]
        %320 = vst [vmem:[%s234 + $0xa8] sm:%s226] %v319
        %v321 = vld [vmem:[%s233 + $0xb4] sm:%s226]
        %322 = vst [vmem:[%s234 + $0xac] sm:%s226] %v321
        %v323 = vld [vmem:[%s233 + $0xa8] sm:%s226]
        %324 = vst [vmem:[%s234 + $0xb0] sm:%s226] %v323
        %v325 = vld [vmem:[%s233 + $0xb8] sm:%s226]
        %326 = vst [vmem:[%s234 + $0xb4] sm:%s226] %v325
        %v327 = vld [vmem:[%s233 + $0xac] sm:%s226]
        %328 = vst [vmem:[%s234 + $0xb8] sm:%s226] %v327
        %v329 = vld [vmem:[%s233 + $0xbc] sm:%s226]
        %330 = vst [vmem:[%s234 + $0xbc] sm:%s226] %v329
        %v331 = vld [vmem:[%s233 + $0xc0] sm:%s226]
        %332 = vst [vmem:[%s234 + $0xc0] sm:%s226] %v331
        %v333 = vld [vmem:[%s233 + $0xd0] sm:%s226]
        %334 = vst [vmem:[%s234 + $0xc4] sm:%s226] %v333
        %v335 = vld [vmem:[%s233 + $0xc4] sm:%s226]
        %336 = vst [vmem:[%s234 + $0xc8] sm:%s226] %v335
        %v337 = vld [vmem:[%s233 + $0xd4] sm:%s226]
        %338 = vst [vmem:[%s234 + $0xcc] sm:%s226] %v337
        %v339 = vld [vmem:[%s233 + $0xc8] sm:%s226]
        %340 = vst [vmem:[%s234 + $0xd0] sm:%s226] %v339
        %v341 = vld [vmem:[%s233 + $0xd8] sm:%s226]
        %342 = vst [vmem:[%s234 + $0xd4] sm:%s226] %v341
        %v343 = vld [vmem:[%s233 + $0xcc] sm:%s226]
        %344 = vst [vmem:[%s234 + $0xd8] sm:%s226] %v343
        %v345 = vld [vmem:[%s233 + $0xdc] sm:%s226]
        %346 = vst [vmem:[%s234 + $0xdc] sm:%s226] %v345
        %v347 = vld [vmem:[%s233 + $0xe0] sm:%s226]
        %348 = vst [vmem:[%s234 + $0xe0] sm:%s226] %v347
        %v349 = vld [vmem:[%s233 + $0xf0] sm:%s226]
        %350 = vst [vmem:[%s234 + $0xe4] sm:%s226] %v349
        %v351 = vld [vmem:[%s233 + $0xe4] sm:%s226]
        %352 = vst [vmem:[%s234 + $0xe8] sm:%s226] %v351
        %v353 = vld [vmem:[%s233 + $0xf4] sm:%s226]
        %354 = vst [vmem:[%s234 + $0xec] sm:%s226] %v353
        %v355 = vld [vmem:[%s233 + $0xe8] sm:%s226]
        %356 = vst [vmem:[%s234 + $0xf0] sm:%s226] %v355
        %v357 = vld [vmem:[%s233 + $0xf8] sm:%s226]
        %358 = vst [vmem:[%s234 + $0xf4] sm:%s226] %v357
        %v359 = vld [vmem:[%s233 + $0xec] sm:%s226]
        %360 = vst [vmem:[%s234 + $0xf8] sm:%s226] %v359
        %v361 = vld [vmem:[%s233 + $0xfc] sm:%s226]
        %362 = vst [vmem:[%s234 + $0xfc] sm:%s226] %v361
        %v363 = vld [vmem:[%s233 + $0x100] sm:%s226]
        %364 = vst [vmem:[%s234 + $0x100] sm:%s226] %v363
        %v365 = vld [vmem:[%s233 + $0x110] sm:%s226]
        %366 = vst [vmem:[%s234 + $0x104] sm:%s226] %v365
        %v367 = vld [vmem:[%s233 + $0x104] sm:%s226]
        %368 = vst [vmem:[%s234 + $0x108] sm:%s226] %v367
        %v369 = vld [vmem:[%s233 + $0x114] sm:%s226]
        %370 = vst [vmem:[%s234 + $0x10c] sm:%s226] %v369
        %v371 = vld [vmem:[%s233 + $0x108] sm:%s226]
        %372 = vst [vmem:[%s234 + $0x110] sm:%s226] %v371
        %v373 = vld [vmem:[%s233 + $0x118] sm:%s226]
        %374 = vst [vmem:[%s234 + $0x114] sm:%s226] %v373
        %v375 = vld [vmem:[%s233 + $0x10c] sm:%s226]
        %376 = vst [vmem:[%s234 + $0x118] sm:%s226] %v375
        %v377 = vld [vmem:[%s233 + $0x11c] sm:%s226]
        %378 = vst [vmem:[%s234 + $0x11c] sm:%s226] %v377
        %v379 = vld [vmem:[%s233 + $0x120] sm:%s226]
        %380 = vst [vmem:[%s234 + $0x120] sm:%s226] %v379
        %v381 = vld [vmem:[%s233 + $0x130] sm:%s226]
        %382 = vst [vmem:[%s234 + $0x124] sm:%s226] %v381
        %v383 = vld [vmem:[%s233 + $0x124] sm:%s226]
        %384 = vst [vmem:[%s234 + $0x128] sm:%s226] %v383
        %v385 = vld [vmem:[%s233 + $0x134] sm:%s226]
        %386 = vst [vmem:[%s234 + $0x12c] sm:%s226] %v385
        %v387 = vld [vmem:[%s233 + $0x128] sm:%s226]
        %388 = vst [vmem:[%s234 + $0x130] sm:%s226] %v387
        %v389 = vld [vmem:[%s233 + $0x138] sm:%s226]
        %390 = vst [vmem:[%s234 + $0x134] sm:%s226] %v389
        %v391 = vld [vmem:[%s233 + $0x12c] sm:%s226]
        %392 = vst [vmem:[%s234 + $0x138] sm:%s226] %v391
        %v393 = vld [vmem:[%s233 + $0x13c] sm:%s226]
        %394 = vst [vmem:[%s234 + $0x13c] sm:%s226] %v393
        %v395 = vld [vmem:[%s233 + $0x140] sm:%s226]
        %396 = vst [vmem:[%s234 + $0x140] sm:%s226] %v395
        %v397 = vld [vmem:[%s233 + $0x150] sm:%s226]
        %398 = vst [vmem:[%s234 + $0x144] sm:%s226] %v397
        %v399 = vld [vmem:[%s233 + $0x144] sm:%s226]
        %400 = vst [vmem:[%s234 + $0x148] sm:%s226] %v399
        %v401 = vld [vmem:[%s233 + $0x154] sm:%s226]
        %402 = vst [vmem:[%s234 + $0x14c] sm:%s226] %v401
        %v403 = vld [vmem:[%s233 + $0x148] sm:%s226]
        %404 = vst [vmem:[%s234 + $0x150] sm:%s226] %v403
        %v405 = vld [vmem:[%s233 + $0x158] sm:%s226]
        %406 = vst [vmem:[%s234 + $0x154] sm:%s226] %v405
        %v407 = vld [vmem:[%s233 + $0x14c] sm:%s226]
        %408 = vst [vmem:[%s234 + $0x158] sm:%s226] %v407
        %v409 = vld [vmem:[%s233 + $0x15c] sm:%s226]
        %410 = vst [vmem:[%s234 + $0x15c] sm:%s226] %v409
        %v411 = vld [vmem:[%s233 + $0x160] sm:%s226]
        %412 = vst [vmem:[%s234 + $0x160] sm:%s226] %v411
        %v413 = vld [vmem:[%s233 + $0x170] sm:%s226]
        %414 = vst [vmem:[%s234 + $0x164] sm:%s226] %v413
        %v415 = vld [vmem:[%s233 + $0x164] sm:%s226]
        %416 = vst [vmem:[%s234 + $0x168] sm:%s226] %v415
        %v417 = vld [vmem:[%s233 + $0x174] sm:%s226]
        %418 = vst [vmem:[%s234 + $0x16c] sm:%s226] %v417
        %v419 = vld [vmem:[%s233 + $0x168] sm:%s226]
        %420 = vst [vmem:[%s234 + $0x170] sm:%s226] %v419
        %v421 = vld [vmem:[%s233 + $0x178] sm:%s226]
        %422 = vst [vmem:[%s234 + $0x174] sm:%s226] %v421
        %v423 = vld [vmem:[%s233 + $0x16c] sm:%s226]
        %424 = vst [vmem:[%s234 + $0x178] sm:%s226] %v423
        %v425 = vld [vmem:[%s233 + $0x17c] sm:%s226]
        %426 = vst [vmem:[%s234 + $0x17c] sm:%s226] %v425
        %v427 = vld [vmem:[%s233 + $0x180] sm:%s226]
        %428 = vst [vmem:[%s234 + $0x180] sm:%s226] %v427
        %v429 = vld [vmem:[%s233 + $0x190] sm:%s226]
        %430 = vst [vmem:[%s234 + $0x184] sm:%s226] %v429
        %v431 = vld [vmem:[%s233 + $0x184] sm:%s226]
        %432 = vst [vmem:[%s234 + $0x188] sm:%s226] %v431
        %v433 = vld [vmem:[%s233 + $0x194] sm:%s226]
        %434 = vst [vmem:[%s234 + $0x18c] sm:%s226] %v433
        %v435 = vld [vmem:[%s233 + $0x188] sm:%s226]
        %436 = vst [vmem:[%s234 + $0x190] sm:%s226] %v435
        %v437 = vld [vmem:[%s233 + $0x198] sm:%s226]
        %438 = vst [vmem:[%s234 + $0x194] sm:%s226] %v437
        %v439 = vld [vmem:[%s233 + $0x18c] sm:%s226]
        %440 = vst [vmem:[%s234 + $0x198] sm:%s226] %v439
        %v441 = vld [vmem:[%s233 + $0x19c] sm:%s226]
        %442 = vst [vmem:[%s234 + $0x19c] sm:%s226] %v441
        %v443 = vld [vmem:[%s233 + $0x1a0] sm:%s226]
        %444 = vst [vmem:[%s234 + $0x1a0] sm:%s226] %v443
        %v445 = vld [vmem:[%s233 + $0x1b0] sm:%s226]
        %446 = vst [vmem:[%s234 + $0x1a4] sm:%s226] %v445
        %v447 = vld [vmem:[%s233 + $0x1a4] sm:%s226]
        %448 = vst [vmem:[%s234 + $0x1a8] sm:%s226] %v447
        %v449 = vld [vmem:[%s233 + $0x1b4] sm:%s226]
        %450 = vst [vmem:[%s234 + $0x1ac] sm:%s226] %v449
        %v451 = vld [vmem:[%s233 + $0x1a8] sm:%s226]
        %452 = vst [vmem:[%s234 + $0x1b0] sm:%s226] %v451
        %v453 = vld [vmem:[%s233 + $0x1b8] sm:%s226]
        %454 = vst [vmem:[%s234 + $0x1b4] sm:%s226] %v453
        %v455 = vld [vmem:[%s233 + $0x1ac] sm:%s226]
        %456 = vst [vmem:[%s234 + $0x1b8] sm:%s226] %v455
        %v457 = vld [vmem:[%s233 + $0x1bc] sm:%s226]
        %458 = vst [vmem:[%s234 + $0x1bc] sm:%s226] %v457
        %v459 = vld [vmem:[%s233 + $0x1c0] sm:%s226]
        %460 = vst [vmem:[%s234 + $0x1c0] sm:%s226] %v459
        %v461 = vld [vmem:[%s233 + $0x1d0] sm:%s226]
        %462 = vst [vmem:[%s234 + $0x1c4] sm:%s226] %v461
        %v463 = vld [vmem:[%s233 + $0x1c4] sm:%s226]
        %464 = vst [vmem:[%s234 + $0x1c8] sm:%s226] %v463
        %v465 = vld [vmem:[%s233 + $0x1d4] sm:%s226]
        %466 = vst [vmem:[%s234 + $0x1cc] sm:%s226] %v465
        %v467 = vld [vmem:[%s233 + $0x1c8] sm:%s226]
        %468 = vst [vmem:[%s234 + $0x1d0] sm:%s226] %v467
        %v469 = vld [vmem:[%s233 + $0x1d8] sm:%s226]
        %470 = vst [vmem:[%s234 + $0x1d4] sm:%s226] %v469
        %v471 = vld [vmem:[%s233 + $0x1cc] sm:%s226]
        %472 = vst [vmem:[%s234 + $0x1d8] sm:%s226] %v471
        %v473 = vld [vmem:[%s233 + $0x1dc] sm:%s226]
        %474 = vst [vmem:[%s234 + $0x1dc] sm:%s226] %v473
        %v475 = vld [vmem:[%s233 + $0x1e0] sm:%s226]
        %476 = vst [vmem:[%s234 + $0x1e0] sm:%s226] %v475
        %v477 = vld [vmem:[%s233 + $0x1f0] sm:%s226]
        %478 = vst [vmem:[%s234 + $0x1e4] sm:%s226] %v477
        %v479 = vld [vmem:[%s233 + $0x1e4] sm:%s226]
        %480 = vst [vmem:[%s234 + $0x1e8] sm:%s226] %v479
        %v481 = vld [vmem:[%s233 + $0x1f4] sm:%s226]
        %482 = vst [vmem:[%s234 + $0x1ec] sm:%s226] %v481
        %v483 = vld [vmem:[%s233 + $0x1e8] sm:%s226]
        %484 = vst [vmem:[%s234 + $0x1f0] sm:%s226] %v483
        %v485 = vld [vmem:[%s233 + $0x1f8] sm:%s226]
        %486 = vst [vmem:[%s234 + $0x1f4] sm:%s226] %v485
        %v487 = vld [vmem:[%s233 + $0x1ec] sm:%s226]
        %488 = vst [vmem:[%s234 + $0x1f8] sm:%s226] %v487
        %v489 = vld [vmem:[%s233 + $0x1fc] sm:%s226]
        %490 = vst [vmem:[%s234 + $0x1fc] sm:%s226] %v489
      $region91: #{expert_forward.1} parent=85 // loop_footer
        %s232 = sadd.s32 1, %s228
      $region92: #{expert_forward.1} parent=85 // loop_footer_branch
        %227 = sbr.rel target = $region88
      $region93: #{expert_forward.1} parent=85 // loop_exit
        _
    $region86: #{expert_forward.1} parent=1 // pred_fallthru
      _
    // Predicated region
    $region112: #{expert_forward.1} parent=1 // pred_check
      _
    $region113: #{expert_forward.1} parent=1 // pred_check_branch
      %776 = sbr.rel (0) target = $region115
    $region114: #{expert_forward.1} parent=1 // pred_region
      %777 = vsyncadd %s217, 8192
    $region115: #{expert_forward.1} parent=1 // pred_fallthru
      _
    %s778 = scalar_lea.sflag [#allocation6], 2
    %s780 = sshll.u32 1, 14
    %s781 = sxor.u32 4294967295, %s780
    %s783 = sld [smem:[#allocation0]]
    %s784 = sadd.s32 2, %s783
    %s786 = sshll.u32 7, 26
    %s787 = sxor.u32 4294967295, %s786
    %s788 = sand.u32 0, %s787
    %s789 = sshll.u32 %s784, 26
    %s790 = sor.u32 %s788, %s789
    %s791 = sshll.u32 [#allocation4], 4
    %s792 = int_to_ptr.vmem [resolvable:$true] %s791
    %795 = sst [smem:[#allocation12]] 1024
    %s796 = scalar_lea.smem [#allocation12], 1
    %797 = sst [smem:[%s796]] 512
    %s798 = scalar_lea.smem [#allocation12], 2
    %799 = sst [smem:[%s798]] 4
    %s800 = scalar_lea.smem [#allocation12], 3
    %801 = sst [smem:[%s800]] 64
    %s802 = scalar_lea.smem [#allocation12], 4
    %803 = sst [smem:[%s802]] 128
    %s804 = scalar_lea.smem [#allocation12], 5
    %805 = sst [smem:[%s804]] 2
    %s806 = scalar_lea.smem [#allocation12], 6
    %807 = sst [smem:[%s806]] 512
    %s808 = scalar_lea.smem [#allocation12], 7
    %809 = sst [smem:[%s808]] 64
    %s810 = scalar_lea.smem [#allocation12], 8
    %811 = sst [smem:[%s810]] 4
    %813 = dma.general %s9, 16384, %s792, %s778, [#allocation11], [#allocation12], %s790, 0
    %s814 = scalar_lea.hbm %s9, 256
    %s815 = scalar_lea.vmem [#allocation4], 1024
    %s816 = scalar_lea.sflag [#allocation6], 3
    %s818 = sshll.u32 1, 14
    %s819 = sxor.u32 4294967295, %s818
    %s821 = sadd.s32 2, %s783
    %s823 = sshll.u32 7, 26
    %s824 = sxor.u32 4294967295, %s823
    %s825 = sand.u32 0, %s824
    %s826 = sshll.u32 %s821, 26
    %s827 = sor.u32 %s825, %s826
    %s828 = sshll.u32 %s815, 4
    %s829 = int_to_ptr.vmem [resolvable:$true] %s828
    %832 = sst [smem:[#allocation14]] 1024
    %s833 = scalar_lea.smem [#allocation14], 1
    %834 = sst [smem:[%s833]] 512
    %s835 = scalar_lea.smem [#allocation14], 2
    %836 = sst [smem:[%s835]] 4
    %s837 = scalar_lea.smem [#allocation14], 3
    %838 = sst [smem:[%s837]] 64
    %s839 = scalar_lea.smem [#allocation14], 4
    %840 = sst [smem:[%s839]] 128
    %s841 = scalar_lea.smem [#allocation14], 5
    %842 = sst [smem:[%s841]] 2
    %s843 = scalar_lea.smem [#allocation14], 6
    %844 = sst [smem:[%s843]] 512
    %s845 = scalar_lea.smem [#allocation14], 7
    %846 = sst [smem:[%s845]] 64
    %s847 = scalar_lea.smem [#allocation14], 8
    %848 = sst [smem:[%s847]] 4
    %850 = dma.general %s814, 16384, %s829, %s816, [#allocation13], [#allocation14], %s827, 0
    %v851 = vld [vmem:[%s0] sm:$0xff]
    %v852 = vld [vmem:[%s1] sm:$0xf]
    %v853 = vld [vmem:[%s1 + $0x4] sm:$0xf]
    %v854 = vld [vmem:[%s1 + $0x8] sm:$0xf]
    %v855 = vld [vmem:[%s1 + $0xc] sm:$0xf]
    %v856 = vld [vmem:[%s1 + $0x10] sm:$0xf]
    %v857 = vld [vmem:[%s1 + $0x14] sm:$0xf]
    %v858 = vld [vmem:[%s1 + $0x18] sm:$0xf]
    %v859 = vld [vmem:[%s1 + $0x1c] sm:$0xf]
    %v860 = vld [vmem:[%s1 + $0x20] sm:$0xf]
    %v861 = vld [vmem:[%s1 + $0x24] sm:$0xf]
    %v862 = vld [vmem:[%s1 + $0x28] sm:$0xf]
    %v863 = vld [vmem:[%s1 + $0x2c] sm:$0xf]
    %v864 = vld [vmem:[%s1 + $0x30] sm:$0xf]
    %v865 = vld [vmem:[%s1 + $0x34] sm:$0xf]
    %v866 = vld [vmem:[%s1 + $0x38] sm:$0xf]
    %v867 = vld [vmem:[%s1 + $0x3c] sm:$0xf]
    %v868 = vpack.c.bf16 %v851, %v851
    %v869 = vld [vmem:[%s2] sm:$0x1]
    %v871 = vlaneseq
    %v872 = vshrl.u32 %v871, 7
    %v873 = vsub.s32 0, %v872
    %v874 = vrot.slane %v869, %v873
    %v892 = vunpack.c.l.b16 %v852
    %v893 = vunpack.c.l.b16 %v853
    %v894 = vunpack.c.l.b16 %v854
    %v895 = vunpack.c.l.b16 %v855
    %v896 = vunpack.c.l.b16 %v856
    %v897 = vunpack.c.l.b16 %v857
    %v898 = vunpack.c.l.b16 %v858
    %v899 = vunpack.c.l.b16 %v859
    %v900 = vunpack.c.l.b16 %v860
    %v901 = vunpack.c.l.b16 %v861
    %v902 = vunpack.c.l.b16 %v862
    %v903 = vunpack.c.l.b16 %v863
    %v904 = vunpack.c.l.b16 %v864
    %v905 = vunpack.c.l.b16 %v865
    %v906 = vunpack.c.l.b16 %v866
    %v907 = vunpack.c.l.b16 %v867
    %v908 = vpack.c.b16 %v893, %v892
    %v909 = vpack.c.b16 %v895, %v894
    %v910 = vpack.c.b16 %v897, %v896
    %v911 = vpack.c.b16 %v899, %v898
    %v912 = vpack.c.b16 %v901, %v900
    %v913 = vpack.c.b16 %v903, %v902
    %v914 = vpack.c.b16 %v905, %v904
    %v915 = vpack.c.b16 %v907, %v906
    %924 = vmatprep.subr.bf16.mxu0 0
    %925 = vmatpush1.bf16.msra.mxu0 %v908
    %926 = vmatprep.subr.bf16.mxu0 0
    %927 = vmatpush1.bf16.msra.mxu0 %v909
    %928 = vmatprep.subr.bf16.mxu0 0
    %929 = vmatpush1.bf16.msra.mxu0 %v910
    %930 = vmatprep.subr.bf16.mxu0 0
    %931 = vmatpush1.bf16.msra.mxu0 %v911
    %932 = vmatprep.subr.bf16.mxu0 0
    %933 = vmatpush1.bf16.msra.mxu0 %v912
    %934 = vmatprep.subr.bf16.mxu0 0
    %935 = vmatpush1.bf16.msra.mxu0 %v913
    %936 = vmatprep.subr.bf16.mxu0 0
    %937 = vmatpush1.bf16.msra.mxu0 %v914
    %938 = vmatprep.subr.bf16.mxu0 0
    %939 = vmatpush1.bf16.msra.mxu0 %v915
    %940 = vmatprep.subr.bf16.mxu0 0
    %941 = vmatpush1.bf16.msra.mxu0 0
    %942 = vmatprep.subr.bf16.mxu0 0
    %943 = vmatpush1.bf16.msra.mxu0 0
    %944 = vmatprep.subr.bf16.mxu0 0
    %945 = vmatpush1.bf16.msra.mxu0 0
    %946 = vmatprep.subr.bf16.mxu0 0
    %947 = vmatpush1.bf16.msra.mxu0 0
    %948 = vmatprep.subr.bf16.mxu0 0
    %949 = vmatpush1.bf16.msra.mxu0 0
    %950 = vmatprep.subr.bf16.mxu0 0
    %951 = vmatpush1.bf16.msra.mxu0 0
    %952 = vmatprep.subr.bf16.mxu0 0
    %953 = vmatpush1.bf16.msra.mxu0 0
    %954 = vmatprep.subr.bf16.mxu0 0
    %955 = vmatpush1.bf16.msra.mxu0 0
    %956 = vmatprep.mubr.bf16.mxu0 0
    %957 = vmatmul.mubr.bf16.gmra.mrb[0].mxu0 %v868
    %v958 = vpop.f32.mrb[0].mxu0
    %v959 = vadd.f32 %v874, %v958
    %v960 = vpop.f32.mrb[0].mxu0
    %v961 = vpop.f32.mrb[0].mxu0
    %v962 = vpop.f32.mrb[0].mxu0
    %963 = vdwg.mxu0
    %vm964 = vcmp.gt.f32.partialorder %v959, 0.0
    %v965 = vmul.f32 %v959, 0.2
    %v966 = vsel %vm964, %v959, %v965
    %s967 = smul.u32 4, 16
    %s968 = smul.u32 %s967, 2
    %s969 = sshll.u32 %s968, 4
    %970 = dma.done [#allocation6], %s969
    %v971 = vld [vmem:[#allocation2] sm:$0xff]
    %v972 = vld [vmem:[#allocation2 + $0x8] sm:$0xff]
    %v973 = vld [vmem:[#allocation2 + $0x10] sm:$0xff]
    %v974 = vld [vmem:[#allocation2 + $0x18] sm:$0xff]
    %v975 = vld [vmem:[#allocation2 + $0x20] sm:$0xff]
    %v976 = vld [vmem:[#allocation2 + $0x28] sm:$0xff]
    %v977 = vld [vmem:[#allocation2 + $0x30] sm:$0xff]
    %v978 = vld [vmem:[#allocation2 + $0x38] sm:$0xff]
    %v979 = vld [vmem:[#allocation2 + $0x40] sm:$0xff]
    %v980 = vld [vmem:[#allocation2 + $0x48] sm:$0xff]
    %v981 = vld [vmem:[#allocation2 + $0x50] sm:$0xff]
    %v982 = vld [vmem:[#allocation2 + $0x58] sm:$0xff]
    %v983 = vld [vmem:[#allocation2 + $0x60] sm:$0xff]
    %v984 = vld [vmem:[#allocation2 + $0x68] sm:$0xff]
    %v985 = vld [vmem:[#allocation2 + $0x70] sm:$0xff]
    %v986 = vld [vmem:[#allocation2 + $0x78] sm:$0xff]
    %v987 = vpack.c.bf16 %v966, %v966
    %988 = vmatprep.subr.bf16.mxu0 %v972
    %989 = vmatpush1.bf16.msra.mxu0 %v971
    %990 = vmatprep.subr.bf16.mxu0 %v974
    %991 = vmatpush1.bf16.msra.mxu0 %v973
    %992 = vmatprep.subr.bf16.mxu0 %v976
    %993 = vmatpush1.bf16.msra.mxu0 %v975
    %994 = vmatprep.subr.bf16.mxu0 %v978
    %995 = vmatpush1.bf16.msra.mxu0 %v977
    %996 = vmatprep.subr.bf16.mxu0 %v980
    %997 = vmatpush1.bf16.msra.mxu0 %v979
    %998 = vmatprep.subr.bf16.mxu0 %v982
    %999 = vmatpush1.bf16.msra.mxu0 %v981
    %1000 = vmatprep.subr.bf16.mxu0 %v984
    %1001 = vmatpush1.bf16.msra.mxu0 %v983
    %1002 = vmatprep.subr.bf16.mxu0 %v986
    %1003 = vmatpush1.bf16.msra.mxu0 %v985
    %1004 = vmatprep.subr.bf16.mxu0 0
    %1005 = vmatpush1.bf16.msra.mxu0 0
    %1006 = vmatprep.subr.bf16.mxu0 0
    %1007 = vmatpush1.bf16.msra.mxu0 0
    %1008 = vmatprep.subr.bf16.mxu0 0
    %1009 = vmatpush1.bf16.msra.mxu0 0
    %1010 = vmatprep.subr.bf16.mxu0 0
    %1011 = vmatpush1.bf16.msra.mxu0 0
    %1012 = vmatprep.subr.bf16.mxu0 0
    %1013 = vmatpush1.bf16.msra.mxu0 0
    %1014 = vmatprep.subr.bf16.mxu0 0
    %1015 = vmatpush1.bf16.msra.mxu0 0
    %1016 = vmatprep.subr.bf16.mxu0 0
    %1017 = vmatpush1.bf16.msra.mxu0 0
    %1018 = vmatprep.subr.bf16.mxu0 0
    %1019 = vmatpush1.bf16.msra.mxu0 0
    %1020 = vmatprep.mubr.bf16.mxu0 0
    %1021 = vmatmul.mubr.bf16.gmra.mrb[0].mxu0 %v987
    %v1022 = vpop.f32.mrb[0].mxu0
    %v1023 = vadd.f32 0.0, %v1022
    %v1024 = vpop.f32.mrb[0].mxu0
    %v1025 = vadd.f32 0.0, %v1024
    %v1026 = vpop.f32.mrb[0].mxu0
    %v1027 = vpop.f32.mrb[0].mxu0
    %1028 = vdwg.mxu0
    %v1029 = vld [vmem:[%s4] sm:$0x3]
    %v1030 = vld [vmem:[%s5] sm:$0x3]
    %v1031 = vrot.slane %v1023, 4
    %v1032 = vadd.f32 %v1023, %v1031
    %v1033 = vrot.slane %v1032, 2
    %v1034 = vadd.f32 %v1032, %v1033
    %v1035 = vrot.slane %v1034, 1
    %v1036 = vadd.f32 %v1034, %v1035
    %v1037 = vrot.slane %v1025, 4
    %v1038 = vadd.f32 %v1025, %v1037
    %v1039 = vrot.slane %v1038, 2
    %v1040 = vadd.f32 %v1038, %v1039
    %v1041 = vrot.slane %v1040, 1
    %v1042 = vadd.f32 %v1040, %v1041
    %v1043 = vmul.f32 %v1023, %v1023
    %v1044 = vmul.f32 %v1025, %v1025
    %v1045 = vrot.slane %v1043, 4
    %v1046 = vadd.f32 %v1043, %v1045
    %v1047 = vrot.slane %v1046, 2
    %v1048 = vadd.f32 %v1046, %v1047
    %v1049 = vrot.slane %v1048, 1
    %v1050 = vadd.f32 %v1048, %v1049
    %v1051 = vrot.slane %v1044, 4
    %v1052 = vadd.f32 %v1044, %v1051
    %v1053 = vrot.slane %v1052, 2
    %v1054 = vadd.f32 %v1052, %v1053
    %v1055 = vrot.slane %v1054, 1
    %v1056 = vadd.f32 %v1054, %v1055
    %v1057 = vmul.f32 %v1036, 0.125
    %v1058 = vmul.f32 %v1042, 0.125
    %v1059 = vmul.f32 %v1050, 0.125
    %v1060 = vmul.f32 %v1056, 0.125
    %v1061 = vmul.f32 %v1057, %v1057
    %v1062 = vmul.f32 %v1058, %v1058
    %v1063 = vsub.f32 %v1059, %v1061
    %v1064 = vsub.f32 %v1060, %v1062
    %v1065 = vmax.f32 %v1063, 0.0
    %v1066 = vmax.f32 %v1064, 0.0
    %v1067 = vadd.f32 %v1065, 0.8
    %v1068 = vadd.f32 %v1066, 0.8
    %v1069 = vrsqrt.pop %v1067
    %v1070 = vrsqrt.pop %v1068
    %v1073 = vcombine.low %v1069, %v1070
    %v1075 = vunpack.c.l.s4 1966171168
    %v1076 = vunpack.c.0.s8 %v1075
    %v1077 = vlaneseq
    %v1078 = vshrl.u32 %v1077, 7
    %v1079 = vsub.s32 %v1076, %v1078
    %v1080 = vrot.slane %v1073, %v1079
    %v1082 = vunpack.c.l.s4 1966171168
    %v1083 = vunpack.c.0.s8 %v1082
    %v1084 = vlaneseq
    %v1085 = vshrl.u32 %v1084, 7
    %v1086 = vsub.s32 %v1083, %v1085
    %v1087 = vrot.slane %v1080, %v1086
    %v1089 = vmul.f32 %v1029, %v1087
    %v1091 = vlaneseq
    %v1092 = vshrl.u32 %v1091, 7
    %v1093 = vsub.s32 0, %v1092
    %v1094 = vrot.slane %v1089, %v1093
    %v1095 = vlaneseq
    %v1096 = vshrl.u32 %v1095, 7
    %v1097 = vsub.s32 1, %v1096
    %v1098 = vrot.slane %v1089, %v1097
    %v1101 = vmul.f32 %v1057, %v1094
    %v1102 = vmul.f32 %v1058, %v1098
    %v1105 = vcombine.low %v1101, %v1102
    %v1107 = vunpack.c.l.s4 1966171168
    %v1108 = vunpack.c.0.s8 %v1107
    %v1109 = vlaneseq
    %v1110 = vshrl.u32 %v1109, 7
    %v1111 = vsub.s32 %v1108, %v1110
    %v1112 = vrot.slane %v1105, %v1111
    %v1114 = vunpack.c.l.s4 1966171168
    %v1115 = vunpack.c.0.s8 %v1114
    %v1116 = vlaneseq
    %v1117 = vshrl.u32 %v1116, 7
    %v1118 = vsub.s32 %v1115, %v1117
    %v1119 = vrot.slane %v1112, %v1118
    %v1121 = vsub.f32 %v1030, %v1119
    %v1122 = vmul.f32 %v1023, %v1094
    %v1123 = vmul.f32 %v1025, %v1098
    %v1125 = vlaneseq
    %v1126 = vshrl.u32 %v1125, 7
    %v1127 = vsub.s32 0, %v1126
    %v1128 = vrot.slane %v1121, %v1127
    %v1129 = vlaneseq
    %v1130 = vshrl.u32 %v1129, 7
    %v1131 = vsub.s32 1, %v1130
    %v1132 = vrot.slane %v1121, %v1131
    %v1135 = vadd.f32 %v1122, %v1128
    %v1136 = vadd.f32 %v1123, %v1132
    %vm1137 = vcmp.gt.f32.partialorder %v1135, 0.0
    %vm1138 = vcmp.gt.f32.partialorder %v1136, 0.0
    %v1139 = vmul.f32 %v1135, 0.2
    %v1140 = vmul.f32 %v1136, 0.2
    %v1141 = vsel %vm1137, %v1135, %v1139
    %v1142 = vsel %vm1138, %v1136, %v1140
    %s1143 = smul.u32 4, 32
    %s1144 = smul.u32 %s1143, 4
    %s1145 = sshll.u32 %s1144, 4
    %1146 = dma.done %s217, %s1145
    %v1147 = vld [vmem:[#allocation3] sm:$0xff]
    %v1148 = vld [vmem:[#allocation3 + $0x8] sm:$0xff]
    %v1149 = vld [vmem:[#allocation3 + $0x10] sm:$0xff]
    %v1150 = vld [vmem:[#allocation3 + $0x18] sm:$0xff]
    %v1151 = vld [vmem:[#allocation3 + $0x20] sm:$0xff]
    %v1152 = vld [vmem:[#allocation3 + $0x28] sm:$0xff]
    %v1153 = vld [vmem:[#allocation3 + $0x30] sm:$0xff]
    %v1154 = vld [vmem:[#allocation3 + $0x38] sm:$0xff]
    %v1155 = vld [vmem:[#allocation3 + $0x40] sm:$0xff]
    %v1156 = vld [vmem:[#allocation3 + $0x48] sm:$0xff]
    %v1157 = vld [vmem:[#allocation3 + $0x50] sm:$0xff]
    %v1158 = vld [vmem:[#allocation3 + $0x58] sm:$0xff]
    %v1159 = vld [vmem:[#allocation3 + $0x60] sm:$0xff]
    %v1160 = vld [vmem:[#allocation3 + $0x68] sm:$0xff]
    %v1161 = vld [vmem:[#allocation3 + $0x70] sm:$0xff]
    %v1162 = vld [vmem:[#allocation3 + $0x78] sm:$0xff]
    %v1163 = vld [vmem:[#allocation3 + $0x80] sm:$0xff]
    %v1164 = vld [vmem:[#allocation3 + $0x88] sm:$0xff]
    %v1165 = vld [vmem:[#allocation3 + $0x90] sm:$0xff]
    %v1166 = vld [vmem:[#allocation3 + $0x98] sm:$0xff]
    %v1167 = vld [vmem:[#allocation3 + $0xa0] sm:$0xff]
    %v1168 = vld [vmem:[#allocation3 + $0xa8] sm:$0xff]
    %v1169 = vld [vmem:[#allocation3 + $0xb0] sm:$0xff]
    %v1170 = vld [vmem:[#allocation3 + $0xb8] sm:$0xff]
    %v1171 = vld [vmem:[#allocation3 + $0xc0] sm:$0xff]
    %v1172 = vld [vmem:[#allocation3 + $0xc8] sm:$0xff]
    %v1173 = vld [vmem:[#allocation3 + $0xd0] sm:$0xff]
    %v1174 = vld [vmem:[#allocation3 + $0xd8] sm:$0xff]
    %v1175 = vld [vmem:[#allocation3 + $0xe0] sm:$0xff]
    %v1176 = vld [vmem:[#allocation3 + $0xe8] sm:$0xff]
    %v1177 = vld [vmem:[#allocation3 + $0xf0] sm:$0xff]
    %v1178 = vld [vmem:[#allocation3 + $0xf8] sm:$0xff]
    %v1179 = vld [vmem:[#allocation3 + $0x100] sm:$0xff]
    %v1180 = vld [vmem:[#allocation3 + $0x108] sm:$0xff]
    %v1181 = vld [vmem:[#allocation3 + $0x110] sm:$0xff]
    %v1182 = vld [vmem:[#allocation3 + $0x118] sm:$0xff]
    %v1183 = vld [vmem:[#allocation3 + $0x120] sm:$0xff]
    %v1184 = vld [vmem:[#allocation3 + $0x128] sm:$0xff]
    %v1185 = vld [vmem:[#allocation3 + $0x130] sm:$0xff]
    %v1186 = vld [vmem:[#allocation3 + $0x138] sm:$0xff]
    %v1187 = vld [vmem:[#allocation3 + $0x140] sm:$0xff]
    %v1188 = vld [vmem:[#allocation3 + $0x148] sm:$0xff]
    %v1189 = vld [vmem:[#allocation3 + $0x150] sm:$0xff]
    %v1190 = vld [vmem:[#allocation3 + $0x158] sm:$0xff]
    %v1191 = vld [vmem:[#allocation3 + $0x160] sm:$0xff]
    %v1192 = vld [vmem:[#allocation3 + $0x168] sm:$0xff]
    %v1193 = vld [vmem:[#allocation3 + $0x170] sm:$0xff]
    %v1194 = vld [vmem:[#allocation3 + $0x178] sm:$0xff]
    %v1195 = vld [vmem:[#allocation3 + $0x180] sm:$0xff]
    %v1196 = vld [vmem:[#allocation3 + $0x188] sm:$0xff]
    %v1197 = vld [vmem:[#allocation3 + $0x190] sm:$0xff]
    %v1198 = vld [vmem:[#allocation3 + $0x198] sm:$0xff]
    %v1199 = vld [vmem:[#allocation3 + $0x1a0] sm:$0xff]
    %v1200 = vld [vmem:[#allocation3 + $0x1a8] sm:$0xff]
    %v1201 = vld [vmem:[#allocation3 + $0x1b0] sm:$0xff]
    %v1202 = vld [vmem:[#allocation3 + $0x1b8] sm:$0xff]
    %v1203 = vld [vmem:[#allocation3 + $0x1c0] sm:$0xff]
    %v1204 = vld [vmem:[#allocation3 + $0x1c8] sm:$0xff]
    %v1205 = vld [vmem:[#allocation3 + $0x1d0] sm:$0xff]
    %v1206 = vld [vmem:[#allocation3 + $0x1d8] sm:$0xff]
    %v1207 = vld [vmem:[#allocation3 + $0x1e0] sm:$0xff]
    %v1208 = vld [vmem:[#allocation3 + $0x1e8] sm:$0xff]
    %v1209 = vld [vmem:[#allocation3 + $0x1f0] sm:$0xff]
    %v1210 = vld [vmem:[#allocation3 + $0x1f8] sm:$0xff]
    %v1211 = vpack.c.bf16 %v1141, %v1141
    %v1212 = vpack.c.bf16 %v1142, %v1142
    %1213 = vmatprep.subr.bf16.mxu0 %v1148
    %1214 = vmatpush1.bf16.msra.mxu0 %v1147
    %1215 = vmatprep.subr.bf16.mxu0 %v1152
    %1216 = vmatpush1.bf16.msra.mxu0 %v1151
    %1217 = vmatprep.subr.bf16.mxu0 %v1156
    %1218 = vmatpush1.bf16.msra.mxu0 %v1155
    %1219 = vmatprep.subr.bf16.mxu0 %v1160
    %1220 = vmatpush1.bf16.msra.mxu0 %v1159
    %1221 = vmatprep.subr.bf16.mxu0 %v1164
    %1222 = vmatpush1.bf16.msra.mxu0 %v1163
    %1223 = vmatprep.subr.bf16.mxu0 %v1168
    %1224 = vmatpush1.bf16.msra.mxu0 %v1167
    %1225 = vmatprep.subr.bf16.mxu0 %v1172
    %1226 = vmatpush1.bf16.msra.mxu0 %v1171
    %1227 = vmatprep.subr.bf16.mxu0 %v1176
    %1228 = vmatpush1.bf16.msra.mxu0 %v1175
    %1229 = vmatprep.subr.bf16.mxu0 %v1180
    %1230 = vmatpush1.bf16.msra.mxu0 %v1179
    %1231 = vmatprep.subr.bf16.mxu0 %v1184
    %1232 = vmatpush1.bf16.msra.mxu0 %v1183
    %1233 = vmatprep.subr.bf16.mxu0 %v1188
    %1234 = vmatpush1.bf16.msra.mxu0 %v1187
    %1235 = vmatprep.subr.bf16.mxu0 %v1192
    %1236 = vmatpush1.bf16.msra.mxu0 %v1191
    %1237 = vmatprep.subr.bf16.mxu0 %v1196
    %1238 = vmatpush1.bf16.msra.mxu0 %v1195
    %1239 = vmatprep.subr.bf16.mxu0 %v1200
    %1240 = vmatpush1.bf16.msra.mxu0 %v1199
    %1241 = vmatprep.subr.bf16.mxu0 %v1204
    %1242 = vmatpush1.bf16.msra.mxu0 %v1203
    %1243 = vmatprep.subr.bf16.mxu0 %v1208
    %1244 = vmatpush1.bf16.msra.mxu0 %v1207
    %1245 = vmatprep.mubr.bf16.mxu0 %v1212
    %1246 = vmatmul.mubr.bf16.gmra.mrb[0].mxu0 %v1211
    %v1247 = vpop.f32.mrb[0].mxu0
    %v1248 = vadd.f32 0.0, %v1247
    %v1249 = vpop.f32.mrb[0].mxu0
    %v1250 = vadd.f32 0.0, %v1249
    %v1251 = vpop.f32.mrb[0].mxu0
    %v1252 = vpop.f32.mrb[0].mxu0
    %1253 = vdwg.mxu0
    %1254 = vmatprep.subr.bf16.mxu0 %v1150
    %1255 = vmatpush1.bf16.msra.mxu0 %v1149
    %1256 = vmatprep.subr.bf16.mxu0 %v1154
    %1257 = vmatpush1.bf16.msra.mxu0 %v1153
    %1258 = vmatprep.subr.bf16.mxu0 %v1158
    %1259 = vmatpush1.bf16.msra.mxu0 %v1157
    %1260 = vmatprep.subr.bf16.mxu0 %v1162
    %1261 = vmatpush1.bf16.msra.mxu0 %v1161
    %1262 = vmatprep.subr.bf16.mxu0 %v1166
    %1263 = vmatpush1.bf16.msra.mxu0 %v1165
    %1264 = vmatprep.subr.bf16.mxu0 %v1170
    %1265 = vmatpush1.bf16.msra.mxu0 %v1169
    %1266 = vmatprep.subr.bf16.mxu0 %v1174
    %1267 = vmatpush1.bf16.msra.mxu0 %v1173
    %1268 = vmatprep.subr.bf16.mxu0 %v1178
    %1269 = vmatpush1.bf16.msra.mxu0 %v1177
    %1270 = vmatprep.subr.bf16.mxu0 %v1182
    %1271 = vmatpush1.bf16.msra.mxu0 %v1181
    %1272 = vmatprep.subr.bf16.mxu0 %v1186
    %1273 = vmatpush1.bf16.msra.mxu0 %v1185
    %1274 = vmatprep.subr.bf16.mxu0 %v1190
    %1275 = vmatpush1.bf16.msra.mxu0 %v1189
    %1276 = vmatprep.subr.bf16.mxu0 %v1194
    %1277 = vmatpush1.bf16.msra.mxu0 %v1193
    %1278 = vmatprep.subr.bf16.mxu0 %v1198
    %1279 = vmatpush1.bf16.msra.mxu0 %v1197
    %1280 = vmatprep.subr.bf16.mxu0 %v1202
    %1281 = vmatpush1.bf16.msra.mxu0 %v1201
    %1282 = vmatprep.subr.bf16.mxu0 %v1206
    %1283 = vmatpush1.bf16.msra.mxu0 %v1205
    %1284 = vmatprep.subr.bf16.mxu0 %v1210
    %1285 = vmatpush1.bf16.msra.mxu0 %v1209
    %1286 = vmatprep.mubr.bf16.mxu0 %v1212
    %1287 = vmatmul.mubr.bf16.gmra.mrb[0].mxu0 %v1211
    %v1288 = vpop.f32.mrb[0].mxu0
    %v1289 = vadd.f32 0.0, %v1288
    %v1290 = vpop.f32.mrb[0].mxu0
    %v1291 = vadd.f32 0.0, %v1290
    %v1292 = vpop.f32.mrb[0].mxu0
    %v1293 = vpop.f32.mrb[0].mxu0
    %1294 = vdwg.mxu0
    %v1295 = vld [vmem:[%s7] sm:$0xf]
    %v1296 = vld [vmem:[%s8] sm:$0xf]
    %v1297 = vrot.slane %v1248, 4
    %v1298 = vadd.f32 %v1248, %v1297
    %v1299 = vrot.slane %v1298, 2
    %v1300 = vadd.f32 %v1298, %v1299
    %v1301 = vrot.slane %v1300, 1
    %v1302 = vadd.f32 %v1300, %v1301
    %v1303 = vrot.slane %v1250, 4
    %v1304 = vadd.f32 %v1250, %v1303
    %v1305 = vrot.slane %v1304, 2
    %v1306 = vadd.f32 %v1304, %v1305
    %v1307 = vrot.slane %v1306, 1
    %v1308 = vadd.f32 %v1306, %v1307
    %v1309 = vrot.slane %v1289, 4
    %v1310 = vadd.f32 %v1289, %v1309
    %v1311 = vrot.slane %v1310, 2
    %v1312 = vadd.f32 %v1310, %v1311
    %v1313 = vrot.slane %v1312, 1
    %v1314 = vadd.f32 %v1312, %v1313
    %v1315 = vrot.slane %v1291, 4
    %v1316 = vadd.f32 %v1291, %v1315
    %v1317 = vrot.slane %v1316, 2
    %v1318 = vadd.f32 %v1316, %v1317
    %v1319 = vrot.slane %v1318, 1
    %v1320 = vadd.f32 %v1318, %v1319
    %v1321 = vmul.f32 %v1248, %v1248
    %v1322 = vmul.f32 %v1250, %v1250
    %v1323 = vmul.f32 %v1289, %v1289
    %v1324 = vmul.f32 %v1291, %v1291
    %v1325 = vrot.slane %v1321, 4
    %v1326 = vadd.f32 %v1321, %v1325
    %v1327 = vrot.slane %v1326, 2
    %v1328 = vadd.f32 %v1326, %v1327
    %v1329 = vrot.slane %v1328, 1
    %v1330 = vadd.f32 %v1328, %v1329
    %v1331 = vrot.slane %v1322, 4
    %v1332 = vadd.f32 %v1322, %v1331
    %v1333 = vrot.slane %v1332, 2
    %v1334 = vadd.f32 %v1332, %v1333
    %v1335 = vrot.slane %v1334, 1
    %v1336 = vadd.f32 %v1334, %v1335
    %v1337 = vrot.slane %v1323, 4
    %v1338 = vadd.f32 %v1323, %v1337
    %v1339 = vrot.slane %v1338, 2
    %v1340 = vadd.f32 %v1338, %v1339
    %v1341 = vrot.slane %v1340, 1
    %v1342 = vadd.f32 %v1340, %v1341
    %v1343 = vrot.slane %v1324, 4
    %v1344 = vadd.f32 %v1324, %v1343
    %v1345 = vrot.slane %v1344, 2
    %v1346 = vadd.f32 %v1344, %v1345
    %v1347 = vrot.slane %v1346, 1
    %v1348 = vadd.f32 %v1346, %v1347
    %v1349 = vmul.f32 %v1302, 0.125
    %v1350 = vmul.f32 %v1308, 0.125
    %v1351 = vmul.f32 %v1314, 0.125
    %v1352 = vmul.f32 %v1320, 0.125
    %v1353 = vmul.f32 %v1330, 0.125
    %v1354 = vmul.f32 %v1336, 0.125
    %v1355 = vmul.f32 %v1342, 0.125
    %v1356 = vmul.f32 %v1348, 0.125
    %v1357 = vmul.f32 %v1349, %v1349
    %v1358 = vmul.f32 %v1350, %v1350
    %v1359 = vmul.f32 %v1351, %v1351
    %v1360 = vmul.f32 %v1352, %v1352
    %v1361 = vsub.f32 %v1353, %v1357
    %v1362 = vsub.f32 %v1354, %v1358
    %v1363 = vsub.f32 %v1355, %v1359
    %v1364 = vsub.f32 %v1356, %v1360
    %v1365 = vmax.f32 %v1361, 0.0
    %v1366 = vmax.f32 %v1362, 0.0
    %v1367 = vmax.f32 %v1363, 0.0
    %v1368 = vmax.f32 %v1364, 0.0
    %v1369 = vadd.f32 %v1365, 0.8
    %v1370 = vadd.f32 %v1366, 0.8
    %v1371 = vadd.f32 %v1367, 0.8
    %v1372 = vadd.f32 %v1368, 0.8
    %v1373 = vrsqrt.pop %v1369
    %v1374 = vrsqrt.pop %v1370
    %v1375 = vrsqrt.pop %v1371
    %v1376 = vrsqrt.pop %v1372
    %v1381 = vcombine.low %v1373, %v1374
    %v1382 = vcombine.low %v1375, %v1376
    %v1384 = vunpack.c.l.s4 1966171168
    %v1385 = vunpack.c.0.s8 %v1384
    %v1386 = vlaneseq
    %v1387 = vshrl.u32 %v1386, 7
    %v1388 = vsub.s32 %v1385, %v1387
    %v1389 = vrot.slane %v1381, %v1388
    %v1391 = vunpack.c.l.s4 1966171168
    %v1392 = vunpack.c.0.s8 %v1391
    %v1393 = vlaneseq
    %v1394 = vshrl.u32 %v1393, 7
    %v1395 = vsub.s32 %v1392, %v1394
    %v1396 = vrot.slane %v1382, %v1395
    %v1397 = vcombine.low %v1389, %v1396
    %v1399 = vunpack.c.l.s4 1966171168
    %v1400 = vunpack.c.0.s8 %v1399
    %v1401 = vlaneseq
    %v1402 = vshrl.u32 %v1401, 7
    %v1403 = vsub.s32 %v1400, %v1402
    %v1404 = vrot.slane %v1397, %v1403
    %v1406 = vmul.f32 %v1295, %v1404
    %v1408 = vlaneseq
    %v1409 = vshrl.u32 %v1408, 7
    %v1410 = vsub.s32 0, %v1409
    %v1411 = vrot.slane %v1406, %v1410
    %v1412 = vlaneseq
    %v1413 = vshrl.u32 %v1412, 7
    %v1414 = vsub.s32 1, %v1413
    %v1415 = vrot.slane %v1406, %v1414
    %v1416 = vlaneseq
    %v1417 = vshrl.u32 %v1416, 7
    %v1418 = vsub.s32 2, %v1417
    %v1419 = vrot.slane %v1406, %v1418
    %v1420 = vlaneseq
    %v1421 = vshrl.u32 %v1420, 7
    %v1422 = vsub.s32 3, %v1421
    %v1423 = vrot.slane %v1406, %v1422
    %v1428 = vmul.f32 %v1349, %v1411
    %v1429 = vmul.f32 %v1350, %v1415
    %v1430 = vmul.f32 %v1351, %v1419
    %v1431 = vmul.f32 %v1352, %v1423
    %v1436 = vcombine.low %v1428, %v1429
    %v1437 = vcombine.low %v1430, %v1431
    %v1439 = vunpack.c.l.s4 1966171168
    %v1440 = vunpack.c.0.s8 %v1439
    %v1441 = vlaneseq
    %v1442 = vshrl.u32 %v1441, 7
    %v1443 = vsub.s32 %v1440, %v1442
    %v1444 = vrot.slane %v1436, %v1443
    %v1446 = vunpack.c.l.s4 1966171168
    %v1447 = vunpack.c.0.s8 %v1446
    %v1448 = vlaneseq
    %v1449 = vshrl.u32 %v1448, 7
    %v1450 = vsub.s32 %v1447, %v1449
    %v1451 = vrot.slane %v1437, %v1450
    %v1452 = vcombine.low %v1444, %v1451
    %v1454 = vunpack.c.l.s4 1966171168
    %v1455 = vunpack.c.0.s8 %v1454
    %v1456 = vlaneseq
    %v1457 = vshrl.u32 %v1456, 7
    %v1458 = vsub.s32 %v1455, %v1457
    %v1459 = vrot.slane %v1452, %v1458
    %v1461 = vsub.f32 %v1296, %v1459
    %v1462 = vmul.f32 %v1248, %v1411
    %v1463 = vmul.f32 %v1250, %v1415
    %v1464 = vmul.f32 %v1289, %v1419
    %v1465 = vmul.f32 %v1291, %v1423
    %v1467 = vlaneseq
    %v1468 = vshrl.u32 %v1467, 7
    %v1469 = vsub.s32 0, %v1468
    %v1470 = vrot.slane %v1461, %v1469
    %v1471 = vlaneseq
    %v1472 = vshrl.u32 %v1471, 7
    %v1473 = vsub.s32 1, %v1472
    %v1474 = vrot.slane %v1461, %v1473
    %v1475 = vlaneseq
    %v1476 = vshrl.u32 %v1475, 7
    %v1477 = vsub.s32 2, %v1476
    %v1478 = vrot.slane %v1461, %v1477
    %v1479 = vlaneseq
    %v1480 = vshrl.u32 %v1479, 7
    %v1481 = vsub.s32 3, %v1480
    %v1482 = vrot.slane %v1461, %v1481
    %v1487 = vadd.f32 %v1462, %v1470
    %v1488 = vadd.f32 %v1463, %v1474
    %v1489 = vadd.f32 %v1464, %v1478
    %v1490 = vadd.f32 %v1465, %v1482
    %vm1491 = vcmp.gt.f32.partialorder %v1487, 0.0
    %vm1492 = vcmp.gt.f32.partialorder %v1488, 0.0
    %vm1493 = vcmp.gt.f32.partialorder %v1489, 0.0
    %vm1494 = vcmp.gt.f32.partialorder %v1490, 0.0
    %v1495 = vmul.f32 %v1487, 0.2
    %v1496 = vmul.f32 %v1488, 0.2
    %v1497 = vmul.f32 %v1489, 0.2
    %v1498 = vmul.f32 %v1490, 0.2
    %v1499 = vsel %vm1491, %v1487, %v1495
    %v1500 = vsel %vm1492, %v1488, %v1496
    %v1501 = vsel %vm1493, %v1489, %v1497
    %v1502 = vsel %vm1494, %v1490, %v1498
    %v1503 = vpack.c.bf16 %v1499, %v1499
    %v1504 = vpack.c.bf16 %v1500, %v1500
    %v1505 = vpack.c.bf16 %v1501, %v1501
    %v1506 = vpack.c.bf16 %v1502, %v1502
    %v1507 = vld [vmem:[%s10] sm:$0xff]
    %v1508 = vld [vmem:[%s11] sm:$0xff]
    %s1509 = smul.u32 4, 64
    %s1510 = smul.u32 %s1509, 4
    %s1511 = sshll.u32 %s1510, 4
    %1512 = dma.done %s778, %s1511
    %s1513 = scalar_lea.sflag [#allocation6], 4
    %p1515 = scmp.lt.u32.totalorder 256, 8
    %p1516 = pneg %p1515
    // Predicated region
    $region116: #{expert_forward.1} parent=1 // pred_check
      _
    $region117: #{expert_forward.1} parent=1 // pred_check_branch
      %1518 = sbr.rel (%p1515) target = $region119
    $region118: #{expert_forward.1} parent=1 // pred_region
      %s1533 = sand.u32 256, 7
      %p1534 = scmp.eq.s32.totalorder %s1533, 0
      // Predicated region
      $region131: #{expert_forward.1} parent=118 // pred_check
        %p1535 = pneg %p1534
      $region132: #{expert_forward.1} parent=118 // pred_check_branch
        %1537 = sbr.rel (%p1535) target = $region134
      $region133: #{expert_forward.1} parent=118 // pred_region
        loop: start=0, step=1, limit=1
        $region135: #{expert_forward.1} parent=133 // loop_pre_header
          _
        $region136: #{expert_forward.1} parent=133 // loop_header
          %s1539 = sphi 0, %s1543
          %p1540 = scmp.ge.s32.totalorder %s1539, 1
          %s1544 = sphi %s12, %s12
          %s1545 = sphi [#allocation5], [#allocation5]
        $region137: #{expert_forward.1} parent=133 // loop_header_branch
          %1542 = sbr.rel (%p1540) target = $region141
        $region138: #{expert_forward.1} parent=133 // loop_body
          %v1546 = vld [vmem:[%s1544] sm:$0xff]
          %1547 = vst [vmem:[%s1545] sm:$0xff] %v1546
          %v1548 = vld [vmem:[%s1544 + $0x8] sm:$0xff]
          %1549 = vst [vmem:[%s1545 + $0x8] sm:$0xff] %v1548
          %v1550 = vld [vmem:[%s1544 + $0x10] sm:$0xff]
          %1551 = vst [vmem:[%s1545 + $0x10] sm:$0xff] %v1550
          %v1552 = vld [vmem:[%s1544 + $0x18] sm:$0xff]
          %1553 = vst [vmem:[%s1545 + $0x18] sm:$0xff] %v1552
          %v1554 = vld [vmem:[%s1544 + $0x20] sm:$0xff]
          %1555 = vst [vmem:[%s1545 + $0x20] sm:$0xff] %v1554
          %v1556 = vld [vmem:[%s1544 + $0x28] sm:$0xff]
          %1557 = vst [vmem:[%s1545 + $0x28] sm:$0xff] %v1556
          %v1558 = vld [vmem:[%s1544 + $0x30] sm:$0xff]
          %1559 = vst [vmem:[%s1545 + $0x30] sm:$0xff] %v1558
          %v1560 = vld [vmem:[%s1544 + $0x38] sm:$0xff]
          %1561 = vst [vmem:[%s1545 + $0x38] sm:$0xff] %v1560
          %v1562 = vld [vmem:[%s1544 + $0x40] sm:$0xff]
          %1563 = vst [vmem:[%s1545 + $0x40] sm:$0xff] %v1562
          %v1564 = vld [vmem:[%s1544 + $0x48] sm:$0xff]
          %1565 = vst [vmem:[%s1545 + $0x48] sm:$0xff] %v1564
          %v1566 = vld [vmem:[%s1544 + $0x50] sm:$0xff]
          %1567 = vst [vmem:[%s1545 + $0x50] sm:$0xff] %v1566
          %v1568 = vld [vmem:[%s1544 + $0x58] sm:$0xff]
          %1569 = vst [vmem:[%s1545 + $0x58] sm:$0xff] %v1568
          %v1570 = vld [vmem:[%s1544 + $0x60] sm:$0xff]
          %1571 = vst [vmem:[%s1545 + $0x60] sm:$0xff] %v1570
          %v1572 = vld [vmem:[%s1544 + $0x68] sm:$0xff]
          %1573 = vst [vmem:[%s1545 + $0x68] sm:$0xff] %v1572
          %v1574 = vld [vmem:[%s1544 + $0x70] sm:$0xff]
          %1575 = vst [vmem:[%s1545 + $0x70] sm:$0xff] %v1574
          %v1576 = vld [vmem:[%s1544 + $0x78] sm:$0xff]
          %1577 = vst [vmem:[%s1545 + $0x78] sm:$0xff] %v1576
          %v1578 = vld [vmem:[%s1544 + $0x80] sm:$0xff]
          %1579 = vst [vmem:[%s1545 + $0x80] sm:$0xff] %v1578
          %v1580 = vld [vmem:[%s1544 + $0x88] sm:$0xff]
          %1581 = vst [vmem:[%s1545 + $0x88] sm:$0xff] %v1580
          %v1582 = vld [vmem:[%s1544 + $0x90] sm:$0xff]
          %1583 = vst [vmem:[%s1545 + $0x90] sm:$0xff] %v1582
          %v1584 = vld [vmem:[%s1544 + $0x98] sm:$0xff]
          %1585 = vst [vmem:[%s1545 + $0x98] sm:$0xff] %v1584
          %v1586 = vld [vmem:[%s1544 + $0xa0] sm:$0xff]
          %1587 = vst [vmem:[%s1545 + $0xa0] sm:$0xff] %v1586
          %v1588 = vld [vmem:[%s1544 + $0xa8] sm:$0xff]
          %1589 = vst [vmem:[%s1545 + $0xa8] sm:$0xff] %v1588
          %v1590 = vld [vmem:[%s1544 + $0xb0] sm:$0xff]
          %1591 = vst [vmem:[%s1545 + $0xb0] sm:$0xff] %v1590
          %v1592 = vld [vmem:[%s1544 + $0xb8] sm:$0xff]
          %1593 = vst [vmem:[%s1545 + $0xb8] sm:$0xff] %v1592
          %v1594 = vld [vmem:[%s1544 + $0xc0] sm:$0xff]
          %1595 = vst [vmem:[%s1545 + $0xc0] sm:$0xff] %v1594
          %v1596 = vld [vmem:[%s1544 + $0xc8] sm:$0xff]
          %1597 = vst [vmem:[%s1545 + $0xc8] sm:$0xff] %v1596
          %v1598 = vld [vmem:[%s1544 + $0xd0] sm:$0xff]
          %1599 = vst [vmem:[%s1545 + $0xd0] sm:$0xff] %v1598
          %v1600 = vld [vmem:[%s1544 + $0xd8] sm:$0xff]
          %1601 = vst [vmem:[%s1545 + $0xd8] sm:$0xff] %v1600
          %v1602 = vld [vmem:[%s1544 + $0xe0] sm:$0xff]
          %1603 = vst [vmem:[%s1545 + $0xe0] sm:$0xff] %v1602
          %v1604 = vld [vmem:[%s1544 + $0xe8] sm:$0xff]
          %1605 = vst [vmem:[%s1545 + $0xe8] sm:$0xff] %v1604
          %v1606 = vld [vmem:[%s1544 + $0xf0] sm:$0xff]
          %1607 = vst [vmem:[%s1545 + $0xf0] sm:$0xff] %v1606
          %v1608 = vld [vmem:[%s1544 + $0xf8] sm:$0xff]
          %1609 = vst [vmem:[%s1545 + $0xf8] sm:$0xff] %v1608
        $region139: #{expert_forward.1} parent=133 // loop_footer
          %s1543 = sadd.s32 1, %s1539
        $region140: #{expert_forward.1} parent=133 // loop_footer_branch
          %1538 = sbr.rel target = $region136
        $region141: #{expert_forward.1} parent=133 // loop_exit
          _
      $region134: #{expert_forward.1} parent=118 // pred_fallthru
        _
      %p1610 = pneg %p1534
      // Predicated region
      $region142: #{expert_forward.1} parent=118 // pred_check
        _
      $region143: #{expert_forward.1} parent=118 // pred_check_branch
        %1612 = sbr.rel (%p1534) target = $region145
      $region144: #{expert_forward.1} parent=118 // pred_region
        %s1613 = sand.u32 256, 7
      $region145: #{expert_forward.1} parent=118 // pred_fallthru
        _
    $region119: #{expert_forward.1} parent=1 // pred_fallthru
      _
    // Predicated region
    $region120: #{expert_forward.1} parent=1 // pred_check
      %p1519 = pneg %p1515
    $region121: #{expert_forward.1} parent=1 // pred_check_branch
      %1521 = sbr.rel (%p1519) target = $region123
    $region122: #{expert_forward.1} parent=1 // pred_region
      %s1522 = sshllo.u32 0, 256
      loop: start=0, step=1, limit=1
      $region124: #{expert_forward.1} parent=122 // loop_pre_header
        _
      $region125: #{expert_forward.1} parent=122 // loop_header
        %s1524 = sphi 0, %s1528
        %p1525 = scmp.ge.s32.totalorder %s1524, 1
        %s1529 = sphi %s12, %s12
        %s1530 = sphi [#allocation5], [#allocation5]
      $region126: #{expert_forward.1} parent=122 // loop_header_branch
        %1527 = sbr.rel (%p1525) target = $region130
      $region127: #{expert_forward.1} parent=122 // loop_body
        %v1531 = vld [vmem:[%s1529] sm:%s1522]
        %1532 = vst [vmem:[%s1530] sm:%s1522] %v1531
      $region128: #{expert_forward.1} parent=122 // loop_footer
        %s1528 = sadd.s32 1, %s1524
      $region129: #{expert_forward.1} parent=122 // loop_footer_branch
        %1523 = sbr.rel target = $region125
      $region130: #{expert_forward.1} parent=122 // loop_exit
        _
    $region123: #{expert_forward.1} parent=1 // pred_fallthru
      _
    // Predicated region
    $region146: #{expert_forward.1} parent=1 // pred_check
      _
    $region147: #{expert_forward.1} parent=1 // pred_check_branch
      %1616 = sbr.rel (0) target = $region149
    $region148: #{expert_forward.1} parent=1 // pred_region
      %1617 = vsyncadd %s1513, 4096
    $region149: #{expert_forward.1} parent=1 // pred_fallthru
      _
    %v1618 = vld [vmem:[#allocation4] sm:$0xff]
    %v1619 = vld [vmem:[#allocation4 + $0x8] sm:$0xff]
    %v1620 = vld [vmem:[#allocation4 + $0x10] sm:$0xff]
    %v1621 = vld [vmem:[#allocation4 + $0x18] sm:$0xff]
    %v1622 = vld [vmem:[#allocation4 + $0x20] sm:$0xff]
    %v1623 = vld [vmem:[#allocation4 + $0x28] sm:$0xff]
    %v1624 = vld [vmem:[#allocation4 + $0x30] sm:$0xff]
    %v1625 = vld [vmem:[#allocation4 + $0x38] sm:$0xff]
    %v1626 = vld [vmem:[#allocation4 + $0x40] sm:$0xff]
    %v1627 = vld [vmem:[#allocation4 + $0x48] sm:$0xff]
    %v1628 = vld [vmem:[#allocation4 + $0x50] sm:$0xff]
    %v1629 = vld [vmem:[#allocation4 + $0x58] sm:$0xff]
    %v1630 = vld [vmem:[#allocation4 + $0x60] sm:$0xff]
    %v1631 = vld [vmem:[#allocation4 + $0x68] sm:$0xff]
    %v1632 = vld [vmem:[#allocation4 + $0x70] sm:$0xff]
    %v1633 = vld [vmem:[#allocation4 + $0x78] sm:$0xff]
    %v1634 = vld [vmem:[#allocation4 + $0x80] sm:$0xff]
    %v1635 = vld [vmem:[#allocation4 + $0x88] sm:$0xff]
    %v1636 = vld [vmem:[#allocation4 + $0x90] sm:$0xff]
    %v1637 = vld [vmem:[#allocation4 + $0x98] sm:$0xff]
    %v1638 = vld [vmem:[#allocation4 + $0xa0] sm:$0xff]
    %v1639 = vld [vmem:[#allocation4 + $0xa8] sm:$0xff]
    %v1640 = vld [vmem:[#allocation4 + $0xb0] sm:$0xff]
    %v1641 = vld [vmem:[#allocation4 + $0xb8] sm:$0xff]
    %v1642 = vld [vmem:[#allocation4 + $0xc0] sm:$0xff]
    %v1643 = vld [vmem:[#allocation4 + $0xc8] sm:$0xff]
    %v1644 = vld [vmem:[#allocation4 + $0xd0] sm:$0xff]
    %v1645 = vld [vmem:[#allocation4 + $0xd8] sm:$0xff]
    %v1646 = vld [vmem:[#allocation4 + $0xe0] sm:$0xff]
    %v1647 = vld [vmem:[#allocation4 + $0xe8] sm:$0xff]
    %v1648 = vld [vmem:[#allocation4 + $0xf0] sm:$0xff]
    %v1649 = vld [vmem:[#allocation4 + $0xf8] sm:$0xff]
    %v1650 = vld [vmem:[#allocation4 + $0x100] sm:$0xff]
    %v1651 = vld [vmem:[#allocation4 + $0x108] sm:$0xff]
    %v1652 = vld [vmem:[#allocation4 + $0x110] sm:$0xff]
    %v1653 = vld [vmem:[#allocation4 + $0x118] sm:$0xff]
    %v1654 = vld [vmem:[#allocation4 + $0x120] sm:$0xff]
    %v1655 = vld [vmem:[#allocation4 + $0x128] sm:$0xff]
    %v1656 = vld [vmem:[#allocation4 + $0x130] sm:$0xff]
    %v1657 = vld [vmem:[#allocation4 + $0x138] sm:$0xff]
    %v1658 = vld [vmem:[#allocation4 + $0x140] sm:$0xff]
    %v1659 = vld [vmem:[#allocation4 + $0x148] sm:$0xff]
    %v1660 = vld [vmem:[#allocation4 + $0x150] sm:$0xff]
    %v1661 = vld [vmem:[#allocation4 + $0x158] sm:$0xff]
    %v1662 = vld [vmem:[#allocation4 + $0x160] sm:$0xff]
    %v1663 = vld [vmem:[#allocation4 + $0x168] sm:$0xff]
    %v1664 = vld [vmem:[#allocation4 + $0x170] sm:$0xff]
    %v1665 = vld [vmem:[#allocation4 + $0x178] sm:$0xff]
    %v1666 = vld [vmem:[#allocation4 + $0x180] sm:$0xff]
    %v1667 = vld [vmem:[#allocation4 + $0x188] sm:$0xff]
    %v1668 = vld [vmem:[#allocation4 + $0x190] sm:$0xff]
    %v1669 = vld [vmem:[#allocation4 + $0x198] sm:$0xff]
    %v1670 = vld [vmem:[#allocation4 + $0x1a0] sm:$0xff]
    %v1671 = vld [vmem:[#allocation4 + $0x1a8] sm:$0xff]
    %v1672 = vld [vmem:[#allocation4 + $0x1b0] sm:$0xff]
    %v1673 = vld [vmem:[#allocation4 + $0x1b8] sm:$0xff]
    %v1674 = vld [vmem:[#allocation4 + $0x1c0] sm:$0xff]
    %v1675 = vld [vmem:[#allocation4 + $0x1c8] sm:$0xff]
    %v1676 = vld [vmem:[#allocation4 + $0x1d0] sm:$0xff]
    %v1677 = vld [vmem:[#allocation4 + $0x1d8] sm:$0xff]
    %v1678 = vld [vmem:[#allocation4 + $0x1e0] sm:$0xff]
    %v1679 = vld [vmem:[#allocation4 + $0x1e8] sm:$0xff]
    %v1680 = vld [vmem:[#allocation4 + $0x1f0] sm:$0xff]
    %v1681 = vld [vmem:[#allocation4 + $0x1f8] sm:$0xff]
    %v1682 = vld [vmem:[#allocation4 + $0x200] sm:$0xff]
    %v1683 = vld [vmem:[#allocation4 + $0x208] sm:$0xff]
    %v1684 = vld [vmem:[#allocation4 + $0x210] sm:$0xff]
    %v1685 = vld [vmem:[#allocation4 + $0x218] sm:$0xff]
    %v1686 = vld [vmem:[#allocation4 + $0x220] sm:$0xff]
    %v1687 = vld [vmem:[#allocation4 + $0x228] sm:$0xff]
    %v1688 = vld [vmem:[#allocation4 + $0x230] sm:$0xff]
    %v1689 = vld [vmem:[#allocation4 + $0x238] sm:$0xff]
    %v1690 = vld [vmem:[#allocation4 + $0x240] sm:$0xff]
    %v1691 = vld [vmem:[#allocation4 + $0x248] sm:$0xff]
    %v1692 = vld [vmem:[#allocation4 + $0x250] sm:$0xff]
    %v1693 = vld [vmem:[#allocation4 + $0x258] sm:$0xff]
    %v1694 = vld [vmem:[#allocation4 + $0x260] sm:$0xff]
    %v1695 = vld [vmem:[#allocation4 + $0x268] sm:$0xff]
    %v1696 = vld [vmem:[#allocation4 + $0x270] sm:$0xff]
    %v1697 = vld [vmem:[#allocation4 + $0x278] sm:$0xff]
    %v1698 = vld [vmem:[#allocation4 + $0x280] sm:$0xff]
    %v1699 = vld [vmem:[#allocation4 + $0x288] sm:$0xff]
    %v1700 = vld [vmem:[#allocation4 + $0x290] sm:$0xff]
    %v1701 = vld [vmem:[#allocation4 + $0x298] sm:$0xff]
    %v1702 = vld [vmem:[#allocation4 + $0x2a0] sm:$0xff]
    %v1703 = vld [vmem:[#allocation4 + $0x2a8] sm:$0xff]
    %v1704 = vld [vmem:[#allocation4 + $0x2b0] sm:$0xff]
    %v1705 = vld [vmem:[#allocation4 + $0x2b8] sm:$0xff]
    %v1706 = vld [vmem:[#allocation4 + $0x2c0] sm:$0xff]
    %v1707 = vld [vmem:[#allocation4 + $0x2c8] sm:$0xff]
    %v1708 = vld [vmem:[#allocation4 + $0x2d0] sm:$0xff]
    %v1709 = vld [vmem:[#allocation4 + $0x2d8] sm:$0xff]
    %v1710 = vld [vmem:[#allocation4 + $0x2e0] sm:$0xff]
    %v1711 = vld [vmem:[#allocation4 + $0x2e8] sm:$0xff]
    %v1712 = vld [vmem:[#allocation4 + $0x2f0] sm:$0xff]
    %v1713 = vld [vmem:[#allocation4 + $0x2f8] sm:$0xff]
    %v1714 = vld [vmem:[#allocation4 + $0x300] sm:$0xff]
    %v1715 = vld [vmem:[#allocation4 + $0x308] sm:$0xff]
    %v1716 = vld [vmem:[#allocation4 + $0x310] sm:$0xff]
    %v1717 = vld [vmem:[#allocation4 + $0x318] sm:$0xff]
    %v1718 = vld [vmem:[#allocation4 + $0x320] sm:$0xff]
    %v1719 = vld [vmem:[#allocation4 + $0x328] sm:$0xff]
    %v1720 = vld [vmem:[#allocation4 + $0x330] sm:$0xff]
    %v1721 = vld [vmem:[#allocation4 + $0x338] sm:$0xff]
    %v1722 = vld [vmem:[#allocation4 + $0x340] sm:$0xff]
    %v1723 = vld [vmem:[#allocation4 + $0x348] sm:$0xff]
    %v1724 = vld [vmem:[#allocation4 + $0x350] sm:$0xff]
    %v1725 = vld [vmem:[#allocation4 + $0x358] sm:$0xff]
    %v1726 = vld [vmem:[#allocation4 + $0x360] sm:$0xff]
    %v1727 = vld [vmem:[#allocation4 + $0x368] sm:$0xff]
    %v1728 = vld [vmem:[#allocation4 + $0x370] sm:$0xff]
    %v1729 = vld [vmem:[#allocation4 + $0x378] sm:$0xff]
    %v1730 = vld [vmem:[#allocation4 + $0x380] sm:$0xff]
    %v1731 = vld [vmem:[#allocation4 + $0x388] sm:$0xff]
    %v1732 = vld [vmem:[#allocation4 + $0x390] sm:$0xff]
    %v1733 = vld [vmem:[#allocation4 + $0x398] sm:$0xff]
    %v1734 = vld [vmem:[#allocation4 + $0x3a0] sm:$0xff]
    %v1735 = vld [vmem:[#allocation4 + $0x3a8] sm:$0xff]
    %v1736 = vld [vmem:[#allocation4 + $0x3b0] sm:$0xff]
    %v1737 = vld [vmem:[#allocation4 + $0x3b8] sm:$0xff]
    %v1738 = vld [vmem:[#allocation4 + $0x3c0] sm:$0xff]
    %v1739 = vld [vmem:[#allocation4 + $0x3c8] sm:$0xff]
    %v1740 = vld [vmem:[#allocation4 + $0x3d0] sm:$0xff]
    %v1741 = vld [vmem:[#allocation4 + $0x3d8] sm:$0xff]
    %v1742 = vld [vmem:[#allocation4 + $0x3e0] sm:$0xff]
    %v1743 = vld [vmem:[#allocation4 + $0x3e8] sm:$0xff]
    %v1744 = vld [vmem:[#allocation4 + $0x3f0] sm:$0xff]
    %v1745 = vld [vmem:[#allocation4 + $0x3f8] sm:$0xff]
    %1746 = vmatprep.subr.bf16.mxu0 %v1619
    %1747 = vmatpush1.bf16.msra.mxu0 %v1618
    %1748 = vmatprep.subr.bf16.mxu0 %v1623
    %1749 = vmatpush1.bf16.msra.mxu0 %v1622
    %1750 = vmatprep.subr.bf16.mxu0 %v1627
    %1751 = vmatpush1.bf16.msra.mxu0 %v1626
    %1752 = vmatprep.subr.bf16.mxu0 %v1631
    %1753 = vmatpush1.bf16.msra.mxu0 %v1630
    %1754 = vmatprep.subr.bf16.mxu0 %v1635
    %1755 = vmatpush1.bf16.msra.mxu0 %v1634
    %1756 = vmatprep.subr.bf16.mxu0 %v1639
    %1757 = vmatpush1.bf16.msra.mxu0 %v1638
    %1758 = vmatprep.subr.bf16.mxu0 %v1643
    %1759 = vmatpush1.bf16.msra.mxu0 %v1642
    %1760 = vmatprep.subr.bf16.mxu0 %v1647
    %1761 = vmatpush1.bf16.msra.mxu0 %v1646
    %1762 = vmatprep.subr.bf16.mxu0 %v1651
    %1763 = vmatpush1.bf16.msra.mxu0 %v1650
    %1764 = vmatprep.subr.bf16.mxu0 %v1655
    %1765 = vmatpush1.bf16.msra.mxu0 %v1654
    %1766 = vmatprep.subr.bf16.mxu0 %v1659
    %1767 = vmatpush1.bf16.msra.mxu0 %v1658
    %1768 = vmatprep.subr.bf16.mxu0 %v1663
    %1769 = vmatpush1.bf16.msra.mxu0 %v1662
    %1770 = vmatprep.subr.bf16.mxu0 %v1667
    %1771 = vmatpush1.bf16.msra.mxu0 %v1666
    %1772 = vmatprep.subr.bf16.mxu0 %v1671
    %1773 = vmatpush1.bf16.msra.mxu0 %v1670
    %1774 = vmatprep.subr.bf16.mxu0 %v1675
    %1775 = vmatpush1.bf16.msra.mxu0 %v1674
    %1776 = vmatprep.subr.bf16.mxu0 %v1679
    %1777 = vmatpush1.bf16.msra.mxu0 %v1678
    %1778 = vmatprep.mubr.bf16.mxu0 %v1504
    %1779 = vmatmul.mubr.bf16.gmra.mrb[0].mxu0 %v1503
    %v1780 = vpop.f32.mrb[0].mxu0
    %v1781 = vadd.f32 0.0, %v1780
    %v1782 = vpop.f32.mrb[0].mxu0
    %v1783 = vadd.f32 0.0, %v1782
    %v1784 = vpop.f32.mrb[0].mxu0
    %v1785 = vpop.f32.mrb[0].mxu0
    %1786 = vdwg.mxu0
    %1787 = vmatprep.subr.bf16.mxu0 %v1683
    %1788 = vmatpush1.bf16.msra.mxu0 %v1682
    %1789 = vmatprep.subr.bf16.mxu0 %v1687
    %1790 = vmatpush1.bf16.msra.mxu0 %v1686
    %1791 = vmatprep.subr.bf16.mxu0 %v1691
    %1792 = vmatpush1.bf16.msra.mxu0 %v1690
    %1793 = vmatprep.subr.bf16.mxu0 %v1695
    %1794 = vmatpush1.bf16.msra.mxu0 %v1694
    %1795 = vmatprep.subr.bf16.mxu0 %v1699
    %1796 = vmatpush1.bf16.msra.mxu0 %v1698
    %1797 = vmatprep.subr.bf16.mxu0 %v1703
    %1798 = vmatpush1.bf16.msra.mxu0 %v1702
    %1799 = vmatprep.subr.bf16.mxu0 %v1707
    %1800 = vmatpush1.bf16.msra.mxu0 %v1706
    %1801 = vmatprep.subr.bf16.mxu0 %v1711
    %1802 = vmatpush1.bf16.msra.mxu0 %v1710
    %1803 = vmatprep.subr.bf16.mxu0 %v1715
    %1804 = vmatpush1.bf16.msra.mxu0 %v1714
    %1805 = vmatprep.subr.bf16.mxu0 %v1719
    %1806 = vmatpush1.bf16.msra.mxu0 %v1718
    %1807 = vmatprep.subr.bf16.mxu0 %v1723
    %1808 = vmatpush1.bf16.msra.mxu0 %v1722
    %1809 = vmatprep.subr.bf16.mxu0 %v1727
    %1810 = vmatpush1.bf16.msra.mxu0 %v1726
    %1811 = vmatprep.subr.bf16.mxu0 %v1731
    %1812 = vmatpush1.bf16.msra.mxu0 %v1730
    %1813 = vmatprep.subr.bf16.mxu0 %v1735
    %1814 = vmatpush1.bf16.msra.mxu0 %v1734
    %1815 = vmatprep.subr.bf16.mxu0 %v1739
    %1816 = vmatpush1.bf16.msra.mxu0 %v1738
    %1817 = vmatprep.subr.bf16.mxu0 %v1743
    %1818 = vmatpush1.bf16.msra.mxu0 %v1742
    %1819 = vmatprep.mubr.bf16.mxu0 %v1506
    %1820 = vmatmul.mubr.bf16.gmra.mrb[0].mxu0 %v1505
    %v1821 = vpop.f32.mrb[0].mxu0
    %v1822 = vadd.f32 %v1781, %v1821
    %v1823 = vpop.f32.mrb[0].mxu0
    %v1824 = vadd.f32 %v1783, %v1823
    %v1825 = vpop.f32.mrb[0].mxu0
    %v1826 = vpop.f32.mrb[0].mxu0
    %1827 = vdwg.mxu0
    %1828 = vmatprep.subr.bf16.mxu0 %v1621
    %1829 = vmatpush1.bf16.msra.mxu0 %v1620
    %1830 = vmatprep.subr.bf16.mxu0 %v1625
    %1831 = vmatpush1.bf16.msra.mxu0 %v1624
    %1832 = vmatprep.subr.bf16.mxu0 %v1629
    %1833 = vmatpush1.bf16.msra.mxu0 %v1628
    %1834 = vmatprep.subr.bf16.mxu0 %v1633
    %1835 = vmatpush1.bf16.msra.mxu0 %v1632
    %1836 = vmatprep.subr.bf16.mxu0 %v1637
    %1837 = vmatpush1.bf16.msra.mxu0 %v1636
    %1838 = vmatprep.subr.bf16.mxu0 %v1641
    %1839 = vmatpush1.bf16.msra.mxu0 %v1640
    %1840 = vmatprep.subr.bf16.mxu0 %v1645
    %1841 = vmatpush1.bf16.msra.mxu0 %v1644
    %1842 = vmatprep.subr.bf16.mxu0 %v1649
    %1843 = vmatpush1.bf16.msra.mxu0 %v1648
    %1844 = vmatprep.subr.bf16.mxu0 %v1653
    %1845 = vmatpush1.bf16.msra.mxu0 %v1652
    %1846 = vmatprep.subr.bf16.mxu0 %v1657
    %1847 = vmatpush1.bf16.msra.mxu0 %v1656
    %1848 = vmatprep.subr.bf16.mxu0 %v1661
    %1849 = vmatpush1.bf16.msra.mxu0 %v1660
    %1850 = vmatprep.subr.bf16.mxu0 %v1665
    %1851 = vmatpush1.bf16.msra.mxu0 %v1664
    %1852 = vmatprep.subr.bf16.mxu0 %v1669
    %1853 = vmatpush1.bf16.msra.mxu0 %v1668
    %1854 = vmatprep.subr.bf16.mxu0 %v1673
    %1855 = vmatpush1.bf16.msra.mxu0 %v1672
    %1856 = vmatprep.subr.bf16.mxu0 %v1677
    %1857 = vmatpush1.bf16.msra.mxu0 %v1676
    %1858 = vmatprep.subr.bf16.mxu0 %v1681
    %1859 = vmatpush1.bf16.msra.mxu0 %v1680
    %1860 = vmatprep.mubr.bf16.mxu0 %v1504
    %1861 = vmatmul.mubr.bf16.gmra.mrb[0].mxu0 %v1503
    %v1862 = vpop.f32.mrb[0].mxu0
    %v1863 = vadd.f32 0.0, %v1862
    %v1864 = vpop.f32.mrb[0].mxu0
    %v1865 = vadd.f32 0.0, %v1864
    %v1866 = vpop.f32.mrb[0].mxu0
    %v1867 = vpop.f32.mrb[0].mxu0
    %1868 = vdwg.mxu0
    %1869 = vmatprep.subr.bf16.mxu0 %v1685
    %1870 = vmatpush1.bf16.msra.mxu0 %v1684
    %1871 = vmatprep.subr.bf16.mxu0 %v1689
    %1872 = vmatpush1.bf16.msra.mxu0 %v1688
    %1873 = vmatprep.subr.bf16.mxu0 %v1693
    %1874 = vmatpush1.bf16.msra.mxu0 %v1692
    %1875 = vmatprep.subr.bf16.mxu0 %v1697
    %1876 = vmatpush1.bf16.msra.mxu0 %v1696
    %1877 = vmatprep.subr.bf16.mxu0 %v1701
    %1878 = vmatpush1.bf16.msra.mxu0 %v1700
    %1879 = vmatprep.subr.bf16.mxu0 %v1705
    %1880 = vmatpush1.bf16.msra.mxu0 %v1704
    %1881 = vmatprep.subr.bf16.mxu0 %v1709
    %1882 = vmatpush1.bf16.msra.mxu0 %v1708
    %1883 = vmatprep.subr.bf16.mxu0 %v1713
    %1884 = vmatpush1.bf16.msra.mxu0 %v1712
    %1885 = vmatprep.subr.bf16.mxu0 %v1717
    %1886 = vmatpush1.bf16.msra.mxu0 %v1716
    %1887 = vmatprep.subr.bf16.mxu0 %v1721
    %1888 = vmatpush1.bf16.msra.mxu0 %v1720
    %1889 = vmatprep.subr.bf16.mxu0 %v1725
    %1890 = vmatpush1.bf16.msra.mxu0 %v1724
    %1891 = vmatprep.subr.bf16.mxu0 %v1729
    %1892 = vmatpush1.bf16.msra.mxu0 %v1728
    %1893 = vmatprep.subr.bf16.mxu0 %v1733
    %1894 = vmatpush1.bf16.msra.mxu0 %v1732
    %1895 = vmatprep.subr.bf16.mxu0 %v1737
    %1896 = vmatpush1.bf16.msra.mxu0 %v1736
    %1897 = vmatprep.subr.bf16.mxu0 %v1741
    %1898 = vmatpush1.bf16.msra.mxu0 %v1740
    %1899 = vmatprep.subr.bf16.mxu0 %v1745
    %1900 = vmatpush1.bf16.msra.mxu0 %v1744
    %1901 = vmatprep.mubr.bf16.mxu0 %v1506
    %1902 = vmatmul.mubr.bf16.gmra.mrb[0].mxu0 %v1505
    %v1903 = vpop.f32.mrb[0].mxu0
    %v1904 = vadd.f32 %v1863, %v1903
    %v1905 = vpop.f32.mrb[0].mxu0
    %v1906 = vadd.f32 %v1865, %v1905
    %v1907 = vpop.f32.mrb[0].mxu0
    %v1908 = vpop.f32.mrb[0].mxu0
    %1909 = vdwg.mxu0
    %v1910 = vrot.slane %v1822, 4
    %v1911 = vadd.f32 %v1822, %v1910
    %v1912 = vrot.slane %v1911, 2
    %v1913 = vadd.f32 %v1911, %v1912
    %v1914 = vrot.slane %v1913, 1
    %v1915 = vadd.f32 %v1913, %v1914
    %v1916 = vrot.slane %v1824, 4
    %v1917 = vadd.f32 %v1824, %v1916
    %v1918 = vrot.slane %v1917, 2
    %v1919 = vadd.f32 %v1917, %v1918
    %v1920 = vrot.slane %v1919, 1
    %v1921 = vadd.f32 %v1919, %v1920
    %v1922 = vrot.slane %v1904, 4
    %v1923 = vadd.f32 %v1904, %v1922
    %v1924 = vrot.slane %v1923, 2
    %v1925 = vadd.f32 %v1923, %v1924
    %v1926 = vrot.slane %v1925, 1
    %v1927 = vadd.f32 %v1925, %v1926
    %v1928 = vrot.slane %v1906, 4
    %v1929 = vadd.f32 %v1906, %v1928
    %v1930 = vrot.slane %v1929, 2
    %v1931 = vadd.f32 %v1929, %v1930
    %v1932 = vrot.slane %v1931, 1
    %v1933 = vadd.f32 %v1931, %v1932
    %v1934 = vmul.f32 %v1822, %v1822
    %v1935 = vmul.f32 %v1824, %v1824
    %v1936 = vmul.f32 %v1904, %v1904
    %v1937 = vmul.f32 %v1906, %v1906
    %v1938 = vrot.slane %v1934, 4
    %v1939 = vadd.f32 %v1934, %v1938
    %v1940 = vrot.slane %v1939, 2
    %v1941 = vadd.f32 %v1939, %v1940
    %v1942 = vrot.slane %v1941, 1
    %v1943 = vadd.f32 %v1941, %v1942
    %v1944 = vrot.slane %v1935, 4
    %v1945 = vadd.f32 %v1935, %v1944
    %v1946 = vrot.slane %v1945, 2
    %v1947 = vadd.f32 %v1945, %v1946
    %v1948 = vrot.slane %v1947, 1
    %v1949 = vadd.f32 %v1947, %v1948
    %v1950 = vrot.slane %v1936, 4
    %v1951 = vadd.f32 %v1936, %v1950
    %v1952 = vrot.slane %v1951, 2
    %v1953 = vadd.f32 %v1951, %v1952
    %v1954 = vrot.slane %v1953, 1
    %v1955 = vadd.f32 %v1953, %v1954
    %v1956 = vrot.slane %v1937, 4
    %v1957 = vadd.f32 %v1937, %v1956
    %v1958 = vrot.slane %v1957, 2
    %v1959 = vadd.f32 %v1957, %v1958
    %v1960 = vrot.slane %v1959, 1
    %v1961 = vadd.f32 %v1959, %v1960
    %v1962 = vmul.f32 %v1915, 0.125
    %v1963 = vmul.f32 %v1921, 0.125
    %v1964 = vmul.f32 %v1927, 0.125
    %v1965 = vmul.f32 %v1933, 0.125
    %v1966 = vmul.f32 %v1943, 0.125
    %v1967 = vmul.f32 %v1949, 0.125
    %v1968 = vmul.f32 %v1955, 0.125
    %v1969 = vmul.f32 %v1961, 0.125
    %v1970 = vmul.f32 %v1962, %v1962
    %v1971 = vmul.f32 %v1963, %v1963
    %v1972 = vmul.f32 %v1964, %v1964
    %v1973 = vmul.f32 %v1965, %v1965
    %v1974 = vsub.f32 %v1966, %v1970
    %v1975 = vsub.f32 %v1967, %v1971
    %v1976 = vsub.f32 %v1968, %v1972
    %v1977 = vsub.f32 %v1969, %v1973
    %v1978 = vmax.f32 %v1974, 0.0
    %v1979 = vmax.f32 %v1975, 0.0
    %v1980 = vmax.f32 %v1976, 0.0
    %v1981 = vmax.f32 %v1977, 0.0
    %v1982 = vadd.f32 %v1978, 0.8
    %v1983 = vadd.f32 %v1979, 0.8
    %v1984 = vadd.f32 %v1980, 0.8
    %v1985 = vadd.f32 %v1981, 0.8
    %v1986 = vrsqrt.pop %v1982
    %v1987 = vrsqrt.pop %v1983
    %v1988 = vrsqrt.pop %v1984
    %v1989 = vrsqrt.pop %v1985
    %v1994 = vcombine.low %v1986, %v1987
    %v1995 = vcombine.low %v1988, %v1989
    %v1997 = vunpack.c.l.s4 1966171168
    %v1998 = vunpack.c.0.s8 %v1997
    %v1999 = vlaneseq
    %v2000 = vshrl.u32 %v1999, 7
    %v2001 = vsub.s32 %v1998, %v2000
    %v2002 = vrot.slane %v1994, %v2001
    %v2004 = vunpack.c.l.s4 1966171168
    %v2005 = vunpack.c.0.s8 %v2004
    %v2006 = vlaneseq
    %v2007 = vshrl.u32 %v2006, 7
    %v2008 = vsub.s32 %v2005, %v2007
    %v2009 = vrot.slane %v1995, %v2008
    %v2010 = vcombine.low %v2002, %v2009
    %v2012 = vunpack.c.l.s4 1966171168
    %v2013 = vunpack.c.0.s8 %v2012
    %v2014 = vlaneseq
    %v2015 = vshrl.u32 %v2014, 7
    %v2016 = vsub.s32 %v2013, %v2015
    %v2017 = vrot.slane %v2010, %v2016
    %v2019 = vmul.f32 %v1507, %v2017
    %v2021 = vlaneseq
    %v2022 = vshrl.u32 %v2021, 7
    %v2023 = vsub.s32 0, %v2022
    %v2024 = vrot.slane %v2019, %v2023
    %v2025 = vlaneseq
    %v2026 = vshrl.u32 %v2025, 7
    %v2027 = vsub.s32 1, %v2026
    %v2028 = vrot.slane %v2019, %v2027
    %v2029 = vlaneseq
    %v2030 = vshrl.u32 %v2029, 7
    %v2031 = vsub.s32 2, %v2030
    %v2032 = vrot.slane %v2019, %v2031
    %v2033 = vlaneseq
    %v2034 = vshrl.u32 %v2033, 7
    %v2035 = vsub.s32 3, %v2034
    %v2036 = vrot.slane %v2019, %v2035
    %v2041 = vmul.f32 %v1962, %v2024
    %v2042 = vmul.f32 %v1963, %v2028
    %v2043 = vmul.f32 %v1964, %v2032
    %v2044 = vmul.f32 %v1965, %v2036
    %v2049 = vcombine.low %v2041, %v2042
    %v2050 = vcombine.low %v2043, %v2044
    %v2052 = vunpack.c.l.s4 1966171168
    %v2053 = vunpack.c.0.s8 %v2052
    %v2054 = vlaneseq
    %v2055 = vshrl.u32 %v2054, 7
    %v2056 = vsub.s32 %v2053, %v2055
    %v2057 = vrot.slane %v2049, %v2056
    %v2059 = vunpack.c.l.s4 1966171168
    %v2060 = vunpack.c.0.s8 %v2059
    %v2061 = vlaneseq
    %v2062 = vshrl.u32 %v2061, 7
    %v2063 = vsub.s32 %v2060, %v2062
    %v2064 = vrot.slane %v2050, %v2063
    %v2065 = vcombine.low %v2057, %v2064
    %v2067 = vunpack.c.l.s4 1966171168
    %v2068 = vunpack.c.0.s8 %v2067
    %v2069 = vlaneseq
    %v2070 = vshrl.u32 %v2069, 7
    %v2071 = vsub.s32 %v2068, %v2070
    %v2072 = vrot.slane %v2065, %v2071
    %v2074 = vsub.f32 %v1508, %v2072
    %v2075 = vmul.f32 %v1822, %v2024
    %v2076 = vmul.f32 %v1824, %v2028
    %v2077 = vmul.f32 %v1904, %v2032
    %v2078 = vmul.f32 %v1906, %v2036
    %v2080 = vlaneseq
    %v2081 = vshrl.u32 %v2080, 7
    %v2082 = vsub.s32 0, %v2081
    %v2083 = vrot.slane %v2074, %v2082
    %v2084 = vlaneseq
    %v2085 = vshrl.u32 %v2084, 7
    %v2086 = vsub.s32 1, %v2085
    %v2087 = vrot.slane %v2074, %v2086
    %v2088 = vlaneseq
    %v2089 = vshrl.u32 %v2088, 7
    %v2090 = vsub.s32 2, %v2089
    %v2091 = vrot.slane %v2074, %v2090
    %v2092 = vlaneseq
    %v2093 = vshrl.u32 %v2092, 7
    %v2094 = vsub.s32 3, %v2093
    %v2095 = vrot.slane %v2074, %v2094
    %v2100 = vadd.f32 %v2075, %v2083
    %v2101 = vadd.f32 %v2076, %v2087
    %v2102 = vadd.f32 %v2077, %v2091
    %v2103 = vadd.f32 %v2078, %v2095
    %vm2104 = vcmp.gt.f32.partialorder %v2100, 0.0
    %vm2105 = vcmp.gt.f32.partialorder %v2101, 0.0
    %vm2106 = vcmp.gt.f32.partialorder %v2102, 0.0
    %vm2107 = vcmp.gt.f32.partialorder %v2103, 0.0
    %v2108 = vmul.f32 %v2100, 0.2
    %v2109 = vmul.f32 %v2101, 0.2
    %v2110 = vmul.f32 %v2102, 0.2
    %v2111 = vmul.f32 %v2103, 0.2
    %v2112 = vsel %vm2104, %v2100, %v2108
    %v2113 = vsel %vm2105, %v2101, %v2109
    %v2114 = vsel %vm2106, %v2102, %v2110
    %v2115 = vsel %vm2107, %v2103, %v2111
    %v2116 = vpack.c.bf16 %v2112, %v2112
    %v2117 = vpack.c.bf16 %v2113, %v2113
    %v2118 = vpack.c.bf16 %v2114, %v2114
    %v2119 = vpack.c.bf16 %v2115, %v2115
    %s2120 = sshll.u32 %s1510, 4
    %2121 = dma.done %s816, %s2120
    %s2122 = scalar_lea.vmem %s12, 256
    %s2123 = scalar_lea.vmem [#allocation5], 256
    %s2124 = scalar_lea.sflag [#allocation6], 5
    %p2126 = scmp.lt.u32.totalorder 256, 8
    %p2127 = pneg %p2126
    // Predicated region
    $region150: #{expert_forward.1} parent=1 // pred_check
      _
    $region151: #{expert_forward.1} parent=1 // pred_check_branch
      %2129 = sbr.rel (%p2126) target = $region153
    $region152: #{expert_forward.1} parent=1 // pred_region
      %s2144 = sand.u32 256, 7
      %p2145 = scmp.eq.s32.totalorder %s2144, 0
      // Predicated region
      $region165: #{expert_forward.1} parent=152 // pred_check
        %p2146 = pneg %p2145
      $region166: #{expert_forward.1} parent=152 // pred_check_branch
        %2148 = sbr.rel (%p2146) target = $region168
      $region167: #{expert_forward.1} parent=152 // pred_region
        loop: start=0, step=1, limit=1
        $region169: #{expert_forward.1} parent=167 // loop_pre_header
          _
        $region170: #{expert_forward.1} parent=167 // loop_header
          %s2150 = sphi 0, %s2154
          %p2151 = scmp.ge.s32.totalorder %s2150, 1
          %s2155 = sphi %s2122, %s2122
          %s2156 = sphi %s2123, %s2123
        $region171: #{expert_forward.1} parent=167 // loop_header_branch
          %2153 = sbr.rel (%p2151) target = $region175
        $region172: #{expert_forward.1} parent=167 // loop_body
          %v2157 = vld [vmem:[%s2155] sm:$0xff]
          %2158 = vst [vmem:[%s2156] sm:$0xff] %v2157
          %v2159 = vld [vmem:[%s2155 + $0x8] sm:$0xff]
          %2160 = vst [vmem:[%s2156 + $0x8] sm:$0xff] %v2159
          %v2161 = vld [vmem:[%s2155 + $0x10] sm:$0xff]
          %2162 = vst [vmem:[%s2156 + $0x10] sm:$0xff] %v2161
          %v2163 = vld [vmem:[%s2155 + $0x18] sm:$0xff]
          %2164 = vst [vmem:[%s2156 + $0x18] sm:$0xff] %v2163
          %v2165 = vld [vmem:[%s2155 + $0x20] sm:$0xff]
          %2166 = vst [vmem:[%s2156 + $0x20] sm:$0xff] %v2165
          %v2167 = vld [vmem:[%s2155 + $0x28] sm:$0xff]
          %2168 = vst [vmem:[%s2156 + $0x28] sm:$0xff] %v2167
          %v2169 = vld [vmem:[%s2155 + $0x30] sm:$0xff]
          %2170 = vst [vmem:[%s2156 + $0x30] sm:$0xff] %v2169
          %v2171 = vld [vmem:[%s2155 + $0x38] sm:$0xff]
          %2172 = vst [vmem:[%s2156 + $0x38] sm:$0xff] %v2171
          %v2173 = vld [vmem:[%s2155 + $0x40] sm:$0xff]
          %2174 = vst [vmem:[%s2156 + $0x40] sm:$0xff] %v2173
          %v2175 = vld [vmem:[%s2155 + $0x48] sm:$0xff]
          %2176 = vst [vmem:[%s2156 + $0x48] sm:$0xff] %v2175
          %v2177 = vld [vmem:[%s2155 + $0x50] sm:$0xff]
          %2178 = vst [vmem:[%s2156 + $0x50] sm:$0xff] %v2177
          %v2179 = vld [vmem:[%s2155 + $0x58] sm:$0xff]
          %2180 = vst [vmem:[%s2156 + $0x58] sm:$0xff] %v2179
          %v2181 = vld [vmem:[%s2155 + $0x60] sm:$0xff]
          %2182 = vst [vmem:[%s2156 + $0x60] sm:$0xff] %v2181
          %v2183 = vld [vmem:[%s2155 + $0x68] sm:$0xff]
          %2184 = vst [vmem:[%s2156 + $0x68] sm:$0xff] %v2183
          %v2185 = vld [vmem:[%s2155 + $0x70] sm:$0xff]
          %2186 = vst [vmem:[%s2156 + $0x70] sm:$0xff] %v2185
          %v2187 = vld [vmem:[%s2155 + $0x78] sm:$0xff]
          %2188 = vst [vmem:[%s2156 + $0x78] sm:$0xff] %v2187
          %v2189 = vld [vmem:[%s2155 + $0x80] sm:$0xff]
          %2190 = vst [vmem:[%s2156 + $0x80] sm:$0xff] %v2189
          %v2191 = vld [vmem:[%s2155 + $0x88] sm:$0xff]
          %2192 = vst [vmem:[%s2156 + $0x88] sm:$0xff] %v2191
          %v2193 = vld [vmem:[%s2155 + $0x90] sm:$0xff]
          %2194 = vst [vmem:[%s2156 + $0x90] sm:$0xff] %v2193
          %v2195 = vld [vmem:[%s2155 + $0x98] sm:$0xff]
          %2196 = vst [vmem:[%s2156 + $0x98] sm:$0xff] %v2195
          %v2197 = vld [vmem:[%s2155 + $0xa0] sm:$0xff]
          %2198 = vst [vmem:[%s2156 + $0xa0] sm:$0xff] %v2197
          %v2199 = vld [vmem:[%s2155 + $0xa8] sm:$0xff]
          %2200 = vst [vmem:[%s2156 + $0xa8] sm:$0xff] %v2199
          %v2201 = vld [vmem:[%s2155 + $0xb0] sm:$0xff]
          %2202 = vst [vmem:[%s2156 + $0xb0] sm:$0xff] %v2201
          %v2203 = vld [vmem:[%s2155 + $0xb8] sm:$0xff]
          %2204 = vst [vmem:[%s2156 + $0xb8] sm:$0xff] %v2203
          %v2205 = vld [vmem:[%s2155 + $0xc0] sm:$0xff]
          %2206 = vst [vmem:[%s2156 + $0xc0] sm:$0xff] %v2205
          %v2207 = vld [vmem:[%s2155 + $0xc8] sm:$0xff]
          %2208 = vst [vmem:[%s2156 + $0xc8] sm:$0xff] %v2207
          %v2209 = vld [vmem:[%s2155 + $0xd0] sm:$0xff]
          %2210 = vst [vmem:[%s2156 + $0xd0] sm:$0xff] %v2209
          %v2211 = vld [vmem:[%s2155 + $0xd8] sm:$0xff]
          %2212 = vst [vmem:[%s2156 + $0xd8] sm:$0xff] %v2211
          %v2213 = vld [vmem:[%s2155 + $0xe0] sm:$0xff]
          %2214 = vst [vmem:[%s2156 + $0xe0] sm:$0xff] %v2213
          %v2215 = vld [vmem:[%s2155 + $0xe8] sm:$0xff]
          %2216 = vst [vmem:[%s2156 + $0xe8] sm:$0xff] %v2215
          %v2217 = vld [vmem:[%s2155 + $0xf0] sm:$0xff]
          %2218 = vst [vmem:[%s2156 + $0xf0] sm:$0xff] %v2217
          %v2219 = vld [vmem:[%s2155 + $0xf8] sm:$0xff]
          %2220 = vst [vmem:[%s2156 + $0xf8] sm:$0xff] %v2219
        $region173: #{expert_forward.1} parent=167 // loop_footer
          %s2154 = sadd.s32 1, %s2150
        $region174: #{expert_forward.1} parent=167 // loop_footer_branch
          %2149 = sbr.rel target = $region170
        $region175: #{expert_forward.1} parent=167 // loop_exit
          _
      $region168: #{expert_forward.1} parent=152 // pred_fallthru
        _
      %p2221 = pneg %p2145
      // Predicated region
      $region176: #{expert_forward.1} parent=152 // pred_check
        _
      $region177: #{expert_forward.1} parent=152 // pred_check_branch
        %2223 = sbr.rel (%p2145) target = $region179
      $region178: #{expert_forward.1} parent=152 // pred_region
        %s2224 = sand.u32 256, 7
      $region179: #{expert_forward.1} parent=152 // pred_fallthru
        _
    $region153: #{expert_forward.1} parent=1 // pred_fallthru
      _
    // Predicated region
    $region154: #{expert_forward.1} parent=1 // pred_check
      %p2130 = pneg %p2126
    $region155: #{expert_forward.1} parent=1 // pred_check_branch
      %2132 = sbr.rel (%p2130) target = $region157
    $region156: #{expert_forward.1} parent=1 // pred_region
      %s2133 = sshllo.u32 0, 256
      loop: start=0, step=1, limit=1
      $region158: #{expert_forward.1} parent=156 // loop_pre_header
        _
      $region159: #{expert_forward.1} parent=156 // loop_header
        %s2135 = sphi 0, %s2139
        %p2136 = scmp.ge.s32.totalorder %s2135, 1
        %s2140 = sphi %s2122, %s2122
        %s2141 = sphi %s2123, %s2123
      $region160: #{expert_forward.1} parent=156 // loop_header_branch
        %2138 = sbr.rel (%p2136) target = $region164
      $region161: #{expert_forward.1} parent=156 // loop_body
        %v2142 = vld [vmem:[%s2140] sm:%s2133]
        %2143 = vst [vmem:[%s2141] sm:%s2133] %v2142
      $region162: #{expert_forward.1} parent=156 // loop_footer
        %s2139 = sadd.s32 1, %s2135
      $region163: #{expert_forward.1} parent=156 // loop_footer_branch
        %2134 = sbr.rel target = $region159
      $region164: #{expert_forward.1} parent=156 // loop_exit
        _
    $region157: #{expert_forward.1} parent=1 // pred_fallthru
      _
    // Predicated region
    $region180: #{expert_forward.1} parent=1 // pred_check
      _
    $region181: #{expert_forward.1} parent=1 // pred_check_branch
      %2227 = sbr.rel (0) target = $region183
    $region182: #{expert_forward.1} parent=1 // pred_region
      %2228 = vsyncadd %s2124, 4096
    $region183: #{expert_forward.1} parent=1 // pred_fallthru
      _
    %v2229 = vld [vmem:[%s815] sm:$0xff]
    %v2230 = vld [vmem:[%s815 + $0x8] sm:$0xff]
    %v2231 = vld [vmem:[%s815 + $0x10] sm:$0xff]
    %v2232 = vld [vmem:[%s815 + $0x18] sm:$0xff]
    %v2233 = vld [vmem:[%s815 + $0x20] sm:$0xff]
    %v2234 = vld [vmem:[%s815 + $0x28] sm:$0xff]
    %v2235 = vld [vmem:[%s815 + $0x30] sm:$0xff]
    %v2236 = vld [vmem:[%s815 + $0x38] sm:$0xff]
    %v2237 = vld [vmem:[%s815 + $0x40] sm:$0xff]
    %v2238 = vld [vmem:[%s815 + $0x48] sm:$0xff]
    %v2239 = vld [vmem:[%s815 + $0x50] sm:$0xff]
    %v2240 = vld [vmem:[%s815 + $0x58] sm:$0xff]
    %v2241 = vld [vmem:[%s815 + $0x60] sm:$0xff]
    %v2242 = vld [vmem:[%s815 + $0x68] sm:$0xff]
    %v2243 = vld [vmem:[%s815 + $0x70] sm:$0xff]
    %v2244 = vld [vmem:[%s815 + $0x78] sm:$0xff]
    %v2245 = vld [vmem:[%s815 + $0x80] sm:$0xff]
    %v2246 = vld [vmem:[%s815 + $0x88] sm:$0xff]
    %v2247 = vld [vmem:[%s815 + $0x90] sm:$0xff]
    %v2248 = vld [vmem:[%s815 + $0x98] sm:$0xff]
    %v2249 = vld [vmem:[%s815 + $0xa0] sm:$0xff]
    %v2250 = vld [vmem:[%s815 + $0xa8] sm:$0xff]
    %v2251 = vld [vmem:[%s815 + $0xb0] sm:$0xff]
    %v2252 = vld [vmem:[%s815 + $0xb8] sm:$0xff]
    %v2253 = vld [vmem:[%s815 + $0xc0] sm:$0xff]
    %v2254 = vld [vmem:[%s815 + $0xc8] sm:$0xff]
    %v2255 = vld [vmem:[%s815 + $0xd0] sm:$0xff]
    %v2256 = vld [vmem:[%s815 + $0xd8] sm:$0xff]
    %v2257 = vld [vmem:[%s815 + $0xe0] sm:$0xff]
    %v2258 = vld [vmem:[%s815 + $0xe8] sm:$0xff]
    %v2259 = vld [vmem:[%s815 + $0xf0] sm:$0xff]
    %v2260 = vld [vmem:[%s815 + $0xf8] sm:$0xff]
    %v2261 = vld [vmem:[%s815 + $0x100] sm:$0xff]
    %v2262 = vld [vmem:[%s815 + $0x108] sm:$0xff]
    %v2263 = vld [vmem:[%s815 + $0x110] sm:$0xff]
    %v2264 = vld [vmem:[%s815 + $0x118] sm:$0xff]
    %v2265 = vld [vmem:[%s815 + $0x120] sm:$0xff]
    %v2266 = vld [vmem:[%s815 + $0x128] sm:$0xff]
    %v2267 = vld [vmem:[%s815 + $0x130] sm:$0xff]
    %v2268 = vld [vmem:[%s815 + $0x138] sm:$0xff]
    %v2269 = vld [vmem:[%s815 + $0x140] sm:$0xff]
    %v2270 = vld [vmem:[%s815 + $0x148] sm:$0xff]
    %v2271 = vld [vmem:[%s815 + $0x150] sm:$0xff]
    %v2272 = vld [vmem:[%s815 + $0x158] sm:$0xff]
    %v2273 = vld [vmem:[%s815 + $0x160] sm:$0xff]
    %v2274 = vld [vmem:[%s815 + $0x168] sm:$0xff]
    %v2275 = vld [vmem:[%s815 + $0x170] sm:$0xff]
    %v2276 = vld [vmem:[%s815 + $0x178] sm:$0xff]
    %v2277 = vld [vmem:[%s815 + $0x180] sm:$0xff]
    %v2278 = vld [vmem:[%s815 + $0x188] sm:$0xff]
    %v2279 = vld [vmem:[%s815 + $0x190] sm:$0xff]
    %v2280 = vld [vmem:[%s815 + $0x198] sm:$0xff]
    %v2281 = vld [vmem:[%s815 + $0x1a0] sm:$0xff]
    %v2282 = vld [vmem:[%s815 + $0x1a8] sm:$0xff]
    %v2283 = vld [vmem:[%s815 + $0x1b0] sm:$0xff]
    %v2284 = vld [vmem:[%s815 + $0x1b8] sm:$0xff]
    %v2285 = vld [vmem:[%s815 + $0x1c0] sm:$0xff]
    %v2286 = vld [vmem:[%s815 + $0x1c8] sm:$0xff]
    %v2287 = vld [vmem:[%s815 + $0x1d0] sm:$0xff]
    %v2288 = vld [vmem:[%s815 + $0x1d8] sm:$0xff]
    %v2289 = vld [vmem:[%s815 + $0x1e0] sm:$0xff]
    %v2290 = vld [vmem:[%s815 + $0x1e8] sm:$0xff]
    %v2291 = vld [vmem:[%s815 + $0x1f0] sm:$0xff]
    %v2292 = vld [vmem:[%s815 + $0x1f8] sm:$0xff]
    %v2293 = vld [vmem:[%s815 + $0x200] sm:$0xff]
    %v2294 = vld [vmem:[%s815 + $0x208] sm:$0xff]
    %v2295 = vld [vmem:[%s815 + $0x210] sm:$0xff]
    %v2296 = vld [vmem:[%s815 + $0x218] sm:$0xff]
    %v2297 = vld [vmem:[%s815 + $0x220] sm:$0xff]
    %v2298 = vld [vmem:[%s815 + $0x228] sm:$0xff]
    %v2299 = vld [vmem:[%s815 + $0x230] sm:$0xff]
    %v2300 = vld [vmem:[%s815 + $0x238] sm:$0xff]
    %v2301 = vld [vmem:[%s815 + $0x240] sm:$0xff]
    %v2302 = vld [vmem:[%s815 + $0x248] sm:$0xff]
    %v2303 = vld [vmem:[%s815 + $0x250] sm:$0xff]
    %v2304 = vld [vmem:[%s815 + $0x258] sm:$0xff]
    %v2305 = vld [vmem:[%s815 + $0x260] sm:$0xff]
    %v2306 = vld [vmem:[%s815 + $0x268] sm:$0xff]
    %v2307 = vld [vmem:[%s815 + $0x270] sm:$0xff]
    %v2308 = vld [vmem:[%s815 + $0x278] sm:$0xff]
    %v2309 = vld [vmem:[%s815 + $0x280] sm:$0xff]
    %v2310 = vld [vmem:[%s815 + $0x288] sm:$0xff]
    %v2311 = vld [vmem:[%s815 + $0x290] sm:$0xff]
    %v2312 = vld [vmem:[%s815 + $0x298] sm:$0xff]
    %v2313 = vld [vmem:[%s815 + $0x2a0] sm:$0xff]
    %v2314 = vld [vmem:[%s815 + $0x2a8] sm:$0xff]
    %v2315 = vld [vmem:[%s815 + $0x2b0] sm:$0xff]
    %v2316 = vld [vmem:[%s815 + $0x2b8] sm:$0xff]
    %v2317 = vld [vmem:[%s815 + $0x2c0] sm:$0xff]
    %v2318 = vld [vmem:[%s815 + $0x2c8] sm:$0xff]
    %v2319 = vld [vmem:[%s815 + $0x2d0] sm:$0xff]
    %v2320 = vld [vmem:[%s815 + $0x2d8] sm:$0xff]
    %v2321 = vld [vmem:[%s815 + $0x2e0] sm:$0xff]
    %v2322 = vld [vmem:[%s815 + $0x2e8] sm:$0xff]
    %v2323 = vld [vmem:[%s815 + $0x2f0] sm:$0xff]
    %v2324 = vld [vmem:[%s815 + $0x2f8] sm:$0xff]
    %v2325 = vld [vmem:[%s815 + $0x300] sm:$0xff]
    %v2326 = vld [vmem:[%s815 + $0x308] sm:$0xff]
    %v2327 = vld [vmem:[%s815 + $0x310] sm:$0xff]
    %v2328 = vld [vmem:[%s815 + $0x318] sm:$0xff]
    %v2329 = vld [vmem:[%s815 + $0x320] sm:$0xff]
    %v2330 = vld [vmem:[%s815 + $0x328] sm:$0xff]
    %v2331 = vld [vmem:[%s815 + $0x330] sm:$0xff]
    %v2332 = vld [vmem:[%s815 + $0x338] sm:$0xff]
    %v2333 = vld [vmem:[%s815 + $0x340] sm:$0xff]
    %v2334 = vld [vmem:[%s815 + $0x348] sm:$0xff]
    %v2335 = vld [vmem:[%s815 + $0x350] sm:$0xff]
    %v2336 = vld [vmem:[%s815 + $0x358] sm:$0xff]
    %v2337 = vld [vmem:[%s815 + $0x360] sm:$0xff]
    %v2338 = vld [vmem:[%s815 + $0x368] sm:$0xff]
    %v2339 = vld [vmem:[%s815 + $0x370] sm:$0xff]
    %v2340 = vld [vmem:[%s815 + $0x378] sm:$0xff]
    %v2341 = vld [vmem:[%s815 + $0x380] sm:$0xff]
    %v2342 = vld [vmem:[%s815 + $0x388] sm:$0xff]
    %v2343 = vld [vmem:[%s815 + $0x390] sm:$0xff]
    %v2344 = vld [vmem:[%s815 + $0x398] sm:$0xff]
    %v2345 = vld [vmem:[%s815 + $0x3a0] sm:$0xff]
    %v2346 = vld [vmem:[%s815 + $0x3a8] sm:$0xff]
    %v2347 = vld [vmem:[%s815 + $0x3b0] sm:$0xff]
    %v2348 = vld [vmem:[%s815 + $0x3b8] sm:$0xff]
    %v2349 = vld [vmem:[%s815 + $0x3c0] sm:$0xff]
    %v2350 = vld [vmem:[%s815 + $0x3c8] sm:$0xff]
    %v2351 = vld [vmem:[%s815 + $0x3d0] sm:$0xff]
    %v2352 = vld [vmem:[%s815 + $0x3d8] sm:$0xff]
    %v2353 = vld [vmem:[%s815 + $0x3e0] sm:$0xff]
    %v2354 = vld [vmem:[%s815 + $0x3e8] sm:$0xff]
    %v2355 = vld [vmem:[%s815 + $0x3f0] sm:$0xff]
    %v2356 = vld [vmem:[%s815 + $0x3f8] sm:$0xff]
    %2357 = vmatprep.subr.bf16.mxu0 %v2230
    %2358 = vmatpush1.bf16.msra.mxu0 %v2229
    %2359 = vmatprep.subr.bf16.mxu0 %v2234
    %2360 = vmatpush1.bf16.msra.mxu0 %v2233
    %2361 = vmatprep.subr.bf16.mxu0 %v2238
    %2362 = vmatpush1.bf16.msra.mxu0 %v2237
    %2363 = vmatprep.subr.bf16.mxu0 %v2242
    %2364 = vmatpush1.bf16.msra.mxu0 %v2241
    %2365 = vmatprep.subr.bf16.mxu0 %v2246
    %2366 = vmatpush1.bf16.msra.mxu0 %v2245
    %2367 = vmatprep.subr.bf16.mxu0 %v2250
    %2368 = vmatpush1.bf16.msra.mxu0 %v2249
    %2369 = vmatprep.subr.bf16.mxu0 %v2254
    %2370 = vmatpush1.bf16.msra.mxu0 %v2253
    %2371 = vmatprep.subr.bf16.mxu0 %v2258
    %2372 = vmatpush1.bf16.msra.mxu0 %v2257
    %2373 = vmatprep.subr.bf16.mxu0 %v2262
    %2374 = vmatpush1.bf16.msra.mxu0 %v2261
    %2375 = vmatprep.subr.bf16.mxu0 %v2266
    %2376 = vmatpush1.bf16.msra.mxu0 %v2265
    %2377 = vmatprep.subr.bf16.mxu0 %v2270
    %2378 = vmatpush1.bf16.msra.mxu0 %v2269
    %2379 = vmatprep.subr.bf16.mxu0 %v2274
    %2380 = vmatpush1.bf16.msra.mxu0 %v2273
    %2381 = vmatprep.subr.bf16.mxu0 %v2278
    %2382 = vmatpush1.bf16.msra.mxu0 %v2277
    %2383 = vmatprep.subr.bf16.mxu0 %v2282
    %2384 = vmatpush1.bf16.msra.mxu0 %v2281
    %2385 = vmatprep.subr.bf16.mxu0 %v2286
    %2386 = vmatpush1.bf16.msra.mxu0 %v2285
    %2387 = vmatprep.subr.bf16.mxu0 %v2290
    %2388 = vmatpush1.bf16.msra.mxu0 %v2289
    %2389 = vmatprep.mubr.bf16.mxu0 %v1504
    %2390 = vmatmul.mubr.bf16.gmra.mrb[0].mxu0 %v1503
    %v2391 = vpop.f32.mrb[0].mxu0
    %v2392 = vadd.f32 0.0, %v2391
    %v2393 = vpop.f32.mrb[0].mxu0
    %v2394 = vadd.f32 0.0, %v2393
    %v2395 = vpop.f32.mrb[0].mxu0
    %v2396 = vpop.f32.mrb[0].mxu0
    %2397 = vdwg.mxu0
    %2398 = vmatprep.subr.bf16.mxu0 %v2294
    %2399 = vmatpush1.bf16.msra.mxu0 %v2293
    %2400 = vmatprep.subr.bf16.mxu0 %v2298
    %2401 = vmatpush1.bf16.msra.mxu0 %v2297
    %2402 = vmatprep.subr.bf16.mxu0 %v2302
    %2403 = vmatpush1.bf16.msra.mxu0 %v2301
    %2404 = vmatprep.subr.bf16.mxu0 %v2306
    %2405 = vmatpush1.bf16.msra.mxu0 %v2305
    %2406 = vmatprep.subr.bf16.mxu0 %v2310
    %2407 = vmatpush1.bf16.msra.mxu0 %v2309
    %2408 = vmatprep.subr.bf16.mxu0 %v2314
    %2409 = vmatpush1.bf16.msra.mxu0 %v2313
    %2410 = vmatprep.subr.bf16.mxu0 %v2318
    %2411 = vmatpush1.bf16.msra.mxu0 %v2317
    %2412 = vmatprep.subr.bf16.mxu0 %v2322
    %2413 = vmatpush1.bf16.msra.mxu0 %v2321
    %2414 = vmatprep.subr.bf16.mxu0 %v2326
    %2415 = vmatpush1.bf16.msra.mxu0 %v2325
    %2416 = vmatprep.subr.bf16.mxu0 %v2330
    %2417 = vmatpush1.bf16.msra.mxu0 %v2329
    %2418 = vmatprep.subr.bf16.mxu0 %v2334
    %2419 = vmatpush1.bf16.msra.mxu0 %v2333
    %2420 = vmatprep.subr.bf16.mxu0 %v2338
    %2421 = vmatpush1.bf16.msra.mxu0 %v2337
    %2422 = vmatprep.subr.bf16.mxu0 %v2342
    %2423 = vmatpush1.bf16.msra.mxu0 %v2341
    %2424 = vmatprep.subr.bf16.mxu0 %v2346
    %2425 = vmatpush1.bf16.msra.mxu0 %v2345
    %2426 = vmatprep.subr.bf16.mxu0 %v2350
    %2427 = vmatpush1.bf16.msra.mxu0 %v2349
    %2428 = vmatprep.subr.bf16.mxu0 %v2354
    %2429 = vmatpush1.bf16.msra.mxu0 %v2353
    %2430 = vmatprep.mubr.bf16.mxu0 %v1506
    %2431 = vmatmul.mubr.bf16.gmra.mrb[0].mxu0 %v1505
    %v2432 = vpop.f32.mrb[0].mxu0
    %v2433 = vadd.f32 %v2392, %v2432
    %v2434 = vpop.f32.mrb[0].mxu0
    %v2435 = vadd.f32 %v2394, %v2434
    %v2436 = vpop.f32.mrb[0].mxu0
    %v2437 = vpop.f32.mrb[0].mxu0
    %2438 = vdwg.mxu0
    %2439 = vmatprep.subr.bf16.mxu0 %v2232
    %2440 = vmatpush1.bf16.msra.mxu0 %v2231
    %2441 = vmatprep.subr.bf16.mxu0 %v2236
    %2442 = vmatpush1.bf16.msra.mxu0 %v2235
    %2443 = vmatprep.subr.bf16.mxu0 %v2240
    %2444 = vmatpush1.bf16.msra.mxu0 %v2239
    %2445 = vmatprep.subr.bf16.mxu0 %v2244
    %2446 = vmatpush1.bf16.msra.mxu0 %v2243
    %2447 = vmatprep.subr.bf16.mxu0 %v2248
    %2448 = vmatpush1.bf16.msra.mxu0 %v2247
    %2449 = vmatprep.subr.bf16.mxu0 %v2252
    %2450 = vmatpush1.bf16.msra.mxu0 %v2251
    %2451 = vmatprep.subr.bf16.mxu0 %v2256
    %2452 = vmatpush1.bf16.msra.mxu0 %v2255
    %2453 = vmatprep.subr.bf16.mxu0 %v2260
    %2454 = vmatpush1.bf16.msra.mxu0 %v2259
    %2455 = vmatprep.subr.bf16.mxu0 %v2264
    %2456 = vmatpush1.bf16.msra.mxu0 %v2263
    %2457 = vmatprep.subr.bf16.mxu0 %v2268
    %2458 = vmatpush1.bf16.msra.mxu0 %v2267
    %2459 = vmatprep.subr.bf16.mxu0 %v2272
    %2460 = vmatpush1.bf16.msra.mxu0 %v2271
    %2461 = vmatprep.subr.bf16.mxu0 %v2276
    %2462 = vmatpush1.bf16.msra.mxu0 %v2275
    %2463 = vmatprep.subr.bf16.mxu0 %v2280
    %2464 = vmatpush1.bf16.msra.mxu0 %v2279
    %2465 = vmatprep.subr.bf16.mxu0 %v2284
    %2466 = vmatpush1.bf16.msra.mxu0 %v2283
    %2467 = vmatprep.subr.bf16.mxu0 %v2288
    %2468 = vmatpush1.bf16.msra.mxu0 %v2287
    %2469 = vmatprep.subr.bf16.mxu0 %v2292
    %2470 = vmatpush1.bf16.msra.mxu0 %v2291
    %2471 = vmatprep.mubr.bf16.mxu0 %v1504
    %2472 = vmatmul.mubr.bf16.gmra.mrb[0].mxu0 %v1503
    %v2473 = vpop.f32.mrb[0].mxu0
    %v2474 = vadd.f32 0.0, %v2473
    %v2475 = vpop.f32.mrb[0].mxu0
    %v2476 = vadd.f32 0.0, %v2475
    %v2477 = vpop.f32.mrb[0].mxu0
    %v2478 = vpop.f32.mrb[0].mxu0
    %2479 = vdwg.mxu0
    %2480 = vmatprep.subr.bf16.mxu0 %v2296
    %2481 = vmatpush1.bf16.msra.mxu0 %v2295
    %2482 = vmatprep.subr.bf16.mxu0 %v2300
    %2483 = vmatpush1.bf16.msra.mxu0 %v2299
    %2484 = vmatprep.subr.bf16.mxu0 %v2304
    %2485 = vmatpush1.bf16.msra.mxu0 %v2303
    %2486 = vmatprep.subr.bf16.mxu0 %v2308
    %2487 = vmatpush1.bf16.msra.mxu0 %v2307
    %2488 = vmatprep.subr.bf16.mxu0 %v2312
    %2489 = vmatpush1.bf16.msra.mxu0 %v2311
    %2490 = vmatprep.subr.bf16.mxu0 %v2316
    %2491 = vmatpush1.bf16.msra.mxu0 %v2315
    %2492 = vmatprep.subr.bf16.mxu0 %v2320
    %2493 = vmatpush1.bf16.msra.mxu0 %v2319
    %2494 = vmatprep.subr.bf16.mxu0 %v2324
    %2495 = vmatpush1.bf16.msra.mxu0 %v2323
    %2496 = vmatprep.subr.bf16.mxu0 %v2328
    %2497 = vmatpush1.bf16.msra.mxu0 %v2327
    %2498 = vmatprep.subr.bf16.mxu0 %v2332
    %2499 = vmatpush1.bf16.msra.mxu0 %v2331
    %2500 = vmatprep.subr.bf16.mxu0 %v2336
    %2501 = vmatpush1.bf16.msra.mxu0 %v2335
    %2502 = vmatprep.subr.bf16.mxu0 %v2340
    %2503 = vmatpush1.bf16.msra.mxu0 %v2339
    %2504 = vmatprep.subr.bf16.mxu0 %v2344
    %2505 = vmatpush1.bf16.msra.mxu0 %v2343
    %2506 = vmatprep.subr.bf16.mxu0 %v2348
    %2507 = vmatpush1.bf16.msra.mxu0 %v2347
    %2508 = vmatprep.subr.bf16.mxu0 %v2352
    %2509 = vmatpush1.bf16.msra.mxu0 %v2351
    %2510 = vmatprep.subr.bf16.mxu0 %v2356
    %2511 = vmatpush1.bf16.msra.mxu0 %v2355
    %2512 = vmatprep.mubr.bf16.mxu0 %v1506
    %2513 = vmatmul.mubr.bf16.gmra.mrb[0].mxu0 %v1505
    %v2514 = vpop.f32.mrb[0].mxu0
    %v2515 = vadd.f32 %v2474, %v2514
    %v2516 = vpop.f32.mrb[0].mxu0
    %v2517 = vadd.f32 %v2476, %v2516
    %v2518 = vpop.f32.mrb[0].mxu0
    %v2519 = vpop.f32.mrb[0].mxu0
    %2520 = vdwg.mxu0
    %v2521 = vrot.slane %v2433, 4
    %v2522 = vadd.f32 %v2433, %v2521
    %v2523 = vrot.slane %v2522, 2
    %v2524 = vadd.f32 %v2522, %v2523
    %v2525 = vrot.slane %v2524, 1
    %v2526 = vadd.f32 %v2524, %v2525
    %v2527 = vrot.slane %v2435, 4
    %v2528 = vadd.f32 %v2435, %v2527
    %v2529 = vrot.slane %v2528, 2
    %v2530 = vadd.f32 %v2528, %v2529
    %v2531 = vrot.slane %v2530, 1
    %v2532 = vadd.f32 %v2530, %v2531
    %v2533 = vrot.slane %v2515, 4
    %v2534 = vadd.f32 %v2515, %v2533
    %v2535 = vrot.slane %v2534, 2
    %v2536 = vadd.f32 %v2534, %v2535
    %v2537 = vrot.slane %v2536, 1
    %v2538 = vadd.f32 %v2536, %v2537
    %v2539 = vrot.slane %v2517, 4
    %v2540 = vadd.f32 %v2517, %v2539
    %v2541 = vrot.slane %v2540, 2
    %v2542 = vadd.f32 %v2540, %v2541
    %v2543 = vrot.slane %v2542, 1
    %v2544 = vadd.f32 %v2542, %v2543
    %v2545 = vmul.f32 %v2433, %v2433
    %v2546 = vmul.f32 %v2435, %v2435
    %v2547 = vmul.f32 %v2515, %v2515
    %v2548 = vmul.f32 %v2517, %v2517
    %v2549 = vrot.slane %v2545, 4
    %v2550 = vadd.f32 %v2545, %v2549
    %v2551 = vrot.slane %v2550, 2
    %v2552 = vadd.f32 %v2550, %v2551
    %v2553 = vrot.slane %v2552, 1
    %v2554 = vadd.f32 %v2552, %v2553
    %v2555 = vrot.slane %v2546, 4
    %v2556 = vadd.f32 %v2546, %v2555
    %v2557 = vrot.slane %v2556, 2
    %v2558 = vadd.f32 %v2556, %v2557
    %v2559 = vrot.slane %v2558, 1
    %v2560 = vadd.f32 %v2558, %v2559
    %v2561 = vrot.slane %v2547, 4
    %v2562 = vadd.f32 %v2547, %v2561
    %v2563 = vrot.slane %v2562, 2
    %v2564 = vadd.f32 %v2562, %v2563
    %v2565 = vrot.slane %v2564, 1
    %v2566 = vadd.f32 %v2564, %v2565
    %v2567 = vrot.slane %v2548, 4
    %v2568 = vadd.f32 %v2548, %v2567
    %v2569 = vrot.slane %v2568, 2
    %v2570 = vadd.f32 %v2568, %v2569
    %v2571 = vrot.slane %v2570, 1
    %v2572 = vadd.f32 %v2570, %v2571
    %v2573 = vmul.f32 %v2526, 0.125
    %v2574 = vmul.f32 %v2532, 0.125
    %v2575 = vmul.f32 %v2538, 0.125
    %v2576 = vmul.f32 %v2544, 0.125
    %v2577 = vmul.f32 %v2554, 0.125
    %v2578 = vmul.f32 %v2560, 0.125
    %v2579 = vmul.f32 %v2566, 0.125
    %v2580 = vmul.f32 %v2572, 0.125
    %v2581 = vmul.f32 %v2573, %v2573
    %v2582 = vmul.f32 %v2574, %v2574
    %v2583 = vmul.f32 %v2575, %v2575
    %v2584 = vmul.f32 %v2576, %v2576
    %v2585 = vsub.f32 %v2577, %v2581
    %v2586 = vsub.f32 %v2578, %v2582
    %v2587 = vsub.f32 %v2579, %v2583
    %v2588 = vsub.f32 %v2580, %v2584
    %v2589 = vmax.f32 %v2585, 0.0
    %v2590 = vmax.f32 %v2586, 0.0
    %v2591 = vmax.f32 %v2587, 0.0
    %v2592 = vmax.f32 %v2588, 0.0
    %v2593 = vadd.f32 %v2589, 0.8
    %v2594 = vadd.f32 %v2590, 0.8
    %v2595 = vadd.f32 %v2591, 0.8
    %v2596 = vadd.f32 %v2592, 0.8
    %v2597 = vrsqrt.pop %v2593
    %v2598 = vrsqrt.pop %v2594
    %v2599 = vrsqrt.pop %v2595
    %v2600 = vrsqrt.pop %v2596
    %v2602 = vrot.slane %v1507, 4
    %v2608 = vcombine.low %v2597, %v2598
    %v2609 = vcombine.low %v2599, %v2600
    %v2611 = vunpack.c.l.s4 1966171168
    %v2612 = vunpack.c.0.s8 %v2611
    %v2613 = vlaneseq
    %v2614 = vshrl.u32 %v2613, 7
    %v2615 = vsub.s32 %v2612, %v2614
    %v2616 = vrot.slane %v2608, %v2615
    %v2618 = vunpack.c.l.s4 1966171168
    %v2619 = vunpack.c.0.s8 %v2618
    %v2620 = vlaneseq
    %v2621 = vshrl.u32 %v2620, 7
    %v2622 = vsub.s32 %v2619, %v2621
    %v2623 = vrot.slane %v2609, %v2622
    %v2624 = vcombine.low %v2616, %v2623
    %v2626 = vunpack.c.l.s4 1966171168
    %v2627 = vunpack.c.0.s8 %v2626
    %v2628 = vlaneseq
    %v2629 = vshrl.u32 %v2628, 7
    %v2630 = vsub.s32 %v2627, %v2629
    %v2631 = vrot.slane %v2624, %v2630
    %v2633 = vmul.f32 %v2602, %v2631
    %v2635 = vlaneseq
    %v2636 = vshrl.u32 %v2635, 7
    %v2637 = vsub.s32 0, %v2636
    %v2638 = vrot.slane %v2633, %v2637
    %v2639 = vlaneseq
    %v2640 = vshrl.u32 %v2639, 7
    %v2641 = vsub.s32 1, %v2640
    %v2642 = vrot.slane %v2633, %v2641
    %v2643 = vlaneseq
    %v2644 = vshrl.u32 %v2643, 7
    %v2645 = vsub.s32 2, %v2644
    %v2646 = vrot.slane %v2633, %v2645
    %v2647 = vlaneseq
    %v2648 = vshrl.u32 %v2647, 7
    %v2649 = vsub.s32 3, %v2648
    %v2650 = vrot.slane %v2633, %v2649
    %v2655 = vmul.f32 %v2573, %v2638
    %v2656 = vmul.f32 %v2574, %v2642
    %v2657 = vmul.f32 %v2575, %v2646
    %v2658 = vmul.f32 %v2576, %v2650
    %v2660 = vrot.slane %v1508, 4
    %v2666 = vcombine.low %v2655, %v2656
    %v2667 = vcombine.low %v2657, %v2658
    %v2669 = vunpack.c.l.s4 1966171168
    %v2670 = vunpack.c.0.s8 %v2669
    %v2671 = vlaneseq
    %v2672 = vshrl.u32 %v2671, 7
    %v2673 = vsub.s32 %v2670, %v2672
    %v2674 = vrot.slane %v2666, %v2673
    %v2676 = vunpack.c.l.s4 1966171168
    %v2677 = vunpack.c.0.s8 %v2676
    %v2678 = vlaneseq
    %v2679 = vshrl.u32 %v2678, 7
    %v2680 = vsub.s32 %v2677, %v2679
    %v2681 = vrot.slane %v2667, %v2680
    %v2682 = vcombine.low %v2674, %v2681
    %v2684 = vunpack.c.l.s4 1966171168
    %v2685 = vunpack.c.0.s8 %v2684
    %v2686 = vlaneseq
    %v2687 = vshrl.u32 %v2686, 7
    %v2688 = vsub.s32 %v2685, %v2687
    %v2689 = vrot.slane %v2682, %v2688
    %v2691 = vsub.f32 %v2660, %v2689
    %v2692 = vmul.f32 %v2433, %v2638
    %v2693 = vmul.f32 %v2435, %v2642
    %v2694 = vmul.f32 %v2515, %v2646
    %v2695 = vmul.f32 %v2517, %v2650
    %v2697 = vlaneseq
    %v2698 = vshrl.u32 %v2697, 7
    %v2699 = vsub.s32 0, %v2698
    %v2700 = vrot.slane %v2691, %v2699
    %v2701 = vlaneseq
    %v2702 = vshrl.u32 %v2701, 7
    %v2703 = vsub.s32 1, %v2702
    %v2704 = vrot.slane %v2691, %v2703
    %v2705 = vlaneseq
    %v2706 = vshrl.u32 %v2705, 7
    %v2707 = vsub.s32 2, %v2706
    %v2708 = vrot.slane %v2691, %v2707
    %v2709 = vlaneseq
    %v2710 = vshrl.u32 %v2709, 7
    %v2711 = vsub.s32 3, %v2710
    %v2712 = vrot.slane %v2691, %v2711
    %v2717 = vadd.f32 %v2692, %v2700
    %v2718 = vadd.f32 %v2693, %v2704
    %v2719 = vadd.f32 %v2694, %v2708
    %v2720 = vadd.f32 %v2695, %v2712
    %vm2721 = vcmp.gt.f32.partialorder %v2717, 0.0
    %vm2722 = vcmp.gt.f32.partialorder %v2718, 0.0
    %vm2723 = vcmp.gt.f32.partialorder %v2719, 0.0
    %vm2724 = vcmp.gt.f32.partialorder %v2720, 0.0
    %v2725 = vmul.f32 %v2717, 0.2
    %v2726 = vmul.f32 %v2718, 0.2
    %v2727 = vmul.f32 %v2719, 0.2
    %v2728 = vmul.f32 %v2720, 0.2
    %v2729 = vsel %vm2721, %v2717, %v2725
    %v2730 = vsel %vm2722, %v2718, %v2726
    %v2731 = vsel %vm2723, %v2719, %v2727
    %v2732 = vsel %vm2724, %v2720, %v2728
    %v2733 = vpack.c.bf16 %v2729, %v2729
    %v2734 = vpack.c.bf16 %v2730, %v2730
    %v2735 = vpack.c.bf16 %v2731, %v2731
    %v2736 = vpack.c.bf16 %v2732, %v2732
    %s2737 = smul.u32 %s1509, 1
    %s2738 = sshll.u32 %s2737, 4
    %2739 = dma.done %s1513, %s2738
    %v2740 = vld [vmem:[#allocation5] sm:$0xff]
    %v2741 = vld [vmem:[#allocation5 + $0x8] sm:$0xff]
    %v2742 = vld [vmem:[#allocation5 + $0x10] sm:$0xff]
    %v2743 = vld [vmem:[#allocation5 + $0x18] sm:$0xff]
    %v2744 = vld [vmem:[#allocation5 + $0x20] sm:$0xff]
    %v2745 = vld [vmem:[#allocation5 + $0x28] sm:$0xff]
    %v2746 = vld [vmem:[#allocation5 + $0x30] sm:$0xff]
    %v2747 = vld [vmem:[#allocation5 + $0x38] sm:$0xff]
    %v2748 = vld [vmem:[#allocation5 + $0x40] sm:$0xff]
    %v2749 = vld [vmem:[#allocation5 + $0x48] sm:$0xff]
    %v2750 = vld [vmem:[#allocation5 + $0x50] sm:$0xff]
    %v2751 = vld [vmem:[#allocation5 + $0x58] sm:$0xff]
    %v2752 = vld [vmem:[#allocation5 + $0x60] sm:$0xff]
    %v2753 = vld [vmem:[#allocation5 + $0x68] sm:$0xff]
    %v2754 = vld [vmem:[#allocation5 + $0x70] sm:$0xff]
    %v2755 = vld [vmem:[#allocation5 + $0x78] sm:$0xff]
    %v2756 = vld [vmem:[#allocation5 + $0x80] sm:$0xff]
    %v2757 = vld [vmem:[#allocation5 + $0x88] sm:$0xff]
    %v2758 = vld [vmem:[#allocation5 + $0x90] sm:$0xff]
    %v2759 = vld [vmem:[#allocation5 + $0x98] sm:$0xff]
    %v2760 = vld [vmem:[#allocation5 + $0xa0] sm:$0xff]
    %v2761 = vld [vmem:[#allocation5 + $0xa8] sm:$0xff]
    %v2762 = vld [vmem:[#allocation5 + $0xb0] sm:$0xff]
    %v2763 = vld [vmem:[#allocation5 + $0xb8] sm:$0xff]
    %v2764 = vld [vmem:[#allocation5 + $0xc0] sm:$0xff]
    %v2765 = vld [vmem:[#allocation5 + $0xc8] sm:$0xff]
    %v2766 = vld [vmem:[#allocation5 + $0xd0] sm:$0xff]
    %v2767 = vld [vmem:[#allocation5 + $0xd8] sm:$0xff]
    %v2768 = vld [vmem:[#allocation5 + $0xe0] sm:$0xff]
    %v2769 = vld [vmem:[#allocation5 + $0xe8] sm:$0xff]
    %v2770 = vld [vmem:[#allocation5 + $0xf0] sm:$0xff]
    %v2771 = vld [vmem:[#allocation5 + $0xf8] sm:$0xff]
    %s2772 = sshll.u32 %s2737, 4
    %2773 = dma.done %s2124, %s2772
    %v2774 = vld [vmem:[%s2123] sm:$0xff]
    %v2775 = vld [vmem:[%s2123 + $0x8] sm:$0xff]
    %v2776 = vld [vmem:[%s2123 + $0x10] sm:$0xff]
    %v2777 = vld [vmem:[%s2123 + $0x18] sm:$0xff]
    %v2778 = vld [vmem:[%s2123 + $0x20] sm:$0xff]
    %v2779 = vld [vmem:[%s2123 + $0x28] sm:$0xff]
    %v2780 = vld [vmem:[%s2123 + $0x30] sm:$0xff]
    %v2781 = vld [vmem:[%s2123 + $0x38] sm:$0xff]
    %v2782 = vld [vmem:[%s2123 + $0x40] sm:$0xff]
    %v2783 = vld [vmem:[%s2123 + $0x48] sm:$0xff]
    %v2784 = vld [vmem:[%s2123 + $0x50] sm:$0xff]
    %v2785 = vld [vmem:[%s2123 + $0x58] sm:$0xff]
    %v2786 = vld [vmem:[%s2123 + $0x60] sm:$0xff]
    %v2787 = vld [vmem:[%s2123 + $0x68] sm:$0xff]
    %v2788 = vld [vmem:[%s2123 + $0x70] sm:$0xff]
    %v2789 = vld [vmem:[%s2123 + $0x78] sm:$0xff]
    %v2790 = vld [vmem:[%s2123 + $0x80] sm:$0xff]
    %v2791 = vld [vmem:[%s2123 + $0x88] sm:$0xff]
    %v2792 = vld [vmem:[%s2123 + $0x90] sm:$0xff]
    %v2793 = vld [vmem:[%s2123 + $0x98] sm:$0xff]
    %v2794 = vld [vmem:[%s2123 + $0xa0] sm:$0xff]
    %v2795 = vld [vmem:[%s2123 + $0xa8] sm:$0xff]
    %v2796 = vld [vmem:[%s2123 + $0xb0] sm:$0xff]
    %v2797 = vld [vmem:[%s2123 + $0xb8] sm:$0xff]
    %v2798 = vld [vmem:[%s2123 + $0xc0] sm:$0xff]
    %v2799 = vld [vmem:[%s2123 + $0xc8] sm:$0xff]
    %v2800 = vld [vmem:[%s2123 + $0xd0] sm:$0xff]
    %v2801 = vld [vmem:[%s2123 + $0xd8] sm:$0xff]
    %v2802 = vld [vmem:[%s2123 + $0xe0] sm:$0xff]
    %v2803 = vld [vmem:[%s2123 + $0xe8] sm:$0xff]
    %v2804 = vld [vmem:[%s2123 + $0xf0] sm:$0xff]
    %v2805 = vld [vmem:[%s2123 + $0xf8] sm:$0xff]
    %2806 = vmatprep.subr.bf16.mxu0 0
    %2807 = vmatpush1.bf16.msra.mxu0 %v2774
    %2808 = vmatprep.subr.bf16.mxu0 0
    %2809 = vmatpush1.bf16.msra.mxu0 %v2775
    %2810 = vmatprep.subr.bf16.mxu0 0
    %2811 = vmatpush1.bf16.msra.mxu0 %v2776
    %2812 = vmatprep.subr.bf16.mxu0 0
    %2813 = vmatpush1.bf16.msra.mxu0 %v2777
    %2814 = vmatprep.subr.bf16.mxu0 0
    %2815 = vmatpush1.bf16.msra.mxu0 %v2778
    %2816 = vmatprep.subr.bf16.mxu0 0
    %2817 = vmatpush1.bf16.msra.mxu0 %v2779
    %2818 = vmatprep.subr.bf16.mxu0 0
    %2819 = vmatpush1.bf16.msra.mxu0 %v2780
    %2820 = vmatprep.subr.bf16.mxu0 0
    %2821 = vmatpush1.bf16.msra.mxu0 %v2781
    %2822 = vmatprep.subr.bf16.mxu0 0
    %2823 = vmatpush1.bf16.msra.mxu0 %v2782
    %2824 = vmatprep.subr.bf16.mxu0 0
    %2825 = vmatpush1.bf16.msra.mxu0 %v2783
    %2826 = vmatprep.subr.bf16.mxu0 0
    %2827 = vmatpush1.bf16.msra.mxu0 %v2784
    %2828 = vmatprep.subr.bf16.mxu0 0
    %2829 = vmatpush1.bf16.msra.mxu0 %v2785
    %2830 = vmatprep.subr.bf16.mxu0 0
    %2831 = vmatpush1.bf16.msra.mxu0 %v2786
    %2832 = vmatprep.subr.bf16.mxu0 0
    %2833 = vmatpush1.bf16.msra.mxu0 %v2787
    %2834 = vmatprep.subr.bf16.mxu0 0
    %2835 = vmatpush1.bf16.msra.mxu0 %v2788
    %2836 = vmatprep.subr.bf16.mxu0 0
    %2837 = vmatpush1.bf16.msra.mxu0 %v2789
    %2838 = vmatprep.mubr.bf16.mxu0 %v2734
    %2839 = vmatmul.mubr.bf16.gmra.mrb[0].mxu0 %v2733
    %v2840 = vpop.f32.mrb[0].mxu0
    %v2841 = vadd.f32 0.0, %v2840
    %v2842 = vpop.f32.mrb[0].mxu0
    %v2843 = vpop.f32.mrb[0].mxu0
    %v2844 = vpop.f32.mrb[0].mxu0
    %2845 = vdwg.mxu0
    %2846 = vmatprep.subr.bf16.mxu0 0
    %2847 = vmatpush1.bf16.msra.mxu0 %v2790
    %2848 = vmatprep.subr.bf16.mxu0 0
    %2849 = vmatpush1.bf16.msra.mxu0 %v2791
    %2850 = vmatprep.subr.bf16.mxu0 0
    %2851 = vmatpush1.bf16.msra.mxu0 %v2792
    %2852 = vmatprep.subr.bf16.mxu0 0
    %2853 = vmatpush1.bf16.msra.mxu0 %v2793
    %2854 = vmatprep.subr.bf16.mxu0 0
    %2855 = vmatpush1.bf16.msra.mxu0 %v2794
    %2856 = vmatprep.subr.bf16.mxu0 0
    %2857 = vmatpush1.bf16.msra.mxu0 %v2795
    %2858 = vmatprep.subr.bf16.mxu0 0
    %2859 = vmatpush1.bf16.msra.mxu0 %v2796
    %2860 = vmatprep.subr.bf16.mxu0 0
    %2861 = vmatpush1.bf16.msra.mxu0 %v2797
    %2862 = vmatprep.subr.bf16.mxu0 0
    %2863 = vmatpush1.bf16.msra.mxu0 %v2798
    %2864 = vmatprep.subr.bf16.mxu0 0
    %2865 = vmatpush1.bf16.msra.mxu0 %v2799
    %2866 = vmatprep.subr.bf16.mxu0 0
    %2867 = vmatpush1.bf16.msra.mxu0 %v2800
    %2868 = vmatprep.subr.bf16.mxu0 0
    %2869 = vmatpush1.bf16.msra.mxu0 %v2801
    %2870 = vmatprep.subr.bf16.mxu0 0
    %2871 = vmatpush1.bf16.msra.mxu0 %v2802
    %2872 = vmatprep.subr.bf16.mxu0 0
    %2873 = vmatpush1.bf16.msra.mxu0 %v2803
    %2874 = vmatprep.subr.bf16.mxu0 0
    %2875 = vmatpush1.bf16.msra.mxu0 %v2804
    %2876 = vmatprep.subr.bf16.mxu0 0
    %2877 = vmatpush1.bf16.msra.mxu0 %v2805
    %2878 = vmatprep.mubr.bf16.mxu0 %v2736
    %2879 = vmatmul.mubr.bf16.gmra.mrb[0].mxu0 %v2735
    %v2880 = vpop.f32.mrb[0].mxu0
    %v2881 = vadd.f32 %v2841, %v2880
    %v2882 = vpop.f32.mrb[0].mxu0
    %v2883 = vpop.f32.mrb[0].mxu0
    %v2884 = vpop.f32.mrb[0].mxu0
    %2885 = vdwg.mxu0
    %2886 = vmatprep.subr.bf16.mxu0 0
    %2887 = vmatpush1.bf16.msra.mxu0 %v2740
    %2888 = vmatprep.subr.bf16.mxu0 0
    %2889 = vmatpush1.bf16.msra.mxu0 %v2741
    %2890 = vmatprep.subr.bf16.mxu0 0
    %2891 = vmatpush1.bf16.msra.mxu0 %v2742
    %2892 = vmatprep.subr.bf16.mxu0 0
    %2893 = vmatpush1.bf16.msra.mxu0 %v2743
    %2894 = vmatprep.subr.bf16.mxu0 0
    %2895 = vmatpush1.bf16.msra.mxu0 %v2744
    %2896 = vmatprep.subr.bf16.mxu0 0
    %2897 = vmatpush1.bf16.msra.mxu0 %v2745
    %2898 = vmatprep.subr.bf16.mxu0 0
    %2899 = vmatpush1.bf16.msra.mxu0 %v2746
    %2900 = vmatprep.subr.bf16.mxu0 0
    %2901 = vmatpush1.bf16.msra.mxu0 %v2747
    %2902 = vmatprep.subr.bf16.mxu0 0
    %2903 = vmatpush1.bf16.msra.mxu0 %v2748
    %2904 = vmatprep.subr.bf16.mxu0 0
    %2905 = vmatpush1.bf16.msra.mxu0 %v2749
    %2906 = vmatprep.subr.bf16.mxu0 0
    %2907 = vmatpush1.bf16.msra.mxu0 %v2750
    %2908 = vmatprep.subr.bf16.mxu0 0
    %2909 = vmatpush1.bf16.msra.mxu0 %v2751
    %2910 = vmatprep.subr.bf16.mxu0 0
    %2911 = vmatpush1.bf16.msra.mxu0 %v2752
    %2912 = vmatprep.subr.bf16.mxu0 0
    %2913 = vmatpush1.bf16.msra.mxu0 %v2753
    %2914 = vmatprep.subr.bf16.mxu0 0
    %2915 = vmatpush1.bf16.msra.mxu0 %v2754
    %2916 = vmatprep.subr.bf16.mxu0 0
    %2917 = vmatpush1.bf16.msra.mxu0 %v2755
    %2918 = vmatprep.mubr.bf16.mxu0 %v2117
    %2919 = vmatmul.mubr.bf16.gmra.mrb[0].mxu0 %v2116
    %v2920 = vpop.f32.mrb[0].mxu0
    %v2921 = vadd.f32 %v2881, %v2920
    %v2922 = vpop.f32.mrb[0].mxu0
    %v2923 = vpop.f32.mrb[0].mxu0
    %v2924 = vpop.f32.mrb[0].mxu0
    %2925 = vdwg.mxu0
    %2926 = vmatprep.subr.bf16.mxu0 0
    %2927 = vmatpush1.bf16.msra.mxu0 %v2756
    %2928 = vmatprep.subr.bf16.mxu0 0
    %2929 = vmatpush1.bf16.msra.mxu0 %v2757
    %2930 = vmatprep.subr.bf16.mxu0 0
    %2931 = vmatpush1.bf16.msra.mxu0 %v2758
    %2932 = vmatprep.subr.bf16.mxu0 0
    %2933 = vmatpush1.bf16.msra.mxu0 %v2759
    %2934 = vmatprep.subr.bf16.mxu0 0
    %2935 = vmatpush1.bf16.msra.mxu0 %v2760
    %2936 = vmatprep.subr.bf16.mxu0 0
    %2937 = vmatpush1.bf16.msra.mxu0 %v2761
    %2938 = vmatprep.subr.bf16.mxu0 0
    %2939 = vmatpush1.bf16.msra.mxu0 %v2762
    %2940 = vmatprep.subr.bf16.mxu0 0
    %2941 = vmatpush1.bf16.msra.mxu0 %v2763
    %2942 = vmatprep.subr.bf16.mxu0 0
    %2943 = vmatpush1.bf16.msra.mxu0 %v2764
    %2944 = vmatprep.subr.bf16.mxu0 0
    %2945 = vmatpush1.bf16.msra.mxu0 %v2765
    %2946 = vmatprep.subr.bf16.mxu0 0
    %2947 = vmatpush1.bf16.msra.mxu0 %v2766
    %2948 = vmatprep.subr.bf16.mxu0 0
    %2949 = vmatpush1.bf16.msra.mxu0 %v2767
    %2950 = vmatprep.subr.bf16.mxu0 0
    %2951 = vmatpush1.bf16.msra.mxu0 %v2768
    %2952 = vmatprep.subr.bf16.mxu0 0
    %2953 = vmatpush1.bf16.msra.mxu0 %v2769
    %2954 = vmatprep.subr.bf16.mxu0 0
    %2955 = vmatpush1.bf16.msra.mxu0 %v2770
    %2956 = vmatprep.subr.bf16.mxu0 0
    %2957 = vmatpush1.bf16.msra.mxu0 %v2771
    %2958 = vmatprep.mubr.bf16.mxu0 %v2119
    %2959 = vmatmul.mubr.bf16.gmra.mrb[0].mxu0 %v2118
    %v2960 = vpop.f32.mrb[0].mxu0
    %v2961 = vadd.f32 %v2921, %v2960
    %v2962 = vpop.f32.mrb[0].mxu0
    %v2963 = vpop.f32.mrb[0].mxu0
    %v2964 = vpop.f32.mrb[0].mxu0
    %2965 = vdwg.mxu0
    %v2966 = vld [vmem:[%s13] sm:$0x1]
    %v2968 = vlaneseq
    %v2969 = vshrl.u32 %v2968, 7
    %v2970 = vsub.s32 0, %v2969
    %v2971 = vrot.slane %v2966, %v2970
    %v2973 = vadd.f32 %v2961, %v2971
    %v2974 = vtanh.pop %v2973
    %2975 = vst [vmem:[#allocation7] sm:$0xff] %v2974
    // Predicated region
    $region184: #{expert_forward.1} parent=1 // pred_check
      _
    $region185: #{expert_forward.1} parent=1 // pred_check_branch
      %2977 = sbr.rel (0) target = $region187
    $region186: #{expert_forward.1} parent=1 // pred_region
      %s2979 = ssub.s32 128, 128
      %2980 = vsyncadd [#allocation8], %s2979
      %s2982 = sshll.u32 [#allocation7], 4
      %s2983 = int_to_ptr.vmem [resolvable:$true] %s2982
      %2985 = dma.vmem_to_hbm [thread:$0]  %s2983, 128, %s14, [#allocation8]
    $region187: #{expert_forward.1} parent=1 // pred_fallthru
      _
    // Predicated region
    $region188: #{expert_forward.1} parent=1 // pred_check
      _
    $region189: #{expert_forward.1} parent=1 // pred_check_branch
      %2987 = sbr.rel (0) target = $region191
    $region190: #{expert_forward.1} parent=1 // pred_region
      %2988 = dma.done [#allocation8], 128
    $region191: #{expert_forward.1} parent=1 // pred_fallthru
      _
    %2989 = vsyncpa [#allocation8], 1
  %2990 = vsyncmov [#allocation6]
  %s2991 = vpop.sfrf %2990
  %p2992 = scmp.eq.s32.totalorder %s2991, 0
  %p2993 = pneg %p2992
  %2995 = shalt.err (%p2993)
  %s2996 = scalar_lea.sflag [#allocation6], 1
  %2997 = vsyncmov %s2996
  %s2998 = vpop.sfrf %2997
  %p2999 = scmp.eq.s32.totalorder %s2998, 0
  %p3000 = pneg %p2999
  %3002 = shalt.err (%p3000)
  %s3003 = scalar_lea.sflag [#allocation6], 2
  %3004 = vsyncmov %s3003
  %s3005 = vpop.sfrf %3004
  %p3006 = scmp.eq.s32.totalorder %s3005, 0
  %p3007 = pneg %p3006
  %3009 = shalt.err (%p3007)
  %s3010 = scalar_lea.sflag [#allocation6], 3
  %3011 = vsyncmov %s3010
  %s3012 = vpop.sfrf %3011
  %p3013 = scmp.eq.s32.totalorder %s3012, 0
  %p3014 = pneg %p3013
  %3016 = shalt.err (%p3014)
  %s3017 = scalar_lea.sflag [#allocation6], 4
  %3018 = vsyncmov %s3017
  %s3019 = vpop.sfrf %3018
  %p3020 = scmp.eq.s32.totalorder %s3019, 0
  %p3021 = pneg %p3020
  %3023 = shalt.err (%p3021)
  %s3024 = scalar_lea.sflag [#allocation6], 5
  %3025 = vsyncmov %s3024
  %s3026 = vpop.sfrf %3025
  %p3027 = scmp.eq.s32.totalorder %s3026, 0
  %p3028 = pneg %p3027
  %3030 = shalt.err (%p3028)

</llo_original>
